<compile_context>
chip_gen: v7x
topology: tpu7x:2x2x1
jax: 0.10.0
libtpu: 0.0.40
codegen_flags: <defaults>
</compile_context>

<pallas_src>
import functools

import jax
import jax.numpy as jnp
from jax.experimental import pallas as pl
from jax.experimental.pallas import tpu as pltpu

# 784 -> 128 -> 64 -> 36 -> 18 -> 9 -> 18 -> 36 -> 64 -> 128 -> 784
LAYER_DIMS = [28 * 28, 128, 64, 36, 18, 9, 18, 36, 64, 128, 28 * 28]
NUM_LAYERS = len(LAYER_DIMS) - 1       # 10 linear layers
LATENT_LAYER = 4                       # encoder output (dim 9): no activation
F_IN = LAYER_DIMS[0]                   # 784


def _cdiv(a, b):
    return -(-a // b)


def _round_up(n, m):
    return _cdiv(n, m) * m


def ae_kernel(x_ref, *refs):
    """refs = (w0, b0, w1, b1, ..., w9, b9, out_ref).

    x_ref is a (TB, 784) f32 tile, out_ref a (TB, 784) bf16 tile; weights are
    bf16 and VMEM-resident across the whole batch grid.
    """
    out_ref = refs[-1]
    p = refs[:-1]

    h = x_ref[...].astype(jnp.bfloat16)               # (TB, 784) bf16
    for i in range(NUM_LAYERS):
        w = p[2 * i][...]                              # bf16 (in, out)
        b = p[2 * i + 1][...]                          # f32  (1, out)
        acc = jnp.dot(h, w, preferred_element_type=jnp.float32) + b
        if i == NUM_LAYERS - 1:
            # sigmoid(x) == 0.5 * tanh(0.5 * x) + 0.5  (single EUP transcendental)
            sig = 0.5 * jnp.tanh(0.5 * acc) + 0.5
            out_ref[...] = sig.astype(out_ref.dtype)
        elif i == LATENT_LAYER:
            h = acc.astype(jnp.bfloat16)               # latent: no activation
        else:
            h = jnp.maximum(acc, 0.0).astype(jnp.bfloat16)


def make_params(key):
    """Deterministic init mimicking torch.nn.Linear default U[-1/sqrt(in), +1/sqrt(in)]."""
    params = []
    for i in range(NUM_LAYERS):
        fan_in, fan_out = LAYER_DIMS[i], LAYER_DIMS[i + 1]
        key, kw, kb = jax.random.split(key, 3)
        bound = 1.0 / jnp.sqrt(jnp.float32(fan_in))
        # Stored transposed vs PyTorch: (in_features, out_features) so h @ W + b.
        w = jax.random.uniform(kw, (fan_in, fan_out), jnp.float32, -bound, bound)
        b = jax.random.uniform(kb, (1, fan_out), jnp.float32, -bound, bound)
        params += [w, b]
    return params


def prepare_params(params):
    """Weights -> bf16 (MXU-native); biases stay f32. No feature padding needed."""
    prepped = []
    for i in range(NUM_LAYERS):
        w, b = params[2 * i], params[2 * i + 1]
        prepped += [w.astype(jnp.bfloat16), b.astype(jnp.float32)]
    return prepped


def _tiling(B, tb_max):
    """Pick (TB, grid, B_pad): tiles are multiples of 16 rows, padding minimal."""
    g = max(1, _cdiv(B, tb_max))
    tb = _round_up(_cdiv(B, g), 16)
    return tb, g, tb * g


@functools.partial(jax.jit, static_argnames=("tb",))
def ae_forward(x, prepped_params, *, tb=512):
    B = x.shape[0]
    TB, grid, B_pad = _tiling(B, tb)

    # Only pad the batch when it doesn't divide into tiles (kept small by _tiling).
    xp = x if B_pad == B else jnp.pad(x, ((0, B_pad - B), (0, 0)))

    act_spec_in = pl.BlockSpec((TB, F_IN), lambda i: (i, 0))
    act_spec_out = pl.BlockSpec((TB, F_IN), lambda i: (i, 0))
    # Full-array blocks with a constant block index: DMA'd once, VMEM-resident.
    param_specs = [pl.BlockSpec(p.shape, lambda i: (0, 0)) for p in prepped_params]

    out = pl.pallas_call(
        ae_kernel,
        out_shape=jax.ShapeDtypeStruct((B_pad, F_IN), jnp.bfloat16),
        grid=(grid,),
        in_specs=[act_spec_in] + param_specs,
        out_specs=act_spec_out,
        compiler_params=pltpu.CompilerParams(
            dimension_semantics=("parallel",),
            vmem_limit_bytes=32 << 20,
        ),
    )(xp, *prepped_params)
    return out if B_pad == B else out[:B]


def ae_reference(x, params):
    """Pure-JAX reference mirroring the kernel's bf16-matmul / f32-accumulate math."""
    h = x.astype(jnp.bfloat16)
    for i in range(NUM_LAYERS):
        w, b = params[2 * i], params[2 * i + 1]
        acc = jnp.dot(h, w.astype(jnp.bfloat16),
                      preferred_element_type=jnp.float32) + b
        if i == NUM_LAYERS - 1:
            h = jax.nn.sigmoid(acc)
        elif i == LATENT_LAYER:
            h = acc.astype(jnp.bfloat16)
        else:
            h = jnp.maximum(acc, 0.0).astype(jnp.bfloat16)
    return h


if __name__ == "__main__":
    key = jax.random.PRNGKey(0)
    key, kx = jax.random.split(key)

    # B=300 with tb=128 -> 3 batch tiles of 112 rows (336 padded rows total):
    # exercises the multi-step pipelined grid, row padding and the row slice.
    B = 300
    x = jax.random.uniform(kx, (B, F_IN), jnp.float32)  # pixel-like inputs in [0,1)

    params = make_params(key)          # f32, PyTorch-equivalent shapes
    prepped = prepare_params(params)   # bf16 weights, f32 biases

    out = ae_forward(x, prepped, tb=128)
    out = jax.block_until_ready(out)

    ref = ae_reference(x, params)
    assert out.shape == (B, F_IN)
    assert out.dtype == jnp.bfloat16
    max_err = float(jnp.max(jnp.abs(out.astype(jnp.float32) - ref)))
    assert max_err < 2e-2, f"mismatch vs reference: {max_err}"

    print("KERNEL_OK")
</pallas_src>

<mosaic_0001>
module attributes {stable_mosaic.version = 11 : i64} {
  func.func @ae_kernel(%arg0: i32, %arg1: memref<112x784xf32, #tpu.memory_space<vmem>>, %arg2: memref<784x128xbf16, #tpu.memory_space<vmem>>, %arg3: memref<1x128xf32, #tpu.memory_space<vmem>>, %arg4: memref<128x64xbf16, #tpu.memory_space<vmem>>, %arg5: memref<1x64xf32, #tpu.memory_space<vmem>>, %arg6: memref<64x36xbf16, #tpu.memory_space<vmem>>, %arg7: memref<1x36xf32, #tpu.memory_space<vmem>>, %arg8: memref<36x18xbf16, #tpu.memory_space<vmem>>, %arg9: memref<1x18xf32, #tpu.memory_space<vmem>>, %arg10: memref<18x9xbf16, #tpu.memory_space<vmem>>, %arg11: memref<1x9xf32, #tpu.memory_space<vmem>>, %arg12: memref<9x18xbf16, #tpu.memory_space<vmem>>, %arg13: memref<1x18xf32, #tpu.memory_space<vmem>>, %arg14: memref<18x36xbf16, #tpu.memory_space<vmem>>, %arg15: memref<1x36xf32, #tpu.memory_space<vmem>>, %arg16: memref<36x64xbf16, #tpu.memory_space<vmem>>, %arg17: memref<1x64xf32, #tpu.memory_space<vmem>>, %arg18: memref<64x128xbf16, #tpu.memory_space<vmem>>, %arg19: memref<1x128xf32, #tpu.memory_space<vmem>>, %arg20: memref<128x784xbf16, #tpu.memory_space<vmem>>, %arg21: memref<1x784xf32, #tpu.memory_space<vmem>>, %arg22: memref<112x784xbf16, #tpu.memory_space<vmem>>) attributes {dimension_semantics = [#tpu.dimension_semantics<parallel>], iteration_bounds = array<i64: 3>, scalar_prefetch = 0 : i64, scratch_operands = 0 : i64, tpu.core_type = #tpu.core_type<tc>, window_params = [{transform_indices = @transform_0, window_bounds = array<i64: 112, 784>}, {pipeline_mode = #tpu.pipeline_mode<synchronous>, transform_indices = @transform_1, window_bounds = array<i64: 784, 128>}, {pipeline_mode = #tpu.pipeline_mode<synchronous>, transform_indices = @transform_2, window_bounds = array<i64: 1, 128>}, {pipeline_mode = #tpu.pipeline_mode<synchronous>, transform_indices = @transform_3, window_bounds = array<i64: 128, 64>}, {pipeline_mode = #tpu.pipeline_mode<synchronous>, transform_indices = @transform_4, window_bounds = array<i64: 1, 64>}, {pipeline_mode = #tpu.pipeline_mode<synchronous>, transform_indices = @transform_5, window_bounds = array<i64: 64, 36>}, {pipeline_mode = #tpu.pipeline_mode<synchronous>, transform_indices = @transform_6, window_bounds = array<i64: 1, 36>}, {pipeline_mode = #tpu.pipeline_mode<synchronous>, transform_indices = @transform_7, window_bounds = array<i64: 36, 18>}, {pipeline_mode = #tpu.pipeline_mode<synchronous>, transform_indices = @transform_8, window_bounds = array<i64: 1, 18>}, {pipeline_mode = #tpu.pipeline_mode<synchronous>, transform_indices = @transform_9, window_bounds = array<i64: 18, 9>}, {pipeline_mode = #tpu.pipeline_mode<synchronous>, transform_indices = @transform_10, window_bounds = array<i64: 1, 9>}, {pipeline_mode = #tpu.pipeline_mode<synchronous>, transform_indices = @transform_11, window_bounds = array<i64: 9, 18>}, {pipeline_mode = #tpu.pipeline_mode<synchronous>, transform_indices = @transform_12, window_bounds = array<i64: 1, 18>}, {pipeline_mode = #tpu.pipeline_mode<synchronous>, transform_indices = @transform_13, window_bounds = array<i64: 18, 36>}, {pipeline_mode = #tpu.pipeline_mode<synchronous>, transform_indices = @transform_14, window_bounds = array<i64: 1, 36>}, {pipeline_mode = #tpu.pipeline_mode<synchronous>, transform_indices = @transform_15, window_bounds = array<i64: 36, 64>}, {pipeline_mode = #tpu.pipeline_mode<synchronous>, transform_indices = @transform_16, window_bounds = array<i64: 1, 64>}, {pipeline_mode = #tpu.pipeline_mode<synchronous>, transform_indices = @transform_17, window_bounds = array<i64: 64, 128>}, {pipeline_mode = #tpu.pipeline_mode<synchronous>, transform_indices = @transform_18, window_bounds = array<i64: 1, 128>}, {pipeline_mode = #tpu.pipeline_mode<synchronous>, transform_indices = @transform_19, window_bounds = array<i64: 128, 784>}, {pipeline_mode = #tpu.pipeline_mode<synchronous>, transform_indices = @transform_20, window_bounds = array<i64: 1, 784>}, {transform_indices = @transform_21, window_bounds = array<i64: 112, 784>}]} {
    %c0 = arith.constant 0 : index
    %c0_0 = arith.constant 0 : index
    %0 = vector.load %arg1[%c0, %c0_0] : memref<112x784xf32, #tpu.memory_space<vmem>>, vector<112x784xf32>
    %1 = arith.truncf %0 : vector<112x784xf32> to vector<112x784xbf16>
    %c0_1 = arith.constant 0 : index
    %c0_2 = arith.constant 0 : index
    %2 = vector.load %arg2[%c0_1, %c0_2] : memref<784x128xbf16, #tpu.memory_space<vmem>>, vector<784x128xbf16>
    %c0_3 = arith.constant 0 : index
    %c0_4 = arith.constant 0 : index
    %3 = vector.load %arg3[%c0_3, %c0_4] : memref<1x128xf32, #tpu.memory_space<vmem>>, vector<1x128xf32>
    %cst = arith.constant dense<0.000000e+00> : vector<112x128xf32>
    %4 = tpu.matmul %1, %2, %cst {dimension_numbers = #tpu.dot_dimension_numbers<[1], [0], [0], [1], [0, 0, 1, 1], [], []>} : vector<112x784xbf16>, vector<784x128xbf16>, vector<112x128xf32> -> vector<112x128xf32>
    %5 = vector.broadcast %3 : vector<1x128xf32> to vector<112x128xf32>
    %6 = arith.addf %4, %5 : vector<112x128xf32>
    %cst_5 = arith.constant 0.000000e+00 : f32
    %7 = vector.broadcast %cst_5 : f32 to vector<112x128xf32>
    %8 = arith.maximumf %6, %7 : vector<112x128xf32>
    %9 = arith.truncf %8 : vector<112x128xf32> to vector<112x128xbf16>
    %c0_6 = arith.constant 0 : index
    %c0_7 = arith.constant 0 : index
    %10 = vector.load %arg4[%c0_6, %c0_7] : memref<128x64xbf16, #tpu.memory_space<vmem>>, vector<128x64xbf16>
    %c0_8 = arith.constant 0 : index
    %c0_9 = arith.constant 0 : index
    %11 = vector.load %arg5[%c0_8, %c0_9] : memref<1x64xf32, #tpu.memory_space<vmem>>, vector<1x64xf32>
    %cst_10 = arith.constant dense<0.000000e+00> : vector<112x64xf32>
    %12 = tpu.matmul %9, %10, %cst_10 {dimension_numbers = #tpu.dot_dimension_numbers<[1], [0], [0], [1], [0, 0, 1, 1], [], []>} : vector<112x128xbf16>, vector<128x64xbf16>, vector<112x64xf32> -> vector<112x64xf32>
    %13 = vector.broadcast %11 : vector<1x64xf32> to vector<112x64xf32>
    %14 = arith.addf %12, %13 : vector<112x64xf32>
    %cst_11 = arith.constant 0.000000e+00 : f32
    %15 = vector.broadcast %cst_11 : f32 to vector<112x64xf32>
    %16 = arith.maximumf %14, %15 : vector<112x64xf32>
    %17 = arith.truncf %16 : vector<112x64xf32> to vector<112x64xbf16>
    %c0_12 = arith.constant 0 : index
    %c0_13 = arith.constant 0 : index
    %18 = vector.load %arg6[%c0_12, %c0_13] : memref<64x36xbf16, #tpu.memory_space<vmem>>, vector<64x36xbf16>
    %c0_14 = arith.constant 0 : index
    %c0_15 = arith.constant 0 : index
    %19 = vector.load %arg7[%c0_14, %c0_15] : memref<1x36xf32, #tpu.memory_space<vmem>>, vector<1x36xf32>
    %cst_16 = arith.constant dense<0.000000e+00> : vector<112x36xf32>
    %20 = tpu.matmul %17, %18, %cst_16 {dimension_numbers = #tpu.dot_dimension_numbers<[1], [0], [0], [1], [0, 0, 1, 1], [], []>} : vector<112x64xbf16>, vector<64x36xbf16>, vector<112x36xf32> -> vector<112x36xf32>
    %21 = vector.broadcast %19 : vector<1x36xf32> to vector<112x36xf32>
    %22 = arith.addf %20, %21 : vector<112x36xf32>
    %cst_17 = arith.constant 0.000000e+00 : f32
    %23 = vector.broadcast %cst_17 : f32 to vector<112x36xf32>
    %24 = arith.maximumf %22, %23 : vector<112x36xf32>
    %25 = arith.truncf %24 : vector<112x36xf32> to vector<112x36xbf16>
    %c0_18 = arith.constant 0 : index
    %c0_19 = arith.constant 0 : index
    %26 = vector.load %arg8[%c0_18, %c0_19] : memref<36x18xbf16, #tpu.memory_space<vmem>>, vector<36x18xbf16>
    %c0_20 = arith.constant 0 : index
    %c0_21 = arith.constant 0 : index
    %27 = vector.load %arg9[%c0_20, %c0_21] : memref<1x18xf32, #tpu.memory_space<vmem>>, vector<1x18xf32>
    %cst_22 = arith.constant dense<0.000000e+00> : vector<112x18xf32>
    %28 = tpu.matmul %25, %26, %cst_22 {dimension_numbers = #tpu.dot_dimension_numbers<[1], [0], [0], [1], [0, 0, 1, 1], [], []>} : vector<112x36xbf16>, vector<36x18xbf16>, vector<112x18xf32> -> vector<112x18xf32>
    %29 = vector.broadcast %27 : vector<1x18xf32> to vector<112x18xf32>
    %30 = arith.addf %28, %29 : vector<112x18xf32>
    %cst_23 = arith.constant 0.000000e+00 : f32
    %31 = vector.broadcast %cst_23 : f32 to vector<112x18xf32>
    %32 = arith.maximumf %30, %31 : vector<112x18xf32>
    %33 = arith.truncf %32 : vector<112x18xf32> to vector<112x18xbf16>
    %c0_24 = arith.constant 0 : index
    %c0_25 = arith.constant 0 : index
    %34 = vector.load %arg10[%c0_24, %c0_25] : memref<18x9xbf16, #tpu.memory_space<vmem>>, vector<18x9xbf16>
    %c0_26 = arith.constant 0 : index
    %c0_27 = arith.constant 0 : index
    %35 = vector.load %arg11[%c0_26, %c0_27] : memref<1x9xf32, #tpu.memory_space<vmem>>, vector<1x9xf32>
    %cst_28 = arith.constant dense<0.000000e+00> : vector<112x9xf32>
    %36 = tpu.matmul %33, %34, %cst_28 {dimension_numbers = #tpu.dot_dimension_numbers<[1], [0], [0], [1], [0, 0, 1, 1], [], []>} : vector<112x18xbf16>, vector<18x9xbf16>, vector<112x9xf32> -> vector<112x9xf32>
    %37 = vector.broadcast %35 : vector<1x9xf32> to vector<112x9xf32>
    %38 = arith.addf %36, %37 : vector<112x9xf32>
    %39 = arith.truncf %38 : vector<112x9xf32> to vector<112x9xbf16>
    %c0_29 = arith.constant 0 : index
    %c0_30 = arith.constant 0 : index
    %40 = vector.load %arg12[%c0_29, %c0_30] : memref<9x18xbf16, #tpu.memory_space<vmem>>, vector<9x18xbf16>
    %c0_31 = arith.constant 0 : index
    %c0_32 = arith.constant 0 : index
    %41 = vector.load %arg13[%c0_31, %c0_32] : memref<1x18xf32, #tpu.memory_space<vmem>>, vector<1x18xf32>
    %cst_33 = arith.constant dense<0.000000e+00> : vector<112x18xf32>
    %42 = tpu.matmul %39, %40, %cst_33 {dimension_numbers = #tpu.dot_dimension_numbers<[1], [0], [0], [1], [0, 0, 1, 1], [], []>} : vector<112x9xbf16>, vector<9x18xbf16>, vector<112x18xf32> -> vector<112x18xf32>
    %43 = vector.broadcast %41 : vector<1x18xf32> to vector<112x18xf32>
    %44 = arith.addf %42, %43 : vector<112x18xf32>
    %cst_34 = arith.constant 0.000000e+00 : f32
    %45 = vector.broadcast %cst_34 : f32 to vector<112x18xf32>
    %46 = arith.maximumf %44, %45 : vector<112x18xf32>
    %47 = arith.truncf %46 : vector<112x18xf32> to vector<112x18xbf16>
    %c0_35 = arith.constant 0 : index
    %c0_36 = arith.constant 0 : index
    %48 = vector.load %arg14[%c0_35, %c0_36] : memref<18x36xbf16, #tpu.memory_space<vmem>>, vector<18x36xbf16>
    %c0_37 = arith.constant 0 : index
    %c0_38 = arith.constant 0 : index
    %49 = vector.load %arg15[%c0_37, %c0_38] : memref<1x36xf32, #tpu.memory_space<vmem>>, vector<1x36xf32>
    %cst_39 = arith.constant dense<0.000000e+00> : vector<112x36xf32>
    %50 = tpu.matmul %47, %48, %cst_39 {dimension_numbers = #tpu.dot_dimension_numbers<[1], [0], [0], [1], [0, 0, 1, 1], [], []>} : vector<112x18xbf16>, vector<18x36xbf16>, vector<112x36xf32> -> vector<112x36xf32>
    %51 = vector.broadcast %49 : vector<1x36xf32> to vector<112x36xf32>
    %52 = arith.addf %50, %51 : vector<112x36xf32>
    %cst_40 = arith.constant 0.000000e+00 : f32
    %53 = vector.broadcast %cst_40 : f32 to vector<112x36xf32>
    %54 = arith.maximumf %52, %53 : vector<112x36xf32>
    %55 = arith.truncf %54 : vector<112x36xf32> to vector<112x36xbf16>
    %c0_41 = arith.constant 0 : index
    %c0_42 = arith.constant 0 : index
    %56 = vector.load %arg16[%c0_41, %c0_42] : memref<36x64xbf16, #tpu.memory_space<vmem>>, vector<36x64xbf16>
    %c0_43 = arith.constant 0 : index
    %c0_44 = arith.constant 0 : index
    %57 = vector.load %arg17[%c0_43, %c0_44] : memref<1x64xf32, #tpu.memory_space<vmem>>, vector<1x64xf32>
    %cst_45 = arith.constant dense<0.000000e+00> : vector<112x64xf32>
    %58 = tpu.matmul %55, %56, %cst_45 {dimension_numbers = #tpu.dot_dimension_numbers<[1], [0], [0], [1], [0, 0, 1, 1], [], []>} : vector<112x36xbf16>, vector<36x64xbf16>, vector<112x64xf32> -> vector<112x64xf32>
    %59 = vector.broadcast %57 : vector<1x64xf32> to vector<112x64xf32>
    %60 = arith.addf %58, %59 : vector<112x64xf32>
    %cst_46 = arith.constant 0.000000e+00 : f32
    %61 = vector.broadcast %cst_46 : f32 to vector<112x64xf32>
    %62 = arith.maximumf %60, %61 : vector<112x64xf32>
    %63 = arith.truncf %62 : vector<112x64xf32> to vector<112x64xbf16>
    %c0_47 = arith.constant 0 : index
    %c0_48 = arith.constant 0 : index
    %64 = vector.load %arg18[%c0_47, %c0_48] : memref<64x128xbf16, #tpu.memory_space<vmem>>, vector<64x128xbf16>
    %c0_49 = arith.constant 0 : index
    %c0_50 = arith.constant 0 : index
    %65 = vector.load %arg19[%c0_49, %c0_50] : memref<1x128xf32, #tpu.memory_space<vmem>>, vector<1x128xf32>
    %cst_51 = arith.constant dense<0.000000e+00> : vector<112x128xf32>
    %66 = tpu.matmul %63, %64, %cst_51 {dimension_numbers = #tpu.dot_dimension_numbers<[1], [0], [0], [1], [0, 0, 1, 1], [], []>} : vector<112x64xbf16>, vector<64x128xbf16>, vector<112x128xf32> -> vector<112x128xf32>
    %67 = vector.broadcast %65 : vector<1x128xf32> to vector<112x128xf32>
    %68 = arith.addf %66, %67 : vector<112x128xf32>
    %cst_52 = arith.constant 0.000000e+00 : f32
    %69 = vector.broadcast %cst_52 : f32 to vector<112x128xf32>
    %70 = arith.maximumf %68, %69 : vector<112x128xf32>
    %71 = arith.truncf %70 : vector<112x128xf32> to vector<112x128xbf16>
    %c0_53 = arith.constant 0 : index
    %c0_54 = arith.constant 0 : index
    %72 = vector.load %arg20[%c0_53, %c0_54] : memref<128x784xbf16, #tpu.memory_space<vmem>>, vector<128x784xbf16>
    %c0_55 = arith.constant 0 : index
    %c0_56 = arith.constant 0 : index
    %73 = vector.load %arg21[%c0_55, %c0_56] : memref<1x784xf32, #tpu.memory_space<vmem>>, vector<1x784xf32>
    %cst_57 = arith.constant dense<0.000000e+00> : vector<112x784xf32>
    %74 = tpu.matmul %71, %72, %cst_57 {dimension_numbers = #tpu.dot_dimension_numbers<[1], [0], [0], [1], [0, 0, 1, 1], [], []>} : vector<112x128xbf16>, vector<128x784xbf16>, vector<112x784xf32> -> vector<112x784xf32>
    %75 = vector.broadcast %73 : vector<1x784xf32> to vector<112x784xf32>
    %76 = arith.addf %74, %75 : vector<112x784xf32>
    %cst_58 = arith.constant 5.000000e-01 : f32
    %77 = vector.broadcast %cst_58 : f32 to vector<112x784xf32>
    %78 = arith.mulf %77, %76 : vector<112x784xf32>
    %79 = math.tanh %78 : vector<112x784xf32>
    %cst_59 = arith.constant 5.000000e-01 : f32
    %80 = vector.broadcast %cst_59 : f32 to vector<112x784xf32>
    %81 = arith.mulf %80, %79 : vector<112x784xf32>
    %cst_60 = arith.constant 5.000000e-01 : f32
    %82 = vector.broadcast %cst_60 : f32 to vector<112x784xf32>
    %83 = arith.addf %81, %82 : vector<112x784xf32>
    %84 = arith.truncf %83 : vector<112x784xf32> to vector<112x784xbf16>
    %c0_61 = arith.constant 0 : index
    %c0_62 = arith.constant 0 : index
    %85 = vector.load %arg22[%c0_61, %c0_62] : memref<112x784xbf16, #tpu.memory_space<vmem>>, vector<112x784xbf16>
    tpu.vector_store %arg22[%c0_61, %c0_62], %84 {strides = array<i32>} : memref<112x784xbf16, #tpu.memory_space<vmem>>, vector<112x784xbf16>,
    return
  }
  func.func @transform_0(%arg0: i32) -> (i32, i32) {
    %c0_i32 = arith.constant 0 : i32
    %c0_i32_0 = arith.constant 0 : i32
    return %arg0, %c0_i32 : i32, i32
  }
  func.func @transform_1(%arg0: i32) -> (i32, i32) {
    %c0_i32 = arith.constant 0 : i32
    %c0_i32_0 = arith.constant 0 : i32
    %c0_i32_1 = arith.constant 0 : i32
    return %c0_i32, %c0_i32_0 : i32, i32
  }
  func.func @transform_2(%arg0: i32) -> (i32, i32) {
    %c0_i32 = arith.constant 0 : i32
    %c0_i32_0 = arith.constant 0 : i32
    %c0_i32_1 = arith.constant 0 : i32
    return %c0_i32, %c0_i32_0 : i32, i32
  }
  func.func @transform_3(%arg0: i32) -> (i32, i32) {
    %c0_i32 = arith.constant 0 : i32
    %c0_i32_0 = arith.constant 0 : i32
    %c0_i32_1 = arith.constant 0 : i32
    return %c0_i32, %c0_i32_0 : i32, i32
  }
  func.func @transform_4(%arg0: i32) -> (i32, i32) {
    %c0_i32 = arith.constant 0 : i32
    %c0_i32_0 = arith.constant 0 : i32
    %c0_i32_1 = arith.constant 0 : i32
    return %c0_i32, %c0_i32_0 : i32, i32
  }
  func.func @transform_5(%arg0: i32) -> (i32, i32) {
    %c0_i32 = arith.constant 0 : i32
    %c0_i32_0 = arith.constant 0 : i32
    %c0_i32_1 = arith.constant 0 : i32
    return %c0_i32, %c0_i32_0 : i32, i32
  }
  func.func @transform_6(%arg0: i32) -> (i32, i32) {
    %c0_i32 = arith.constant 0 : i32
    %c0_i32_0 = arith.constant 0 : i32
    %c0_i32_1 = arith.constant 0 : i32
    return %c0_i32, %c0_i32_0 : i32, i32
  }
  func.func @transform_7(%arg0: i32) -> (i32, i32) {
    %c0_i32 = arith.constant 0 : i32
    %c0_i32_0 = arith.constant 0 : i32
    %c0_i32_1 = arith.constant 0 : i32
    return %c0_i32, %c0_i32_0 : i32, i32
  }
  func.func @transform_8(%arg0: i32) -> (i32, i32) {
    %c0_i32 = arith.constant 0 : i32
    %c0_i32_0 = arith.constant 0 : i32
    %c0_i32_1 = arith.constant 0 : i32
    return %c0_i32, %c0_i32_0 : i32, i32
  }
  func.func @transform_9(%arg0: i32) -> (i32, i32) {
    %c0_i32 = arith.constant 0 : i32
    %c0_i32_0 = arith.constant 0 : i32
    %c0_i32_1 = arith.constant 0 : i32
    return %c0_i32, %c0_i32_0 : i32, i32
  }
  func.func @transform_10(%arg0: i32) -> (i32, i32) {
    %c0_i32 = arith.constant 0 : i32
    %c0_i32_0 = arith.constant 0 : i32
    %c0_i32_1 = arith.constant 0 : i32
    return %c0_i32, %c0_i32_0 : i32, i32
  }
  func.func @transform_11(%arg0: i32) -> (i32, i32) {
    %c0_i32 = arith.constant 0 : i32
    %c0_i32_0 = arith.constant 0 : i32
    %c0_i32_1 = arith.constant 0 : i32
    return %c0_i32, %c0_i32_0 : i32, i32
  }
  func.func @transform_12(%arg0: i32) -> (i32, i32) {
    %c0_i32 = arith.constant 0 : i32
    %c0_i32_0 = arith.constant 0 : i32
    %c0_i32_1 = arith.constant 0 : i32
    return %c0_i32, %c0_i32_0 : i32, i32
  }
  func.func @transform_13(%arg0: i32) -> (i32, i32) {
    %c0_i32 = arith.constant 0 : i32
    %c0_i32_0 = arith.constant 0 : i32
    %c0_i32_1 = arith.constant 0 : i32
    return %c0_i32, %c0_i32_0 : i32, i32
  }
  func.func @transform_14(%arg0: i32) -> (i32, i32) {
    %c0_i32 = arith.constant 0 : i32
    %c0_i32_0 = arith.constant 0 : i32
    %c0_i32_1 = arith.constant 0 : i32
    return %c0_i32, %c0_i32_0 : i32, i32
  }
  func.func @transform_15(%arg0: i32) -> (i32, i32) {
    %c0_i32 = arith.constant 0 : i32
    %c0_i32_0 = arith.constant 0 : i32
    %c0_i32_1 = arith.constant 0 : i32
    return %c0_i32, %c0_i32_0 : i32, i32
  }
  func.func @transform_16(%arg0: i32) -> (i32, i32) {
    %c0_i32 = arith.constant 0 : i32
    %c0_i32_0 = arith.constant 0 : i32
    %c0_i32_1 = arith.constant 0 : i32
    return %c0_i32, %c0_i32_0 : i32, i32
  }
  func.func @transform_17(%arg0: i32) -> (i32, i32) {
    %c0_i32 = arith.constant 0 : i32
    %c0_i32_0 = arith.constant 0 : i32
    %c0_i32_1 = arith.constant 0 : i32
    return %c0_i32, %c0_i32_0 : i32, i32
  }
  func.func @transform_18(%arg0: i32) -> (i32, i32) {
    %c0_i32 = arith.constant 0 : i32
    %c0_i32_0 = arith.constant 0 : i32
    %c0_i32_1 = arith.constant 0 : i32
    return %c0_i32, %c0_i32_0 : i32, i32
  }
  func.func @transform_19(%arg0: i32) -> (i32, i32) {
    %c0_i32 = arith.constant 0 : i32
    %c0_i32_0 = arith.constant 0 : i32
    %c0_i32_1 = arith.constant 0 : i32
    return %c0_i32, %c0_i32_0 : i32, i32
  }
  func.func @transform_20(%arg0: i32) -> (i32, i32) {
    %c0_i32 = arith.constant 0 : i32
    %c0_i32_0 = arith.constant 0 : i32
    %c0_i32_1 = arith.constant 0 : i32
    return %c0_i32, %c0_i32_0 : i32, i32
  }
  func.func @transform_21(%arg0: i32) -> (i32, i32) {
    %c0_i32 = arith.constant 0 : i32
    %c0_i32_0 = arith.constant 0 : i32
    return %arg0, %c0_i32 : i32, i32
  }
}

</mosaic_0001>

<llo_original>
// kernel: ae_forward.1
$region0: #{ae_forward.1}
  #allocation0 [shape = 'u32[]', space=smem, size = 0x4, offset = 0x4, fixed_abs, tag = 'smem constant byte address 0x4 - core index']
  #allocation1 [shape = 'u32[144,128]{1,0:T(1,128)}', space=vmem, size = 0x12000, scoped, tag = 'internal scratch']
  %s0 = inlined_call_operand.vmem [shape: f32[336,784], index: 0, kind: input, shape index: {}]
  %s1 = inlined_call_operand.vmem [shape: bf16[784,128], index: 1, kind: input, shape index: {}]
  %s2 = inlined_call_operand.vmem [shape: f32[1,128], index: 2, kind: input, shape index: {}]
  %s3 = inlined_call_operand.vmem [shape: bf16[128,64], index: 3, kind: input, shape index: {}]
  %s4 = inlined_call_operand.vmem [shape: f32[1,64], index: 4, kind: input, shape index: {}]
  %s5 = inlined_call_operand.vmem [shape: bf16[64,36], index: 5, kind: input, shape index: {}]
  %s6 = inlined_call_operand.vmem [shape: f32[1,36], index: 6, kind: input, shape index: {}]
  %s7 = inlined_call_operand.vmem [shape: bf16[36,18], index: 7, kind: input, shape index: {}]
  %s8 = inlined_call_operand.vmem [shape: f32[1,18], index: 8, kind: input, shape index: {}]
  %s9 = inlined_call_operand.vmem [shape: bf16[18,9], index: 9, kind: input, shape index: {}]
  %s10 = inlined_call_operand.vmem [shape: f32[1,9], index: 10, kind: input, shape index: {}]
  %s11 = inlined_call_operand.vmem [shape: bf16[9,18], index: 11, kind: input, shape index: {}]
  %s12 = inlined_call_operand.vmem [shape: f32[1,18], index: 12, kind: input, shape index: {}]
  %s13 = inlined_call_operand.vmem [shape: bf16[18,36], index: 13, kind: input, shape index: {}]
  %s14 = inlined_call_operand.vmem [shape: f32[1,36], index: 14, kind: input, shape index: {}]
  %s15 = inlined_call_operand.vmem [shape: bf16[36,64], index: 15, kind: input, shape index: {}]
  %s16 = inlined_call_operand.vmem [shape: f32[1,64], index: 16, kind: input, shape index: {}]
  %s17 = inlined_call_operand.vmem [shape: bf16[64,128], index: 17, kind: input, shape index: {}]
  %s18 = inlined_call_operand.vmem [shape: f32[1,128], index: 18, kind: input, shape index: {}]
  %s19 = inlined_call_operand.vmem [shape: bf16[128,784], index: 19, kind: input, shape index: {}]
  %s20 = inlined_call_operand.vmem [shape: f32[1,784], index: 20, kind: input, shape index: {}]
  %s21 = inlined_call_operand.vmem [shape: bf16[336,784], index: 21, kind: output, shape index: {}]
  %s22 = sld [smem:[#allocation0]]
  $region117: #{ae_forward.1} parent=0
    _
  %s24 = ssub.s32 1, %s22
  %s25 = scalar_select 0, %s24, %s22
  loop: start=0, step=1, limit=5
  $region2: #{ae_forward.1} parent=0 // loop_pre_header
    _
  $region3: #{ae_forward.1} parent=0 // loop_header
    %s27 = sphi 0, %s31
    %p28 = scmp.ge.s32.totalorder %s27, 5
    %s37 = sphi 0, %s39
    %s40 = sphi 0, %s37
    %s41 = sphi 0, %s40
    %s57 = sphi 0, %s41
    %s61 = sphi 0, %s61
    %s63 = sphi 0, %s61
    %s64 = sphi 0, %s63
    %s78 = sphi 0, %s64
    %s82 = sphi 0, %s82
    %s84 = sphi 0, %s82
    %s85 = sphi 0, %s84
    %s99 = sphi 0, %s85
    %s103 = sphi 0, %s103
    %s105 = sphi 0, %s103
    %s106 = sphi 0, %s105
    %s120 = sphi 0, %s106
    %s124 = sphi 0, %s124
    %s126 = sphi 0, %s124
    %s127 = sphi 0, %s126
    %s141 = sphi 0, %s127
    %s145 = sphi 0, %s145
    %s147 = sphi 0, %s145
    %s148 = sphi 0, %s147
    %s162 = sphi 0, %s148
    %s166 = sphi 0, %s166
    %s168 = sphi 0, %s166
    %s169 = sphi 0, %s168
    %s183 = sphi 0, %s169
    %s187 = sphi 0, %s187
    %s189 = sphi 0, %s187
    %s190 = sphi 0, %s189
    %s204 = sphi 0, %s190
    %s208 = sphi 0, %s208
    %s210 = sphi 0, %s208
    %s211 = sphi 0, %s210
    %s225 = sphi 0, %s211
    %s229 = sphi 0, %s229
    %s231 = sphi 0, %s229
    %s232 = sphi 0, %s231
    %s246 = sphi 0, %s232
    %s250 = sphi 0, %s250
    %s252 = sphi 0, %s250
    %s253 = sphi 0, %s252
    %s267 = sphi 0, %s253
    %s271 = sphi 0, %s271
    %s273 = sphi 0, %s271
    %s274 = sphi 0, %s273
    %s288 = sphi 0, %s274
    %s292 = sphi 0, %s292
    %s294 = sphi 0, %s292
    %s295 = sphi 0, %s294
    %s309 = sphi 0, %s295
    %s313 = sphi 0, %s313
    %s315 = sphi 0, %s313
    %s316 = sphi 0, %s315
    %s330 = sphi 0, %s316
    %s334 = sphi 0, %s334
    %s336 = sphi 0, %s334
    %s337 = sphi 0, %s336
    %s351 = sphi 0, %s337
    %s355 = sphi 0, %s355
    %s357 = sphi 0, %s355
    %s358 = sphi 0, %s357
    %s372 = sphi 0, %s358
    %s376 = sphi 0, %s376
    %s378 = sphi 0, %s376
    %s379 = sphi 0, %s378
    %s393 = sphi 0, %s379
    %s397 = sphi 0, %s397
    %s399 = sphi 0, %s397
    %s400 = sphi 0, %s399
    %s414 = sphi 0, %s400
    %s418 = sphi 0, %s418
    %s420 = sphi 0, %s418
    %s421 = sphi 0, %s420
    %s435 = sphi 0, %s421
    %s439 = sphi 0, %s439
    %s441 = sphi 0, %s439
    %s442 = sphi 0, %s441
    %s456 = sphi 0, %s442
    %s460 = sphi 0, %s460
    %s462 = sphi 0, %s460
    %s463 = sphi 0, %s462
    %s477 = sphi 0, %s463
    %s483 = sphi 0, %s485
    %s486 = sphi 0, %s483
    %s487 = sphi 0, %s486
    %s503 = sphi 0, %s487
  $region4: #{ae_forward.1} parent=0 // loop_header_branch
    %30 = sbr.rel (%p28) target = $region8
  $region5: #{ae_forward.1} parent=0 // loop_body
    %s32 = ssub.s32 %s27, 1
    %s33 = ssub.s32 %s27, 2
    %s34 = sadd.s32 %s27, 1
    %s35 = ssub.s32 %s27, %s34
    %p36 = scmp.eq.s32.totalorder %s35, 0
    %s38 = sadd.s32 %s37, 1
    %s39 = scalar_select %p36, %s37, %s38
    %p42 = pneg %p36
    %p43 = scmp.eq.s32.totalorder %s27, 2
    %p44 = por %p42, %p43
    %p45 = scmp.ne.s32.totalorder %s37, %s40
    %p46 = scmp.eq.s32.totalorder %s27, 0
    %p47 = por %p45, %p46
    %p48 = scmp.ne.s32.totalorder %s37, %s40
    %p49 = scmp.eq.s32.totalorder %s32, 2
    %p50 = por %p48, %p49
    %p51 = scmp.ne.s32.totalorder %s40, %s41
    %p52 = scmp.eq.s32.totalorder %s32, 0
    %p53 = por %p51, %p52
    %p54 = scmp.ne.s32.totalorder %s40, %s41
    %p55 = scmp.eq.s32.totalorder %s33, 2
    %p56 = por %p54, %p55
    %p58 = scmp.ne.s32.totalorder %s41, %s57
    %p59 = scmp.eq.s32.totalorder %s33, 0
    %p60 = por %p58, %p59
    %s62 = sadd.s32 %s61, 1
    %p65 = scmp.eq.s32.totalorder %s27, 2
    %p66 = scmp.ne.s32.totalorder %s61, %s63
    %p67 = scmp.eq.s32.totalorder %s27, 0
    %p68 = por %p66, %p67
    %p69 = scmp.ne.s32.totalorder %s61, %s63
    %p70 = scmp.eq.s32.totalorder %s32, 2
    %p71 = por %p69, %p70
    %p72 = scmp.ne.s32.totalorder %s63, %s64
    %p73 = scmp.eq.s32.totalorder %s32, 0
    %p74 = por %p72, %p73
    %p75 = scmp.ne.s32.totalorder %s63, %s64
    %p76 = scmp.eq.s32.totalorder %s33, 2
    %p77 = por %p75, %p76
    %p79 = scmp.ne.s32.totalorder %s64, %s78
    %p80 = scmp.eq.s32.totalorder %s33, 0
    %p81 = por %p79, %p80
    %s83 = sadd.s32 %s82, 1
    %p86 = scmp.eq.s32.totalorder %s27, 2
    %p87 = scmp.ne.s32.totalorder %s82, %s84
    %p88 = scmp.eq.s32.totalorder %s27, 0
    %p89 = por %p87, %p88
    %p90 = scmp.ne.s32.totalorder %s82, %s84
    %p91 = scmp.eq.s32.totalorder %s32, 2
    %p92 = por %p90, %p91
    %p93 = scmp.ne.s32.totalorder %s84, %s85
    %p94 = scmp.eq.s32.totalorder %s32, 0
    %p95 = por %p93, %p94
    %p96 = scmp.ne.s32.totalorder %s84, %s85
    %p97 = scmp.eq.s32.totalorder %s33, 2
    %p98 = por %p96, %p97
    %p100 = scmp.ne.s32.totalorder %s85, %s99
    %p101 = scmp.eq.s32.totalorder %s33, 0
    %p102 = por %p100, %p101
    %s104 = sadd.s32 %s103, 1
    %p107 = scmp.eq.s32.totalorder %s27, 2
    %p108 = scmp.ne.s32.totalorder %s103, %s105
    %p109 = scmp.eq.s32.totalorder %s27, 0
    %p110 = por %p108, %p109
    %p111 = scmp.ne.s32.totalorder %s103, %s105
    %p112 = scmp.eq.s32.totalorder %s32, 2
    %p113 = por %p111, %p112
    %p114 = scmp.ne.s32.totalorder %s105, %s106
    %p115 = scmp.eq.s32.totalorder %s32, 0
    %p116 = por %p114, %p115
    %p117 = scmp.ne.s32.totalorder %s105, %s106
    %p118 = scmp.eq.s32.totalorder %s33, 2
    %p119 = por %p117, %p118
    %p121 = scmp.ne.s32.totalorder %s106, %s120
    %p122 = scmp.eq.s32.totalorder %s33, 0
    %p123 = por %p121, %p122
    %s125 = sadd.s32 %s124, 1
    %p128 = scmp.eq.s32.totalorder %s27, 2
    %p129 = scmp.ne.s32.totalorder %s124, %s126
    %p130 = scmp.eq.s32.totalorder %s27, 0
    %p131 = por %p129, %p130
    %p132 = scmp.ne.s32.totalorder %s124, %s126
    %p133 = scmp.eq.s32.totalorder %s32, 2
    %p134 = por %p132, %p133
    %p135 = scmp.ne.s32.totalorder %s126, %s127
    %p136 = scmp.eq.s32.totalorder %s32, 0
    %p137 = por %p135, %p136
    %p138 = scmp.ne.s32.totalorder %s126, %s127
    %p139 = scmp.eq.s32.totalorder %s33, 2
    %p140 = por %p138, %p139
    %p142 = scmp.ne.s32.totalorder %s127, %s141
    %p143 = scmp.eq.s32.totalorder %s33, 0
    %p144 = por %p142, %p143
    %s146 = sadd.s32 %s145, 1
    %p149 = scmp.eq.s32.totalorder %s27, 2
    %p150 = scmp.ne.s32.totalorder %s145, %s147
    %p151 = scmp.eq.s32.totalorder %s27, 0
    %p152 = por %p150, %p151
    %p153 = scmp.ne.s32.totalorder %s145, %s147
    %p154 = scmp.eq.s32.totalorder %s32, 2
    %p155 = por %p153, %p154
    %p156 = scmp.ne.s32.totalorder %s147, %s148
    %p157 = scmp.eq.s32.totalorder %s32, 0
    %p158 = por %p156, %p157
    %p159 = scmp.ne.s32.totalorder %s147, %s148
    %p160 = scmp.eq.s32.totalorder %s33, 2
    %p161 = por %p159, %p160
    %p163 = scmp.ne.s32.totalorder %s148, %s162
    %p164 = scmp.eq.s32.totalorder %s33, 0
    %p165 = por %p163, %p164
    %s167 = sadd.s32 %s166, 1
    %p170 = scmp.eq.s32.totalorder %s27, 2
    %p171 = scmp.ne.s32.totalorder %s166, %s168
    %p172 = scmp.eq.s32.totalorder %s27, 0
    %p173 = por %p171, %p172
    %p174 = scmp.ne.s32.totalorder %s166, %s168
    %p175 = scmp.eq.s32.totalorder %s32, 2
    %p176 = por %p174, %p175
    %p177 = scmp.ne.s32.totalorder %s168, %s169
    %p178 = scmp.eq.s32.totalorder %s32, 0
    %p179 = por %p177, %p178
    %p180 = scmp.ne.s32.totalorder %s168, %s169
    %p181 = scmp.eq.s32.totalorder %s33, 2
    %p182 = por %p180, %p181
    %p184 = scmp.ne.s32.totalorder %s169, %s183
    %p185 = scmp.eq.s32.totalorder %s33, 0
    %p186 = por %p184, %p185
    %s188 = sadd.s32 %s187, 1
    %p191 = scmp.eq.s32.totalorder %s27, 2
    %p192 = scmp.ne.s32.totalorder %s187, %s189
    %p193 = scmp.eq.s32.totalorder %s27, 0
    %p194 = por %p192, %p193
    %p195 = scmp.ne.s32.totalorder %s187, %s189
    %p196 = scmp.eq.s32.totalorder %s32, 2
    %p197 = por %p195, %p196
    %p198 = scmp.ne.s32.totalorder %s189, %s190
    %p199 = scmp.eq.s32.totalorder %s32, 0
    %p200 = por %p198, %p199
    %p201 = scmp.ne.s32.totalorder %s189, %s190
    %p202 = scmp.eq.s32.totalorder %s33, 2
    %p203 = por %p201, %p202
    %p205 = scmp.ne.s32.totalorder %s190, %s204
    %p206 = scmp.eq.s32.totalorder %s33, 0
    %p207 = por %p205, %p206
    %s209 = sadd.s32 %s208, 1
    %p212 = scmp.eq.s32.totalorder %s27, 2
    %p213 = scmp.ne.s32.totalorder %s208, %s210
    %p214 = scmp.eq.s32.totalorder %s27, 0
    %p215 = por %p213, %p214
    %p216 = scmp.ne.s32.totalorder %s208, %s210
    %p217 = scmp.eq.s32.totalorder %s32, 2
    %p218 = por %p216, %p217
    %p219 = scmp.ne.s32.totalorder %s210, %s211
    %p220 = scmp.eq.s32.totalorder %s32, 0
    %p221 = por %p219, %p220
    %p222 = scmp.ne.s32.totalorder %s210, %s211
    %p223 = scmp.eq.s32.totalorder %s33, 2
    %p224 = por %p222, %p223
    %p226 = scmp.ne.s32.totalorder %s211, %s225
    %p227 = scmp.eq.s32.totalorder %s33, 0
    %p228 = por %p226, %p227
    %s230 = sadd.s32 %s229, 1
    %p233 = scmp.eq.s32.totalorder %s27, 2
    %p234 = scmp.ne.s32.totalorder %s229, %s231
    %p235 = scmp.eq.s32.totalorder %s27, 0
    %p236 = por %p234, %p235
    %p237 = scmp.ne.s32.totalorder %s229, %s231
    %p238 = scmp.eq.s32.totalorder %s32, 2
    %p239 = por %p237, %p238
    %p240 = scmp.ne.s32.totalorder %s231, %s232
    %p241 = scmp.eq.s32.totalorder %s32, 0
    %p242 = por %p240, %p241
    %p243 = scmp.ne.s32.totalorder %s231, %s232
    %p244 = scmp.eq.s32.totalorder %s33, 2
    %p245 = por %p243, %p244
    %p247 = scmp.ne.s32.totalorder %s232, %s246
    %p248 = scmp.eq.s32.totalorder %s33, 0
    %p249 = por %p247, %p248
    %s251 = sadd.s32 %s250, 1
    %p254 = scmp.eq.s32.totalorder %s27, 2
    %p255 = scmp.ne.s32.totalorder %s250, %s252
    %p256 = scmp.eq.s32.totalorder %s27, 0
    %p257 = por %p255, %p256
    %p258 = scmp.ne.s32.totalorder %s250, %s252
    %p259 = scmp.eq.s32.totalorder %s32, 2
    %p260 = por %p258, %p259
    %p261 = scmp.ne.s32.totalorder %s252, %s253
    %p262 = scmp.eq.s32.totalorder %s32, 0
    %p263 = por %p261, %p262
    %p264 = scmp.ne.s32.totalorder %s252, %s253
    %p265 = scmp.eq.s32.totalorder %s33, 2
    %p266 = por %p264, %p265
    %p268 = scmp.ne.s32.totalorder %s253, %s267
    %p269 = scmp.eq.s32.totalorder %s33, 0
    %p270 = por %p268, %p269
    %s272 = sadd.s32 %s271, 1
    %p275 = scmp.eq.s32.totalorder %s27, 2
    %p276 = scmp.ne.s32.totalorder %s271, %s273
    %p277 = scmp.eq.s32.totalorder %s27, 0
    %p278 = por %p276, %p277
    %p279 = scmp.ne.s32.totalorder %s271, %s273
    %p280 = scmp.eq.s32.totalorder %s32, 2
    %p281 = por %p279, %p280
    %p282 = scmp.ne.s32.totalorder %s273, %s274
    %p283 = scmp.eq.s32.totalorder %s32, 0
    %p284 = por %p282, %p283
    %p285 = scmp.ne.s32.totalorder %s273, %s274
    %p286 = scmp.eq.s32.totalorder %s33, 2
    %p287 = por %p285, %p286
    %p289 = scmp.ne.s32.totalorder %s274, %s288
    %p290 = scmp.eq.s32.totalorder %s33, 0
    %p291 = por %p289, %p290
    %s293 = sadd.s32 %s292, 1
    %p296 = scmp.eq.s32.totalorder %s27, 2
    %p297 = scmp.ne.s32.totalorder %s292, %s294
    %p298 = scmp.eq.s32.totalorder %s27, 0
    %p299 = por %p297, %p298
    %p300 = scmp.ne.s32.totalorder %s292, %s294
    %p301 = scmp.eq.s32.totalorder %s32, 2
    %p302 = por %p300, %p301
    %p303 = scmp.ne.s32.totalorder %s294, %s295
    %p304 = scmp.eq.s32.totalorder %s32, 0
    %p305 = por %p303, %p304
    %p306 = scmp.ne.s32.totalorder %s294, %s295
    %p307 = scmp.eq.s32.totalorder %s33, 2
    %p308 = por %p306, %p307
    %p310 = scmp.ne.s32.totalorder %s295, %s309
    %p311 = scmp.eq.s32.totalorder %s33, 0
    %p312 = por %p310, %p311
    %s314 = sadd.s32 %s313, 1
    %p317 = scmp.eq.s32.totalorder %s27, 2
    %p318 = scmp.ne.s32.totalorder %s313, %s315
    %p319 = scmp.eq.s32.totalorder %s27, 0
    %p320 = por %p318, %p319
    %p321 = scmp.ne.s32.totalorder %s313, %s315
    %p322 = scmp.eq.s32.totalorder %s32, 2
    %p323 = por %p321, %p322
    %p324 = scmp.ne.s32.totalorder %s315, %s316
    %p325 = scmp.eq.s32.totalorder %s32, 0
    %p326 = por %p324, %p325
    %p327 = scmp.ne.s32.totalorder %s315, %s316
    %p328 = scmp.eq.s32.totalorder %s33, 2
    %p329 = por %p327, %p328
    %p331 = scmp.ne.s32.totalorder %s316, %s330
    %p332 = scmp.eq.s32.totalorder %s33, 0
    %p333 = por %p331, %p332
    %s335 = sadd.s32 %s334, 1
    %p338 = scmp.eq.s32.totalorder %s27, 2
    %p339 = scmp.ne.s32.totalorder %s334, %s336
    %p340 = scmp.eq.s32.totalorder %s27, 0
    %p341 = por %p339, %p340
    %p342 = scmp.ne.s32.totalorder %s334, %s336
    %p343 = scmp.eq.s32.totalorder %s32, 2
    %p344 = por %p342, %p343
    %p345 = scmp.ne.s32.totalorder %s336, %s337
    %p346 = scmp.eq.s32.totalorder %s32, 0
    %p347 = por %p345, %p346
    %p348 = scmp.ne.s32.totalorder %s336, %s337
    %p349 = scmp.eq.s32.totalorder %s33, 2
    %p350 = por %p348, %p349
    %p352 = scmp.ne.s32.totalorder %s337, %s351
    %p353 = scmp.eq.s32.totalorder %s33, 0
    %p354 = por %p352, %p353
    %s356 = sadd.s32 %s355, 1
    %p359 = scmp.eq.s32.totalorder %s27, 2
    %p360 = scmp.ne.s32.totalorder %s355, %s357
    %p361 = scmp.eq.s32.totalorder %s27, 0
    %p362 = por %p360, %p361
    %p363 = scmp.ne.s32.totalorder %s355, %s357
    %p364 = scmp.eq.s32.totalorder %s32, 2
    %p365 = por %p363, %p364
    %p366 = scmp.ne.s32.totalorder %s357, %s358
    %p367 = scmp.eq.s32.totalorder %s32, 0
    %p368 = por %p366, %p367
    %p369 = scmp.ne.s32.totalorder %s357, %s358
    %p370 = scmp.eq.s32.totalorder %s33, 2
    %p371 = por %p369, %p370
    %p373 = scmp.ne.s32.totalorder %s358, %s372
    %p374 = scmp.eq.s32.totalorder %s33, 0
    %p375 = por %p373, %p374
    %s377 = sadd.s32 %s376, 1
    %p380 = scmp.eq.s32.totalorder %s27, 2
    %p381 = scmp.ne.s32.totalorder %s376, %s378
    %p382 = scmp.eq.s32.totalorder %s27, 0
    %p383 = por %p381, %p382
    %p384 = scmp.ne.s32.totalorder %s376, %s378
    %p385 = scmp.eq.s32.totalorder %s32, 2
    %p386 = por %p384, %p385
    %p387 = scmp.ne.s32.totalorder %s378, %s379
    %p388 = scmp.eq.s32.totalorder %s32, 0
    %p389 = por %p387, %p388
    %p390 = scmp.ne.s32.totalorder %s378, %s379
    %p391 = scmp.eq.s32.totalorder %s33, 2
    %p392 = por %p390, %p391
    %p394 = scmp.ne.s32.totalorder %s379, %s393
    %p395 = scmp.eq.s32.totalorder %s33, 0
    %p396 = por %p394, %p395
    %s398 = sadd.s32 %s397, 1
    %p401 = scmp.eq.s32.totalorder %s27, 2
    %p402 = scmp.ne.s32.totalorder %s397, %s399
    %p403 = scmp.eq.s32.totalorder %s27, 0
    %p404 = por %p402, %p403
    %p405 = scmp.ne.s32.totalorder %s397, %s399
    %p406 = scmp.eq.s32.totalorder %s32, 2
    %p407 = por %p405, %p406
    %p408 = scmp.ne.s32.totalorder %s399, %s400
    %p409 = scmp.eq.s32.totalorder %s32, 0
    %p410 = por %p408, %p409
    %p411 = scmp.ne.s32.totalorder %s399, %s400
    %p412 = scmp.eq.s32.totalorder %s33, 2
    %p413 = por %p411, %p412
    %p415 = scmp.ne.s32.totalorder %s400, %s414
    %p416 = scmp.eq.s32.totalorder %s33, 0
    %p417 = por %p415, %p416
    %s419 = sadd.s32 %s418, 1
    %p422 = scmp.eq.s32.totalorder %s27, 2
    %p423 = scmp.ne.s32.totalorder %s418, %s420
    %p424 = scmp.eq.s32.totalorder %s27, 0
    %p425 = por %p423, %p424
    %p426 = scmp.ne.s32.totalorder %s418, %s420
    %p427 = scmp.eq.s32.totalorder %s32, 2
    %p428 = por %p426, %p427
    %p429 = scmp.ne.s32.totalorder %s420, %s421
    %p430 = scmp.eq.s32.totalorder %s32, 0
    %p431 = por %p429, %p430
    %p432 = scmp.ne.s32.totalorder %s420, %s421
    %p433 = scmp.eq.s32.totalorder %s33, 2
    %p434 = por %p432, %p433
    %p436 = scmp.ne.s32.totalorder %s421, %s435
    %p437 = scmp.eq.s32.totalorder %s33, 0
    %p438 = por %p436, %p437
    %s440 = sadd.s32 %s439, 1
    %p443 = scmp.eq.s32.totalorder %s27, 2
    %p444 = scmp.ne.s32.totalorder %s439, %s441
    %p445 = scmp.eq.s32.totalorder %s27, 0
    %p446 = por %p444, %p445
    %p447 = scmp.ne.s32.totalorder %s439, %s441
    %p448 = scmp.eq.s32.totalorder %s32, 2
    %p449 = por %p447, %p448
    %p450 = scmp.ne.s32.totalorder %s441, %s442
    %p451 = scmp.eq.s32.totalorder %s32, 0
    %p452 = por %p450, %p451
    %p453 = scmp.ne.s32.totalorder %s441, %s442
    %p454 = scmp.eq.s32.totalorder %s33, 2
    %p455 = por %p453, %p454
    %p457 = scmp.ne.s32.totalorder %s442, %s456
    %p458 = scmp.eq.s32.totalorder %s33, 0
    %p459 = por %p457, %p458
    %s461 = sadd.s32 %s460, 1
    %p464 = scmp.eq.s32.totalorder %s27, 2
    %p465 = scmp.ne.s32.totalorder %s460, %s462
    %p466 = scmp.eq.s32.totalorder %s27, 0
    %p467 = por %p465, %p466
    %p468 = scmp.ne.s32.totalorder %s460, %s462
    %p469 = scmp.eq.s32.totalorder %s32, 2
    %p470 = por %p468, %p469
    %p471 = scmp.ne.s32.totalorder %s462, %s463
    %p472 = scmp.eq.s32.totalorder %s32, 0
    %p473 = por %p471, %p472
    %p474 = scmp.ne.s32.totalorder %s462, %s463
    %p475 = scmp.eq.s32.totalorder %s33, 2
    %p476 = por %p474, %p475
    %p478 = scmp.ne.s32.totalorder %s463, %s477
    %p479 = scmp.eq.s32.totalorder %s33, 0
    %p480 = por %p478, %p479
    %s481 = ssub.s32 %s27, %s34
    %p482 = scmp.eq.s32.totalorder %s481, 0
    %s484 = sadd.s32 %s483, 1
    %s485 = scalar_select %p482, %s483, %s484
    %p488 = pneg %p482
    %p489 = scmp.eq.s32.totalorder %s27, 2
    %p490 = por %p488, %p489
    %p491 = scmp.ne.s32.totalorder %s483, %s486
    %p492 = scmp.eq.s32.totalorder %s27, 0
    %p493 = por %p491, %p492
    %p494 = scmp.ne.s32.totalorder %s483, %s486
    %p495 = scmp.eq.s32.totalorder %s32, 2
    %p496 = por %p494, %p495
    %p497 = scmp.ne.s32.totalorder %s486, %s487
    %p498 = scmp.eq.s32.totalorder %s32, 0
    %p499 = por %p497, %p498
    %p500 = scmp.ne.s32.totalorder %s486, %s487
    %p501 = scmp.eq.s32.totalorder %s33, 2
    %p502 = por %p500, %p501
    %p504 = scmp.ne.s32.totalorder %s487, %s503
    %p505 = scmp.eq.s32.totalorder %s33, 0
    %p506 = por %p504, %p505
    %p507 = scmp.le.s32.totalorder 1, %s27
    %p508 = scmp.lt.s32.totalorder %s27, 4
    %p509 = pnand %p507, %p508
    %p510 = pneg %p509
    // Predicated region
    $region9: #{ae_forward.1} parent=5 // pred_check
      _
    $region10: #{ae_forward.1} parent=5 // pred_check_branch
      %512 = sbr.rel (%p509) target = $region12
    $region11: #{ae_forward.1} parent=5 // pred_region
      %s513 = ssub.s32 %s27, 1
      // Predicated region
      $region13: #{ae_forward.1} parent=11 // pred_check
        %p514 = pneg %p74
      $region14: #{ae_forward.1} parent=11 // pred_check_branch
        %516 = sbr.rel (%p514) target = $region16
      $region15: #{ae_forward.1} parent=11 // pred_region
        _
      $region16: #{ae_forward.1} parent=11 // pred_fallthru
        _
      // Predicated region
      $region17: #{ae_forward.1} parent=11 // pred_check
        %p517 = pneg %p95
      $region18: #{ae_forward.1} parent=11 // pred_check_branch
        %519 = sbr.rel (%p517) target = $region20
      $region19: #{ae_forward.1} parent=11 // pred_region
        _
      $region20: #{ae_forward.1} parent=11 // pred_fallthru
        _
      // Predicated region
      $region21: #{ae_forward.1} parent=11 // pred_check
        %p520 = pneg %p116
      $region22: #{ae_forward.1} parent=11 // pred_check_branch
        %522 = sbr.rel (%p520) target = $region24
      $region23: #{ae_forward.1} parent=11 // pred_region
        _
      $region24: #{ae_forward.1} parent=11 // pred_fallthru
        _
      // Predicated region
      $region25: #{ae_forward.1} parent=11 // pred_check
        %p523 = pneg %p137
      $region26: #{ae_forward.1} parent=11 // pred_check_branch
        %525 = sbr.rel (%p523) target = $region28
      $region27: #{ae_forward.1} parent=11 // pred_region
        _
      $region28: #{ae_forward.1} parent=11 // pred_fallthru
        _
      // Predicated region
      $region29: #{ae_forward.1} parent=11 // pred_check
        %p526 = pneg %p158
      $region30: #{ae_forward.1} parent=11 // pred_check_branch
        %528 = sbr.rel (%p526) target = $region32
      $region31: #{ae_forward.1} parent=11 // pred_region
        _
      $region32: #{ae_forward.1} parent=11 // pred_fallthru
        _
      // Predicated region
      $region33: #{ae_forward.1} parent=11 // pred_check
        %p529 = pneg %p179
      $region34: #{ae_forward.1} parent=11 // pred_check_branch
        %531 = sbr.rel (%p529) target = $region36
      $region35: #{ae_forward.1} parent=11 // pred_region
        _
      $region36: #{ae_forward.1} parent=11 // pred_fallthru
        _
      // Predicated region
      $region37: #{ae_forward.1} parent=11 // pred_check
        %p532 = pneg %p200
      $region38: #{ae_forward.1} parent=11 // pred_check_branch
        %534 = sbr.rel (%p532) target = $region40
      $region39: #{ae_forward.1} parent=11 // pred_region
        _
      $region40: #{ae_forward.1} parent=11 // pred_fallthru
        _
      // Predicated region
      $region41: #{ae_forward.1} parent=11 // pred_check
        %p535 = pneg %p221
      $region42: #{ae_forward.1} parent=11 // pred_check_branch
        %537 = sbr.rel (%p535) target = $region44
      $region43: #{ae_forward.1} parent=11 // pred_region
        _
      $region44: #{ae_forward.1} parent=11 // pred_fallthru
        _
      // Predicated region
      $region45: #{ae_forward.1} parent=11 // pred_check
        %p538 = pneg %p242
      $region46: #{ae_forward.1} parent=11 // pred_check_branch
        %540 = sbr.rel (%p538) target = $region48
      $region47: #{ae_forward.1} parent=11 // pred_region
        _
      $region48: #{ae_forward.1} parent=11 // pred_fallthru
        _
      // Predicated region
      $region49: #{ae_forward.1} parent=11 // pred_check
        %p541 = pneg %p263
      $region50: #{ae_forward.1} parent=11 // pred_check_branch
        %543 = sbr.rel (%p541) target = $region52
      $region51: #{ae_forward.1} parent=11 // pred_region
        _
      $region52: #{ae_forward.1} parent=11 // pred_fallthru
        _
      // Predicated region
      $region53: #{ae_forward.1} parent=11 // pred_check
        %p544 = pneg %p284
      $region54: #{ae_forward.1} parent=11 // pred_check_branch
        %546 = sbr.rel (%p544) target = $region56
      $region55: #{ae_forward.1} parent=11 // pred_region
        _
      $region56: #{ae_forward.1} parent=11 // pred_fallthru
        _
      // Predicated region
      $region57: #{ae_forward.1} parent=11 // pred_check
        %p547 = pneg %p305
      $region58: #{ae_forward.1} parent=11 // pred_check_branch
        %549 = sbr.rel (%p547) target = $region60
      $region59: #{ae_forward.1} parent=11 // pred_region
        _
      $region60: #{ae_forward.1} parent=11 // pred_fallthru
        _
      // Predicated region
      $region61: #{ae_forward.1} parent=11 // pred_check
        %p550 = pneg %p326
      $region62: #{ae_forward.1} parent=11 // pred_check_branch
        %552 = sbr.rel (%p550) target = $region64
      $region63: #{ae_forward.1} parent=11 // pred_region
        _
      $region64: #{ae_forward.1} parent=11 // pred_fallthru
        _
      // Predicated region
      $region65: #{ae_forward.1} parent=11 // pred_check
        %p553 = pneg %p347
      $region66: #{ae_forward.1} parent=11 // pred_check_branch
        %555 = sbr.rel (%p553) target = $region68
      $region67: #{ae_forward.1} parent=11 // pred_region
        _
      $region68: #{ae_forward.1} parent=11 // pred_fallthru
        _
      // Predicated region
      $region69: #{ae_forward.1} parent=11 // pred_check
        %p556 = pneg %p368
      $region70: #{ae_forward.1} parent=11 // pred_check_branch
        %558 = sbr.rel (%p556) target = $region72
      $region71: #{ae_forward.1} parent=11 // pred_region
        _
      $region72: #{ae_forward.1} parent=11 // pred_fallthru
        _
      // Predicated region
      $region73: #{ae_forward.1} parent=11 // pred_check
        %p559 = pneg %p389
      $region74: #{ae_forward.1} parent=11 // pred_check_branch
        %561 = sbr.rel (%p559) target = $region76
      $region75: #{ae_forward.1} parent=11 // pred_region
        _
      $region76: #{ae_forward.1} parent=11 // pred_fallthru
        _
      // Predicated region
      $region77: #{ae_forward.1} parent=11 // pred_check
        %p562 = pneg %p410
      $region78: #{ae_forward.1} parent=11 // pred_check_branch
        %564 = sbr.rel (%p562) target = $region80
      $region79: #{ae_forward.1} parent=11 // pred_region
        _
      $region80: #{ae_forward.1} parent=11 // pred_fallthru
        _
      // Predicated region
      $region81: #{ae_forward.1} parent=11 // pred_check
        %p565 = pneg %p431
      $region82: #{ae_forward.1} parent=11 // pred_check_branch
        %567 = sbr.rel (%p565) target = $region84
      $region83: #{ae_forward.1} parent=11 // pred_region
        _
      $region84: #{ae_forward.1} parent=11 // pred_fallthru
        _
      // Predicated region
      $region85: #{ae_forward.1} parent=11 // pred_check
        %p568 = pneg %p452
      $region86: #{ae_forward.1} parent=11 // pred_check_branch
        %570 = sbr.rel (%p568) target = $region88
      $region87: #{ae_forward.1} parent=11 // pred_region
        _
      $region88: #{ae_forward.1} parent=11 // pred_fallthru
        _
      // Predicated region
      $region89: #{ae_forward.1} parent=11 // pred_check
        %p571 = pneg %p473
      $region90: #{ae_forward.1} parent=11 // pred_check_branch
        %573 = sbr.rel (%p571) target = $region92
      $region91: #{ae_forward.1} parent=11 // pred_region
        _
      $region92: #{ae_forward.1} parent=11 // pred_fallthru
        _
    $region12: #{ae_forward.1} parent=5 // pred_fallthru
      _
    %p574 = scmp.lt.s32.totalorder %s27, 3
    // Predicated region
    $region93: #{ae_forward.1} parent=5 // pred_check
      %p575 = pneg %p574
    $region94: #{ae_forward.1} parent=5 // pred_check_branch
      %577 = sbr.rel (%p575) target = $region96
    $region95: #{ae_forward.1} parent=5 // pred_region
      // Predicated region
      $region97: #{ae_forward.1} parent=95 // pred_check
        %p578 = pneg %p47
      $region98: #{ae_forward.1} parent=95 // pred_check_branch
        %580 = sbr.rel (%p578) target = $region100
      $region99: #{ae_forward.1} parent=95 // pred_region
        %s581 = smul.u32 14, %s27
        %p582 = scmp.lt.s32.totalorder %s581, 41
        %s583 = scalar_select %p582, %s581, 41
        %s584 = smul.addr %s583, 7
        %s585 = smul.addr %s584, 8
        %s586 = scalar_lea.vmem %s0, %s585
        %s587 = smul.u32 14, %s27
      $region100: #{ae_forward.1} parent=95 // pred_fallthru
        _
    $region96: #{ae_forward.1} parent=5 // pred_fallthru
      _
    %p588 = scmp.le.s32.totalorder 1, %s27
    %p589 = scmp.lt.s32.totalorder %s27, 4
    %p590 = pnand %p588, %p589
    %p591 = pneg %p590
    // Predicated region
    $region101: #{ae_forward.1} parent=5 // pred_check
      _
    $region102: #{ae_forward.1} parent=5 // pred_check_branch
      %593 = sbr.rel (%p590) target = $region104
    $region103: #{ae_forward.1} parent=5 // pred_region
      %s594 = ssub.s32 %s27, 1
      %s595 = smul.u32 14, %s32
      %p596 = scmp.lt.s32.totalorder %s595, 41
      %s597 = scalar_select %p596, %s595, 41
      %s598 = smul.addr %s597, 7
      %s599 = smul.addr %s598, 8
      %s600 = scalar_lea.vmem %s0, %s599
      %p601 = pneg %p53
      %p602 = pneg %p50
      %p603 = pneg %p74
      %p604 = pneg %p71
      %p605 = pneg %p95
      %p606 = pneg %p92
      %p607 = pneg %p116
      %p608 = pneg %p113
      %p609 = pneg %p137
      %p610 = pneg %p134
      %p611 = pneg %p158
      %p612 = pneg %p155
      %p613 = pneg %p179
      %p614 = pneg %p176
      %p615 = pneg %p200
      %p616 = pneg %p197
      %p617 = pneg %p221
      %p618 = pneg %p218
      %p619 = pneg %p242
      %p620 = pneg %p239
      %p621 = pneg %p263
      %p622 = pneg %p260
      %p623 = pneg %p284
      %p624 = pneg %p281
      %p625 = pneg %p305
      %p626 = pneg %p302
      %p627 = pneg %p326
      %p628 = pneg %p323
      %p629 = pneg %p347
      %p630 = pneg %p344
      %p631 = pneg %p368
      %p632 = pneg %p365
      %p633 = pneg %p389
      %p634 = pneg %p386
      %p635 = pneg %p410
      %p636 = pneg %p407
      %p637 = pneg %p431
      %p638 = pneg %p428
      %p639 = pneg %p452
      %p640 = pneg %p449
      %p641 = pneg %p473
      %p642 = pneg %p470
      %p643 = pneg %p499
      %p644 = pneg %p496
      %s645 = smul.u32 14, %s32
      %p646 = scmp.lt.s32.totalorder %s645, 41
      %s647 = scalar_select %p646, %s645, 41
      %s648 = smul.addr %s647, 7
      %s649 = smul.addr %s648, 4
      %s650 = scalar_lea.vmem %s21, %s649
      %s651 = smul.u32 14, %s32
      %p652 = scmp.lt.s32.totalorder %s651, 41
      %s653 = scalar_select %p652, %s651, 41
      %s654 = smul.addr %s653, 7
      %s655 = smul.addr %s654, 8
      %s656 = scalar_lea.vmem %s0, %s655
      %s657 = smul.u32 14, %s32
      %s658 = smul.u32 14, %s32
      %p659 = scmp.lt.s32.totalorder %s658, 41
      %s660 = scalar_select %p659, %s658, 41
      %s661 = smul.addr %s660, 7
      %s662 = smul.addr %s661, 4
      %s663 = scalar_lea.vmem %s21, %s662
      %s664 = smul.u32 14, %s32
      %v666 = vld [vmem:[%s656] sm:$0xff]
      %v667 = vld [vmem:[%s656 + $0x8] sm:$0xff]
      %v668 = vld [vmem:[%s656 + $0x10] sm:$0xff]
      %v669 = vld [vmem:[%s656 + $0x18] sm:$0xff]
      %v670 = vld [vmem:[%s656 + $0x20] sm:$0xff]
      %v671 = vld [vmem:[%s656 + $0x28] sm:$0xff]
      %v672 = vld [vmem:[%s656 + $0x30] sm:$0xff]
      %v673 = vld [vmem:[%s656 + $0x38] sm:$0xff]
      %v674 = vld [vmem:[%s656 + $0x40] sm:$0xff]
      %v675 = vld [vmem:[%s656 + $0x48] sm:$0xff]
      %v676 = vld [vmem:[%s656 + $0x50] sm:$0xff]
      %v677 = vld [vmem:[%s656 + $0x58] sm:$0xff]
      %v678 = vld [vmem:[%s656 + $0x60] sm:$0xff]
      %v679 = vld [vmem:[%s656 + $0x68] sm:$0xff]
      %v680 = vld [vmem:[%s656 + $0x70] sm:$0xff]
      %v681 = vld [vmem:[%s656 + $0x78] sm:$0xff]
      %v682 = vld [vmem:[%s656 + $0x80] sm:$0xff]
      %v683 = vld [vmem:[%s656 + $0x88] sm:$0xff]
      %v684 = vld [vmem:[%s656 + $0x90] sm:$0xff]
      %v685 = vld [vmem:[%s656 + $0x98] sm:$0xff]
      %v686 = vld [vmem:[%s656 + $0xa0] sm:$0xff]
      %v687 = vld [vmem:[%s656 + $0xa8] sm:$0xff]
      %v688 = vld [vmem:[%s656 + $0xb0] sm:$0xff]
      %v689 = vld [vmem:[%s656 + $0xb8] sm:$0xff]
      %v690 = vld [vmem:[%s656 + $0xc0] sm:$0xff]
      %v691 = vld [vmem:[%s656 + $0xc8] sm:$0xff]
      %v692 = vld [vmem:[%s656 + $0xd0] sm:$0xff]
      %v693 = vld [vmem:[%s656 + $0xd8] sm:$0xff]
      %v694 = vld [vmem:[%s656 + $0xe0] sm:$0xff]
      %v695 = vld [vmem:[%s656 + $0xe8] sm:$0xff]
      %v696 = vld [vmem:[%s656 + $0xf0] sm:$0xff]
      %v697 = vld [vmem:[%s656 + $0xf8] sm:$0xff]
      %v698 = vld [vmem:[%s656 + $0x100] sm:$0xff]
      %v699 = vld [vmem:[%s656 + $0x108] sm:$0xff]
      %v700 = vld [vmem:[%s656 + $0x110] sm:$0xff]
      %v701 = vld [vmem:[%s656 + $0x118] sm:$0xff]
      %v702 = vld [vmem:[%s656 + $0x120] sm:$0xff]
      %v703 = vld [vmem:[%s656 + $0x128] sm:$0xff]
      %v704 = vld [vmem:[%s656 + $0x130] sm:$0xff]
      %v705 = vld [vmem:[%s656 + $0x138] sm:$0xff]
      %v706 = vld [vmem:[%s656 + $0x140] sm:$0xff]
      %v707 = vld [vmem:[%s656 + $0x148] sm:$0xff]
      %v708 = vld [vmem:[%s656 + $0x150] sm:$0xff]
      %v709 = vld [vmem:[%s656 + $0x158] sm:$0xff]
      %v710 = vld [vmem:[%s656 + $0x160] sm:$0xff]
      %v711 = vld [vmem:[%s656 + $0x168] sm:$0xff]
      %v712 = vld [vmem:[%s656 + $0x170] sm:$0xff]
      %v713 = vld [vmem:[%s656 + $0x178] sm:$0xff]
      %v714 = vld [vmem:[%s656 + $0x180] sm:$0xff]
      %v715 = vld [vmem:[%s656 + $0x188] sm:$0xff]
      %v716 = vld [vmem:[%s656 + $0x190] sm:$0xff]
      %v717 = vld [vmem:[%s656 + $0x198] sm:$0xff]
      %v718 = vld [vmem:[%s656 + $0x1a0] sm:$0xff]
      %v719 = vld [vmem:[%s656 + $0x1a8] sm:$0xff]
      %v720 = vld [vmem:[%s656 + $0x1b0] sm:$0xff]
      %v721 = vld [vmem:[%s656 + $0x1b8] sm:$0xff]
      %v722 = vld [vmem:[%s656 + $0x1c0] sm:$0xff]
      %v723 = vld [vmem:[%s656 + $0x1c8] sm:$0xff]
      %v724 = vld [vmem:[%s656 + $0x1d0] sm:$0xff]
      %v725 = vld [vmem:[%s656 + $0x1d8] sm:$0xff]
      %v726 = vld [vmem:[%s656 + $0x1e0] sm:$0xff]
      %v727 = vld [vmem:[%s656 + $0x1e8] sm:$0xff]
      %v728 = vld [vmem:[%s656 + $0x1f0] sm:$0xff]
      %v729 = vld [vmem:[%s656 + $0x1f8] sm:$0xff]
      %v730 = vld [vmem:[%s656 + $0x200] sm:$0xff]
      %v731 = vld [vmem:[%s656 + $0x208] sm:$0xff]
      %v732 = vld [vmem:[%s656 + $0x210] sm:$0xff]
      %v733 = vld [vmem:[%s656 + $0x218] sm:$0xff]
      %v734 = vld [vmem:[%s656 + $0x220] sm:$0xff]
      %v735 = vld [vmem:[%s656 + $0x228] sm:$0xff]
      %v736 = vld [vmem:[%s656 + $0x230] sm:$0xff]
      %v737 = vld [vmem:[%s656 + $0x238] sm:$0xff]
      %v738 = vld [vmem:[%s656 + $0x240] sm:$0xff]
      %v739 = vld [vmem:[%s656 + $0x248] sm:$0xff]
      %v740 = vld [vmem:[%s656 + $0x250] sm:$0xff]
      %v741 = vld [vmem:[%s656 + $0x258] sm:$0xff]
      %v742 = vld [vmem:[%s656 + $0x260] sm:$0xff]
      %v743 = vld [vmem:[%s656 + $0x268] sm:$0xff]
      %v744 = vld [vmem:[%s656 + $0x270] sm:$0xff]
      %v745 = vld [vmem:[%s656 + $0x278] sm:$0xff]
      %v746 = vld [vmem:[%s656 + $0x280] sm:$0xff]
      %v747 = vld [vmem:[%s656 + $0x288] sm:$0xff]
      %v748 = vld [vmem:[%s656 + $0x290] sm:$0xff]
      %v749 = vld [vmem:[%s656 + $0x298] sm:$0xff]
      %v750 = vld [vmem:[%s656 + $0x2a0] sm:$0xff]
      %v751 = vld [vmem:[%s656 + $0x2a8] sm:$0xff]
      %v752 = vld [vmem:[%s656 + $0x2b0] sm:$0xff]
      %v753 = vld [vmem:[%s656 + $0x2b8] sm:$0xff]
      %v754 = vld [vmem:[%s656 + $0x2c0] sm:$0xff]
      %v755 = vld [vmem:[%s656 + $0x2c8] sm:$0xff]
      %v756 = vld [vmem:[%s656 + $0x2d0] sm:$0xff]
      %v757 = vld [vmem:[%s656 + $0x2d8] sm:$0xff]
      %v758 = vld [vmem:[%s656 + $0x2e0] sm:$0xff]
      %v759 = vld [vmem:[%s656 + $0x2e8] sm:$0xff]
      %v760 = vld [vmem:[%s656 + $0x2f0] sm:$0xff]
      %v761 = vld [vmem:[%s656 + $0x2f8] sm:$0xff]
      %v762 = vld [vmem:[%s656 + $0x300] sm:$0xff]
      %v763 = vld [vmem:[%s656 + $0x308] sm:$0xff]
      %v764 = vpack.c.bf16 %v673, %v666
      %v765 = vpack.c.bf16 %v674, %v667
      %v766 = vpack.c.bf16 %v675, %v668
      %v767 = vpack.c.bf16 %v676, %v669
      %v768 = vpack.c.bf16 %v677, %v670
      %v769 = vpack.c.bf16 %v678, %v671
      %v770 = vpack.c.bf16 %v679, %v672
      %v771 = vpack.c.bf16 %v687, %v680
      %v772 = vpack.c.bf16 %v688, %v681
      %v773 = vpack.c.bf16 %v689, %v682
      %v774 = vpack.c.bf16 %v690, %v683
      %v775 = vpack.c.bf16 %v691, %v684
      %v776 = vpack.c.bf16 %v692, %v685
      %v777 = vpack.c.bf16 %v693, %v686
      %v778 = vpack.c.bf16 %v701, %v694
      %v779 = vpack.c.bf16 %v702, %v695
      %v780 = vpack.c.bf16 %v703, %v696
      %v781 = vpack.c.bf16 %v704, %v697
      %v782 = vpack.c.bf16 %v705, %v698
      %v783 = vpack.c.bf16 %v706, %v699
      %v784 = vpack.c.bf16 %v707, %v700
      %v785 = vpack.c.bf16 %v715, %v708
      %v786 = vpack.c.bf16 %v716, %v709
      %v787 = vpack.c.bf16 %v717, %v710
      %v788 = vpack.c.bf16 %v718, %v711
      %v789 = vpack.c.bf16 %v719, %v712
      %v790 = vpack.c.bf16 %v720, %v713
      %v791 = vpack.c.bf16 %v721, %v714
      %v792 = vpack.c.bf16 %v729, %v722
      %v793 = vpack.c.bf16 %v730, %v723
      %v794 = vpack.c.bf16 %v731, %v724
      %v795 = vpack.c.bf16 %v732, %v725
      %v796 = vpack.c.bf16 %v733, %v726
      %v797 = vpack.c.bf16 %v734, %v727
      %v798 = vpack.c.bf16 %v735, %v728
      %v799 = vpack.c.bf16 %v743, %v736
      %v800 = vpack.c.bf16 %v744, %v737
      %v801 = vpack.c.bf16 %v745, %v738
      %v802 = vpack.c.bf16 %v746, %v739
      %v803 = vpack.c.bf16 %v747, %v740
      %v804 = vpack.c.bf16 %v748, %v741
      %v805 = vpack.c.bf16 %v749, %v742
      %v806 = vpack.c.bf16 %v757, %v750
      %v807 = vpack.c.bf16 %v758, %v751
      %v808 = vpack.c.bf16 %v759, %v752
      %v809 = vpack.c.bf16 %v760, %v753
      %v810 = vpack.c.bf16 %v761, %v754
      %v811 = vpack.c.bf16 %v762, %v755
      %v812 = vpack.c.bf16 %v763, %v756
      %v813 = vld [vmem:[%s1] sm:$0xf]
      %v814 = vld [vmem:[%s1 + $0x4] sm:$0xf]
      %v815 = vld [vmem:[%s1 + $0x8] sm:$0xf]
      %v816 = vld [vmem:[%s1 + $0xc] sm:$0xf]
      %v817 = vld [vmem:[%s1 + $0x10] sm:$0xf]
      %v818 = vld [vmem:[%s1 + $0x14] sm:$0xf]
      %v819 = vld [vmem:[%s1 + $0x18] sm:$0xf]
      %v820 = vld [vmem:[%s1 + $0x1c] sm:$0xf]
      %v821 = vld [vmem:[%s1 + $0x20] sm:$0xf]
      %v822 = vld [vmem:[%s1 + $0x24] sm:$0xf]
      %v823 = vld [vmem:[%s1 + $0x28] sm:$0xf]
      %v824 = vld [vmem:[%s1 + $0x2c] sm:$0xf]
      %v825 = vld [vmem:[%s1 + $0x30] sm:$0xf]
      %v826 = vld [vmem:[%s1 + $0x34] sm:$0xf]
      %v827 = vld [vmem:[%s1 + $0x38] sm:$0xf]
      %v828 = vld [vmem:[%s1 + $0x3c] sm:$0xf]
      %v829 = vld [vmem:[%s1 + $0x40] sm:$0xf]
      %v830 = vld [vmem:[%s1 + $0x44] sm:$0xf]
      %v831 = vld [vmem:[%s1 + $0x48] sm:$0xf]
      %v832 = vld [vmem:[%s1 + $0x4c] sm:$0xf]
      %v833 = vld [vmem:[%s1 + $0x50] sm:$0xf]
      %v834 = vld [vmem:[%s1 + $0x54] sm:$0xf]
      %v835 = vld [vmem:[%s1 + $0x58] sm:$0xf]
      %v836 = vld [vmem:[%s1 + $0x5c] sm:$0xf]
      %v837 = vld [vmem:[%s1 + $0x60] sm:$0xf]
      %v838 = vld [vmem:[%s1 + $0x64] sm:$0xf]
      %v839 = vld [vmem:[%s1 + $0x68] sm:$0xf]
      %v840 = vld [vmem:[%s1 + $0x6c] sm:$0xf]
      %v841 = vld [vmem:[%s1 + $0x70] sm:$0xf]
      %v842 = vld [vmem:[%s1 + $0x74] sm:$0xf]
      %v843 = vld [vmem:[%s1 + $0x78] sm:$0xf]
      %v844 = vld [vmem:[%s1 + $0x7c] sm:$0xf]
      %v845 = vld [vmem:[%s1 + $0x80] sm:$0xf]
      %v846 = vld [vmem:[%s1 + $0x84] sm:$0xf]
      %v847 = vld [vmem:[%s1 + $0x88] sm:$0xf]
      %v848 = vld [vmem:[%s1 + $0x8c] sm:$0xf]
      %v849 = vld [vmem:[%s1 + $0x90] sm:$0xf]
      %v850 = vld [vmem:[%s1 + $0x94] sm:$0xf]
      %v851 = vld [vmem:[%s1 + $0x98] sm:$0xf]
      %v852 = vld [vmem:[%s1 + $0x9c] sm:$0xf]
      %v853 = vld [vmem:[%s1 + $0xa0] sm:$0xf]
      %v854 = vld [vmem:[%s1 + $0xa4] sm:$0xf]
      %v855 = vld [vmem:[%s1 + $0xa8] sm:$0xf]
      %v856 = vld [vmem:[%s1 + $0xac] sm:$0xf]
      %v857 = vld [vmem:[%s1 + $0xb0] sm:$0xf]
      %v858 = vld [vmem:[%s1 + $0xb4] sm:$0xf]
      %v859 = vld [vmem:[%s1 + $0xb8] sm:$0xf]
      %v860 = vld [vmem:[%s1 + $0xbc] sm:$0xf]
      %v861 = vld [vmem:[%s1 + $0xc0] sm:$0xf]
      %v862 = vld [vmem:[%s1 + $0xc4] sm:$0xf]
      %v863 = vld [vmem:[%s1 + $0xc8] sm:$0xf]
      %v864 = vld [vmem:[%s1 + $0xcc] sm:$0xf]
      %v865 = vld [vmem:[%s1 + $0xd0] sm:$0xf]
      %v866 = vld [vmem:[%s1 + $0xd4] sm:$0xf]
      %v867 = vld [vmem:[%s1 + $0xd8] sm:$0xf]
      %v868 = vld [vmem:[%s1 + $0xdc] sm:$0xf]
      %v869 = vld [vmem:[%s1 + $0xe0] sm:$0xf]
      %v870 = vld [vmem:[%s1 + $0xe4] sm:$0xf]
      %v871 = vld [vmem:[%s1 + $0xe8] sm:$0xf]
      %v872 = vld [vmem:[%s1 + $0xec] sm:$0xf]
      %v873 = vld [vmem:[%s1 + $0xf0] sm:$0xf]
      %v874 = vld [vmem:[%s1 + $0xf4] sm:$0xf]
      %v875 = vld [vmem:[%s1 + $0xf8] sm:$0xf]
      %v876 = vld [vmem:[%s1 + $0xfc] sm:$0xf]
      %v877 = vld [vmem:[%s1 + $0x100] sm:$0xf]
      %v878 = vld [vmem:[%s1 + $0x104] sm:$0xf]
      %v879 = vld [vmem:[%s1 + $0x108] sm:$0xf]
      %v880 = vld [vmem:[%s1 + $0x10c] sm:$0xf]
      %v881 = vld [vmem:[%s1 + $0x110] sm:$0xf]
      %v882 = vld [vmem:[%s1 + $0x114] sm:$0xf]
      %v883 = vld [vmem:[%s1 + $0x118] sm:$0xf]
      %v884 = vld [vmem:[%s1 + $0x11c] sm:$0xf]
      %v885 = vld [vmem:[%s1 + $0x120] sm:$0xf]
      %v886 = vld [vmem:[%s1 + $0x124] sm:$0xf]
      %v887 = vld [vmem:[%s1 + $0x128] sm:$0xf]
      %v888 = vld [vmem:[%s1 + $0x12c] sm:$0xf]
      %v889 = vld [vmem:[%s1 + $0x130] sm:$0xf]
      %v890 = vld [vmem:[%s1 + $0x134] sm:$0xf]
      %v891 = vld [vmem:[%s1 + $0x138] sm:$0xf]
      %v892 = vld [vmem:[%s1 + $0x13c] sm:$0xf]
      %v893 = vld [vmem:[%s1 + $0x140] sm:$0xf]
      %v894 = vld [vmem:[%s1 + $0x144] sm:$0xf]
      %v895 = vld [vmem:[%s1 + $0x148] sm:$0xf]
      %v896 = vld [vmem:[%s1 + $0x14c] sm:$0xf]
      %v897 = vld [vmem:[%s1 + $0x150] sm:$0xf]
      %v898 = vld [vmem:[%s1 + $0x154] sm:$0xf]
      %v899 = vld [vmem:[%s1 + $0x158] sm:$0xf]
      %v900 = vld [vmem:[%s1 + $0x15c] sm:$0xf]
      %v901 = vld [vmem:[%s1 + $0x160] sm:$0xf]
      %v902 = vld [vmem:[%s1 + $0x164] sm:$0xf]
      %v903 = vld [vmem:[%s1 + $0x168] sm:$0xf]
      %v904 = vld [vmem:[%s1 + $0x16c] sm:$0xf]
      %v905 = vld [vmem:[%s1 + $0x170] sm:$0xf]
      %v906 = vld [vmem:[%s1 + $0x174] sm:$0xf]
      %v907 = vld [vmem:[%s1 + $0x178] sm:$0xf]
      %v908 = vld [vmem:[%s1 + $0x17c] sm:$0xf]
      %v909 = vld [vmem:[%s1 + $0x180] sm:$0xf]
      %v910 = vld [vmem:[%s1 + $0x184] sm:$0xf]
      %v911 = vld [vmem:[%s2] sm:$0x1]
      %v913 = vlaneseq
      %v914 = vshrl.u32 %v913, 7
      %v915 = vsub.s32 0, %v914
      %v916 = vrot.slane %v911, %v915
      %v1016 = vunpack.c.l.b16 %v813
      %v1017 = vunpack.c.l.b16 %v814
      %v1018 = vunpack.c.l.b16 %v815
      %v1019 = vunpack.c.l.b16 %v816
      %v1020 = vunpack.c.l.b16 %v817
      %v1021 = vunpack.c.l.b16 %v818
      %v1022 = vunpack.c.l.b16 %v819
      %v1023 = vunpack.c.l.b16 %v820
      %v1024 = vunpack.c.l.b16 %v821
      %v1025 = vunpack.c.l.b16 %v822
      %v1026 = vunpack.c.l.b16 %v823
      %v1027 = vunpack.c.l.b16 %v824
      %v1028 = vunpack.c.l.b16 %v825
      %v1029 = vunpack.c.l.b16 %v826
      %v1030 = vunpack.c.l.b16 %v827
      %v1031 = vunpack.c.l.b16 %v828
      %v1032 = vunpack.c.l.b16 %v829
      %v1033 = vunpack.c.l.b16 %v830
      %v1034 = vunpack.c.l.b16 %v831
      %v1035 = vunpack.c.l.b16 %v832
      %v1036 = vunpack.c.l.b16 %v833
      %v1037 = vunpack.c.l.b16 %v834
      %v1038 = vunpack.c.l.b16 %v835
      %v1039 = vunpack.c.l.b16 %v836
      %v1040 = vunpack.c.l.b16 %v837
      %v1041 = vunpack.c.l.b16 %v838
      %v1042 = vunpack.c.l.b16 %v839
      %v1043 = vunpack.c.l.b16 %v840
      %v1044 = vunpack.c.l.b16 %v841
      %v1045 = vunpack.c.l.b16 %v842
      %v1046 = vunpack.c.l.b16 %v843
      %v1047 = vunpack.c.l.b16 %v844
      %v1048 = vunpack.c.l.b16 %v845
      %v1049 = vunpack.c.l.b16 %v846
      %v1050 = vunpack.c.l.b16 %v847
      %v1051 = vunpack.c.l.b16 %v848
      %v1052 = vunpack.c.l.b16 %v849
      %v1053 = vunpack.c.l.b16 %v850
      %v1054 = vunpack.c.l.b16 %v851
      %v1055 = vunpack.c.l.b16 %v852
      %v1056 = vunpack.c.l.b16 %v853
      %v1057 = vunpack.c.l.b16 %v854
      %v1058 = vunpack.c.l.b16 %v855
      %v1059 = vunpack.c.l.b16 %v856
      %v1060 = vunpack.c.l.b16 %v857
      %v1061 = vunpack.c.l.b16 %v858
      %v1062 = vunpack.c.l.b16 %v859
      %v1063 = vunpack.c.l.b16 %v860
      %v1064 = vunpack.c.l.b16 %v861
      %v1065 = vunpack.c.l.b16 %v862
      %v1066 = vunpack.c.l.b16 %v863
      %v1067 = vunpack.c.l.b16 %v864
      %v1068 = vunpack.c.l.b16 %v865
      %v1069 = vunpack.c.l.b16 %v866
      %v1070 = vunpack.c.l.b16 %v867
      %v1071 = vunpack.c.l.b16 %v868
      %v1072 = vunpack.c.l.b16 %v869
      %v1073 = vunpack.c.l.b16 %v870
      %v1074 = vunpack.c.l.b16 %v871
      %v1075 = vunpack.c.l.b16 %v872
      %v1076 = vunpack.c.l.b16 %v873
      %v1077 = vunpack.c.l.b16 %v874
      %v1078 = vunpack.c.l.b16 %v875
      %v1079 = vunpack.c.l.b16 %v876
      %v1080 = vunpack.c.l.b16 %v877
      %v1081 = vunpack.c.l.b16 %v878
      %v1082 = vunpack.c.l.b16 %v879
      %v1083 = vunpack.c.l.b16 %v880
      %v1084 = vunpack.c.l.b16 %v881
      %v1085 = vunpack.c.l.b16 %v882
      %v1086 = vunpack.c.l.b16 %v883
      %v1087 = vunpack.c.l.b16 %v884
      %v1088 = vunpack.c.l.b16 %v885
      %v1089 = vunpack.c.l.b16 %v886
      %v1090 = vunpack.c.l.b16 %v887
      %v1091 = vunpack.c.l.b16 %v888
      %v1092 = vunpack.c.l.b16 %v889
      %v1093 = vunpack.c.l.b16 %v890
      %v1094 = vunpack.c.l.b16 %v891
      %v1095 = vunpack.c.l.b16 %v892
      %v1096 = vunpack.c.l.b16 %v893
      %v1097 = vunpack.c.l.b16 %v894
      %v1098 = vunpack.c.l.b16 %v895
      %v1099 = vunpack.c.l.b16 %v896
      %v1100 = vunpack.c.l.b16 %v897
      %v1101 = vunpack.c.l.b16 %v898
      %v1102 = vunpack.c.l.b16 %v899
      %v1103 = vunpack.c.l.b16 %v900
      %v1104 = vunpack.c.l.b16 %v901
      %v1105 = vunpack.c.l.b16 %v902
      %v1106 = vunpack.c.l.b16 %v903
      %v1107 = vunpack.c.l.b16 %v904
      %v1108 = vunpack.c.l.b16 %v905
      %v1109 = vunpack.c.l.b16 %v906
      %v1110 = vunpack.c.l.b16 %v907
      %v1111 = vunpack.c.l.b16 %v908
      %v1112 = vunpack.c.l.b16 %v909
      %v1113 = vunpack.c.l.b16 %v910
      %v1114 = vpack.c.b16 %v1017, %v1016
      %v1115 = vpack.c.b16 %v1019, %v1018
      %v1116 = vpack.c.b16 %v1021, %v1020
      %v1117 = vpack.c.b16 %v1023, %v1022
      %v1118 = vpack.c.b16 %v1025, %v1024
      %v1119 = vpack.c.b16 %v1027, %v1026
      %v1120 = vpack.c.b16 %v1029, %v1028
      %v1121 = vpack.c.b16 %v1031, %v1030
      %v1122 = vpack.c.b16 %v1033, %v1032
      %v1123 = vpack.c.b16 %v1035, %v1034
      %v1124 = vpack.c.b16 %v1037, %v1036
      %v1125 = vpack.c.b16 %v1039, %v1038
      %v1126 = vpack.c.b16 %v1041, %v1040
      %v1127 = vpack.c.b16 %v1043, %v1042
      %v1128 = vpack.c.b16 %v1045, %v1044
      %v1129 = vpack.c.b16 %v1047, %v1046
      %v1130 = vpack.c.b16 %v1049, %v1048
      %v1131 = vpack.c.b16 %v1051, %v1050
      %v1132 = vpack.c.b16 %v1053, %v1052
      %v1133 = vpack.c.b16 %v1055, %v1054
      %v1134 = vpack.c.b16 %v1057, %v1056
      %v1135 = vpack.c.b16 %v1059, %v1058
      %v1136 = vpack.c.b16 %v1061, %v1060
      %v1137 = vpack.c.b16 %v1063, %v1062
      %v1138 = vpack.c.b16 %v1065, %v1064
      %v1139 = vpack.c.b16 %v1067, %v1066
      %v1140 = vpack.c.b16 %v1069, %v1068
      %v1141 = vpack.c.b16 %v1071, %v1070
      %v1142 = vpack.c.b16 %v1073, %v1072
      %v1143 = vpack.c.b16 %v1075, %v1074
      %v1144 = vpack.c.b16 %v1077, %v1076
      %v1145 = vpack.c.b16 %v1079, %v1078
      %v1146 = vpack.c.b16 %v1081, %v1080
      %v1147 = vpack.c.b16 %v1083, %v1082
      %v1148 = vpack.c.b16 %v1085, %v1084
      %v1149 = vpack.c.b16 %v1087, %v1086
      %v1150 = vpack.c.b16 %v1089, %v1088
      %v1151 = vpack.c.b16 %v1091, %v1090
      %v1152 = vpack.c.b16 %v1093, %v1092
      %v1153 = vpack.c.b16 %v1095, %v1094
      %v1154 = vpack.c.b16 %v1097, %v1096
      %v1155 = vpack.c.b16 %v1099, %v1098
      %v1156 = vpack.c.b16 %v1101, %v1100
      %v1157 = vpack.c.b16 %v1103, %v1102
      %v1158 = vpack.c.b16 %v1105, %v1104
      %v1159 = vpack.c.b16 %v1107, %v1106
      %v1160 = vpack.c.b16 %v1109, %v1108
      %v1161 = vpack.c.b16 %v1111, %v1110
      %v1162 = vpack.c.b16 %v1113, %v1112
      %vm1212 = vcmask 130048
      %v1214 = vsel %vm1212, %v770, 0
      %v1217 = vsel %vm1212, %v777, 0
      %v1220 = vsel %vm1212, %v784, 0
      %v1223 = vsel %vm1212, %v791, 0
      %v1226 = vsel %vm1212, %v798, 0
      %v1229 = vsel %vm1212, %v805, 0
      %v1232 = vsel %vm1212, %v812, 0
      %1234 = vmatprep.subr.bf16.mxu0 0
      %1235 = vmatpush1.bf16.msra.mxu0 %v1114
      %1236 = vmatprep.subr.bf16.mxu0 0
      %1237 = vmatpush1.bf16.msra.mxu0 %v1115
      %1238 = vmatprep.subr.bf16.mxu0 0
      %1239 = vmatpush1.bf16.msra.mxu0 %v1116
      %1240 = vmatprep.subr.bf16.mxu0 0
      %1241 = vmatpush1.bf16.msra.mxu0 %v1117
      %1242 = vmatprep.subr.bf16.mxu0 0
      %1243 = vmatpush1.bf16.msra.mxu0 %v1118
      %1244 = vmatprep.subr.bf16.mxu0 0
      %1245 = vmatpush1.bf16.msra.mxu0 %v1119
      %1246 = vmatprep.subr.bf16.mxu0 0
      %1247 = vmatpush1.bf16.msra.mxu0 %v1120
      %1248 = vmatprep.subr.bf16.mxu0 0
      %1249 = vmatpush1.bf16.msra.mxu0 %v1121
      %1250 = vmatprep.subr.bf16.mxu0 0
      %1251 = vmatpush1.bf16.msra.mxu0 %v1122
      %1252 = vmatprep.subr.bf16.mxu0 0
      %1253 = vmatpush1.bf16.msra.mxu0 %v1123
      %1254 = vmatprep.subr.bf16.mxu0 0
      %1255 = vmatpush1.bf16.msra.mxu0 %v1124
      %1256 = vmatprep.subr.bf16.mxu0 0
      %1257 = vmatpush1.bf16.msra.mxu0 %v1125
      %1258 = vmatprep.subr.bf16.mxu0 0
      %1259 = vmatpush1.bf16.msra.mxu0 %v1126
      %1260 = vmatprep.subr.bf16.mxu0 0
      %1261 = vmatpush1.bf16.msra.mxu0 %v1127
      %1262 = vmatprep.subr.bf16.mxu0 0
      %1263 = vmatpush1.bf16.msra.mxu0 %v1128
      %1264 = vmatprep.subr.bf16.mxu0 0
      %1265 = vmatpush1.bf16.msra.mxu0 %v1129
      %1266 = vmatprep.mubr.bf16.mxu0 %v765
      %1267 = vmatmul.mubr.bf16.gmra.mrb[0].mxu0 %v764
      %v1268 = vpop.f32.mrb[0].mxu0
      %v1269 = vadd.f32 %v916, %v1268
      %v1270 = vpop.f32.mrb[0].mxu0
      %v1271 = vpop.f32.mrb[0].mxu0
      %v1272 = vadd.f32 %v916, %v1271
      %v1273 = vpop.f32.mrb[0].mxu0
      %1274 = vmatprep.mubr.bf16.mxu0 %v772
      %1275 = vmatmul.mubr.bf16.gmra.mrb[0].mxu0 %v771
      %v1276 = vpop.f32.mrb[0].mxu0
      %v1277 = vadd.f32 %v916, %v1276
      %v1278 = vpop.f32.mrb[0].mxu0
      %v1279 = vpop.f32.mrb[0].mxu0
      %v1280 = vadd.f32 %v916, %v1279
      %v1281 = vpop.f32.mrb[0].mxu0
      %1282 = vmatprep.mubr.bf16.mxu0 %v779
      %1283 = vmatmul.mubr.bf16.gmra.mrb[0].mxu0 %v778
      %v1284 = vpop.f32.mrb[0].mxu0
      %v1285 = vadd.f32 %v916, %v1284
      %v1286 = vpop.f32.mrb[0].mxu0
      %v1287 = vpop.f32.mrb[0].mxu0
      %v1288 = vadd.f32 %v916, %v1287
      %v1289 = vpop.f32.mrb[0].mxu0
      %1290 = vmatprep.mubr.bf16.mxu0 %v786
      %1291 = vmatmul.mubr.bf16.gmra.mrb[0].mxu0 %v785
      %v1292 = vpop.f32.mrb[0].mxu0
      %v1293 = vadd.f32 %v916, %v1292
      %v1294 = vpop.f32.mrb[0].mxu0
      %v1295 = vpop.f32.mrb[0].mxu0
      %v1296 = vadd.f32 %v916, %v1295
      %v1297 = vpop.f32.mrb[0].mxu0
      %1298 = vmatprep.mubr.bf16.mxu0 %v793
      %1299 = vmatmul.mubr.bf16.gmra.mrb[0].mxu0 %v792
      %v1300 = vpop.f32.mrb[0].mxu0
      %v1301 = vadd.f32 %v916, %v1300
      %v1302 = vpop.f32.mrb[0].mxu0
      %v1303 = vpop.f32.mrb[0].mxu0
      %v1304 = vadd.f32 %v916, %v1303
      %v1305 = vpop.f32.mrb[0].mxu0
      %1306 = vmatprep.mubr.bf16.mxu0 %v800
      %1307 = vmatmul.mubr.bf16.gmra.mrb[0].mxu0 %v799
      %v1308 = vpop.f32.mrb[0].mxu0
      %v1309 = vadd.f32 %v916, %v1308
      %v1310 = vpop.f32.mrb[0].mxu0
      %v1311 = vpop.f32.mrb[0].mxu0
      %v1312 = vadd.f32 %v916, %v1311
      %v1313 = vpop.f32.mrb[0].mxu0
      %1314 = vmatprep.mubr.bf16.mxu0 %v807
      %1315 = vmatmul.mubr.bf16.gmra.mrb[0].mxu0 %v806
      %v1316 = vpop.f32.mrb[0].mxu0
      %v1317 = vadd.f32 %v916, %v1316
      %v1318 = vpop.f32.mrb[0].mxu0
      %v1319 = vpop.f32.mrb[0].mxu0
      %v1320 = vadd.f32 %v916, %v1319
      %v1321 = vpop.f32.mrb[0].mxu0
      %1322 = vdwg.mxu0
      %1323 = vmatprep.subr.bf16.mxu0 0
      %1324 = vmatpush1.bf16.msra.mxu0 %v1130
      %1325 = vmatprep.subr.bf16.mxu0 0
      %1326 = vmatpush1.bf16.msra.mxu0 %v1131
      %1327 = vmatprep.subr.bf16.mxu0 0
      %1328 = vmatpush1.bf16.msra.mxu0 %v1132
      %1329 = vmatprep.subr.bf16.mxu0 0
      %1330 = vmatpush1.bf16.msra.mxu0 %v1133
      %1331 = vmatprep.subr.bf16.mxu0 0
      %1332 = vmatpush1.bf16.msra.mxu0 %v1134
      %1333 = vmatprep.subr.bf16.mxu0 0
      %1334 = vmatpush1.bf16.msra.mxu0 %v1135
      %1335 = vmatprep.subr.bf16.mxu0 0
      %1336 = vmatpush1.bf16.msra.mxu0 %v1136
      %1337 = vmatprep.subr.bf16.mxu0 0
      %1338 = vmatpush1.bf16.msra.mxu0 %v1137
      %1339 = vmatprep.subr.bf16.mxu0 0
      %1340 = vmatpush1.bf16.msra.mxu0 %v1138
      %1341 = vmatprep.subr.bf16.mxu0 0
      %1342 = vmatpush1.bf16.msra.mxu0 %v1139
      %1343 = vmatprep.subr.bf16.mxu0 0
      %1344 = vmatpush1.bf16.msra.mxu0 %v1140
      %1345 = vmatprep.subr.bf16.mxu0 0
      %1346 = vmatpush1.bf16.msra.mxu0 %v1141
      %1347 = vmatprep.subr.bf16.mxu0 0
      %1348 = vmatpush1.bf16.msra.mxu0 %v1142
      %1349 = vmatprep.subr.bf16.mxu0 0
      %1350 = vmatpush1.bf16.msra.mxu0 %v1143
      %1351 = vmatprep.subr.bf16.mxu0 0
      %1352 = vmatpush1.bf16.msra.mxu0 %v1144
      %1353 = vmatprep.subr.bf16.mxu0 0
      %1354 = vmatpush1.bf16.msra.mxu0 %v1145
      %1355 = vmatprep.mubr.bf16.mxu0 %v767
      %1356 = vmatmul.mubr.bf16.gmra.mrb[0].mxu0 %v766
      %v1357 = vpop.f32.mrb[0].mxu0
      %v1358 = vadd.f32 %v1269, %v1357
      %v1359 = vpop.f32.mrb[0].mxu0
      %v1360 = vpop.f32.mrb[0].mxu0
      %v1361 = vadd.f32 %v1272, %v1360
      %v1362 = vpop.f32.mrb[0].mxu0
      %1363 = vmatprep.mubr.bf16.mxu0 %v774
      %1364 = vmatmul.mubr.bf16.gmra.mrb[0].mxu0 %v773
      %v1365 = vpop.f32.mrb[0].mxu0
      %v1366 = vadd.f32 %v1277, %v1365
      %v1367 = vpop.f32.mrb[0].mxu0
      %v1368 = vpop.f32.mrb[0].mxu0
      %v1369 = vadd.f32 %v1280, %v1368
      %v1370 = vpop.f32.mrb[0].mxu0
      %1371 = vmatprep.mubr.bf16.mxu0 %v781
      %1372 = vmatmul.mubr.bf16.gmra.mrb[0].mxu0 %v780
      %v1373 = vpop.f32.mrb[0].mxu0
      %v1374 = vadd.f32 %v1285, %v1373
      %v1375 = vpop.f32.mrb[0].mxu0
      %v1376 = vpop.f32.mrb[0].mxu0
      %v1377 = vadd.f32 %v1288, %v1376
      %v1378 = vpop.f32.mrb[0].mxu0
      %1379 = vmatprep.mubr.bf16.mxu0 %v788
      %1380 = vmatmul.mubr.bf16.gmra.mrb[0].mxu0 %v787
      %v1381 = vpop.f32.mrb[0].mxu0
      %v1382 = vadd.f32 %v1293, %v1381
      %v1383 = vpop.f32.mrb[0].mxu0
      %v1384 = vpop.f32.mrb[0].mxu0
      %v1385 = vadd.f32 %v1296, %v1384
      %v1386 = vpop.f32.mrb[0].mxu0
      %1387 = vmatprep.mubr.bf16.mxu0 %v795
      %1388 = vmatmul.mubr.bf16.gmra.mrb[0].mxu0 %v794
      %v1389 = vpop.f32.mrb[0].mxu0
      %v1390 = vadd.f32 %v1301, %v1389
      %v1391 = vpop.f32.mrb[0].mxu0
      %v1392 = vpop.f32.mrb[0].mxu0
      %v1393 = vadd.f32 %v1304, %v1392
      %v1394 = vpop.f32.mrb[0].mxu0
      %1395 = vmatprep.mubr.bf16.mxu0 %v802
      %1396 = vmatmul.mubr.bf16.gmra.mrb[0].mxu0 %v801
      %v1397 = vpop.f32.mrb[0].mxu0
      %v1398 = vadd.f32 %v1309, %v1397
      %v1399 = vpop.f32.mrb[0].mxu0
      %v1400 = vpop.f32.mrb[0].mxu0
      %v1401 = vadd.f32 %v1312, %v1400
      %v1402 = vpop.f32.mrb[0].mxu0
      %1403 = vmatprep.mubr.bf16.mxu0 %v809
      %1404 = vmatmul.mubr.bf16.gmra.mrb[0].mxu0 %v808
      %v1405 = vpop.f32.mrb[0].mxu0
      %v1406 = vadd.f32 %v1317, %v1405
      %v1407 = vpop.f32.mrb[0].mxu0
      %v1408 = vpop.f32.mrb[0].mxu0
      %v1409 = vadd.f32 %v1320, %v1408
      %v1410 = vpop.f32.mrb[0].mxu0
      %1411 = vdwg.mxu0
      %1412 = vmatprep.subr.bf16.mxu0 0
      %1413 = vmatpush1.bf16.msra.mxu0 %v1146
      %1414 = vmatprep.subr.bf16.mxu0 0
      %1415 = vmatpush1.bf16.msra.mxu0 %v1147
      %1416 = vmatprep.subr.bf16.mxu0 0
      %1417 = vmatpush1.bf16.msra.mxu0 %v1148
      %1418 = vmatprep.subr.bf16.mxu0 0
      %1419 = vmatpush1.bf16.msra.mxu0 %v1149
      %1420 = vmatprep.subr.bf16.mxu0 0
      %1421 = vmatpush1.bf16.msra.mxu0 %v1150
      %1422 = vmatprep.subr.bf16.mxu0 0
      %1423 = vmatpush1.bf16.msra.mxu0 %v1151
      %1424 = vmatprep.subr.bf16.mxu0 0
      %1425 = vmatpush1.bf16.msra.mxu0 %v1152
      %1426 = vmatprep.subr.bf16.mxu0 0
      %1427 = vmatpush1.bf16.msra.mxu0 %v1153
      %1428 = vmatprep.subr.bf16.mxu0 0
      %1429 = vmatpush1.bf16.msra.mxu0 %v1154
      %1430 = vmatprep.subr.bf16.mxu0 0
      %1431 = vmatpush1.bf16.msra.mxu0 %v1155
      %1432 = vmatprep.subr.bf16.mxu0 0
      %1433 = vmatpush1.bf16.msra.mxu0 %v1156
      %1434 = vmatprep.subr.bf16.mxu0 0
      %1435 = vmatpush1.bf16.msra.mxu0 %v1157
      %1436 = vmatprep.subr.bf16.mxu0 0
      %1437 = vmatpush1.bf16.msra.mxu0 %v1158
      %1438 = vmatprep.subr.bf16.mxu0 0
      %1439 = vmatpush1.bf16.msra.mxu0 %v1159
      %1440 = vmatprep.subr.bf16.mxu0 0
      %1441 = vmatpush1.bf16.msra.mxu0 %v1160
      %1442 = vmatprep.subr.bf16.mxu0 0
      %1443 = vmatpush1.bf16.msra.mxu0 %v1161
      %1444 = vmatprep.mubr.bf16.mxu0 %v769
      %1445 = vmatmul.mubr.bf16.gmra.mrb[0].mxu0 %v768
      %v1446 = vpop.f32.mrb[0].mxu0
      %v1447 = vadd.f32 %v1358, %v1446
      %v1448 = vpop.f32.mrb[0].mxu0
      %v1449 = vpop.f32.mrb[0].mxu0
      %v1450 = vadd.f32 %v1361, %v1449
      %v1451 = vpop.f32.mrb[0].mxu0
      %1452 = vmatprep.mubr.bf16.mxu0 %v776
      %1453 = vmatmul.mubr.bf16.gmra.mrb[0].mxu0 %v775
      %v1454 = vpop.f32.mrb[0].mxu0
      %v1455 = vadd.f32 %v1366, %v1454
      %v1456 = vpop.f32.mrb[0].mxu0
      %v1457 = vpop.f32.mrb[0].mxu0
      %v1458 = vadd.f32 %v1369, %v1457
      %v1459 = vpop.f32.mrb[0].mxu0
      %1460 = vmatprep.mubr.bf16.mxu0 %v783
      %1461 = vmatmul.mubr.bf16.gmra.mrb[0].mxu0 %v782
      %v1462 = vpop.f32.mrb[0].mxu0
      %v1463 = vadd.f32 %v1374, %v1462
      %v1464 = vpop.f32.mrb[0].mxu0
      %v1465 = vpop.f32.mrb[0].mxu0
      %v1466 = vadd.f32 %v1377, %v1465
      %v1467 = vpop.f32.mrb[0].mxu0
      %1468 = vmatprep.mubr.bf16.mxu0 %v790
      %1469 = vmatmul.mubr.bf16.gmra.mrb[0].mxu0 %v789
      %v1470 = vpop.f32.mrb[0].mxu0
      %v1471 = vadd.f32 %v1382, %v1470
      %v1472 = vpop.f32.mrb[0].mxu0
      %v1473 = vpop.f32.mrb[0].mxu0
      %v1474 = vadd.f32 %v1385, %v1473
      %v1475 = vpop.f32.mrb[0].mxu0
      %1476 = vmatprep.mubr.bf16.mxu0 %v797
      %1477 = vmatmul.mubr.bf16.gmra.mrb[0].mxu0 %v796
      %v1478 = vpop.f32.mrb[0].mxu0
      %v1479 = vadd.f32 %v1390, %v1478
      %v1480 = vpop.f32.mrb[0].mxu0
      %v1481 = vpop.f32.mrb[0].mxu0
      %v1482 = vadd.f32 %v1393, %v1481
      %v1483 = vpop.f32.mrb[0].mxu0
      %1484 = vmatprep.mubr.bf16.mxu0 %v804
      %1485 = vmatmul.mubr.bf16.gmra.mrb[0].mxu0 %v803
      %v1486 = vpop.f32.mrb[0].mxu0
      %v1487 = vadd.f32 %v1398, %v1486
      %v1488 = vpop.f32.mrb[0].mxu0
      %v1489 = vpop.f32.mrb[0].mxu0
      %v1490 = vadd.f32 %v1401, %v1489
      %v1491 = vpop.f32.mrb[0].mxu0
      %1492 = vmatprep.mubr.bf16.mxu0 %v811
      %1493 = vmatmul.mubr.bf16.gmra.mrb[0].mxu0 %v810
      %v1494 = vpop.f32.mrb[0].mxu0
      %v1495 = vadd.f32 %v1406, %v1494
      %v1496 = vpop.f32.mrb[0].mxu0
      %v1497 = vpop.f32.mrb[0].mxu0
      %v1498 = vadd.f32 %v1409, %v1497
      %v1499 = vpop.f32.mrb[0].mxu0
      %1500 = vdwg.mxu0
      %1501 = vmatprep.subr.bf16.mxu0 0
      %1502 = vmatpush1.bf16.msra.mxu0 %v1162
      %1503 = vmatprep.subr.bf16.mxu0 0
      %1504 = vmatpush1.bf16.msra.mxu0 0
      %1505 = vmatprep.subr.bf16.mxu0 0
      %1506 = vmatpush1.bf16.msra.mxu0 0
      %1507 = vmatprep.subr.bf16.mxu0 0
      %1508 = vmatpush1.bf16.msra.mxu0 0
      %1509 = vmatprep.subr.bf16.mxu0 0
      %1510 = vmatpush1.bf16.msra.mxu0 0
      %1511 = vmatprep.subr.bf16.mxu0 0
      %1512 = vmatpush1.bf16.msra.mxu0 0
      %1513 = vmatprep.subr.bf16.mxu0 0
      %1514 = vmatpush1.bf16.msra.mxu0 0
      %1515 = vmatprep.subr.bf16.mxu0 0
      %1516 = vmatpush1.bf16.msra.mxu0 0
      %1517 = vmatprep.subr.bf16.mxu0 0
      %1518 = vmatpush1.bf16.msra.mxu0 0
      %1519 = vmatprep.subr.bf16.mxu0 0
      %1520 = vmatpush1.bf16.msra.mxu0 0
      %1521 = vmatprep.subr.bf16.mxu0 0
      %1522 = vmatpush1.bf16.msra.mxu0 0
      %1523 = vmatprep.subr.bf16.mxu0 0
      %1524 = vmatpush1.bf16.msra.mxu0 0
      %1525 = vmatprep.subr.bf16.mxu0 0
      %1526 = vmatpush1.bf16.msra.mxu0 0
      %1527 = vmatprep.subr.bf16.mxu0 0
      %1528 = vmatpush1.bf16.msra.mxu0 0
      %1529 = vmatprep.subr.bf16.mxu0 0
      %1530 = vmatpush1.bf16.msra.mxu0 0
      %1531 = vmatprep.subr.bf16.mxu0 0
      %1532 = vmatpush1.bf16.msra.mxu0 0
      %1533 = vmatprep.mubr.bf16.mxu0 0
      %1534 = vmatmul.mubr.bf16.gmra.mrb[0].mxu0 %v1214
      %v1535 = vpop.f32.mrb[0].mxu0
      %v1536 = vadd.f32 %v1447, %v1535
      %v1537 = vpop.f32.mrb[0].mxu0
      %v1538 = vpop.f32.mrb[0].mxu0
      %v1539 = vadd.f32 %v1450, %v1538
      %v1540 = vpop.f32.mrb[0].mxu0
      %1541 = vmatprep.mubr.bf16.mxu0 0
      %1542 = vmatmul.mubr.bf16.gmra.mrb[0].mxu0 %v1217
      %v1543 = vpop.f32.mrb[0].mxu0
      %v1544 = vadd.f32 %v1455, %v1543
      %v1545 = vpop.f32.mrb[0].mxu0
      %v1546 = vpop.f32.mrb[0].mxu0
      %v1547 = vadd.f32 %v1458, %v1546
      %v1548 = vpop.f32.mrb[0].mxu0
      %1549 = vmatprep.mubr.bf16.mxu0 0
      %1550 = vmatmul.mubr.bf16.gmra.mrb[0].mxu0 %v1220
      %v1551 = vpop.f32.mrb[0].mxu0
      %v1552 = vadd.f32 %v1463, %v1551
      %v1553 = vpop.f32.mrb[0].mxu0
      %v1554 = vpop.f32.mrb[0].mxu0
      %v1555 = vadd.f32 %v1466, %v1554
      %v1556 = vpop.f32.mrb[0].mxu0
      %1557 = vmatprep.mubr.bf16.mxu0 0
      %1558 = vmatmul.mubr.bf16.gmra.mrb[0].mxu0 %v1223
      %v1559 = vpop.f32.mrb[0].mxu0
      %v1560 = vadd.f32 %v1471, %v1559
      %v1561 = vpop.f32.mrb[0].mxu0
      %v1562 = vpop.f32.mrb[0].mxu0
      %v1563 = vadd.f32 %v1474, %v1562
      %v1564 = vpop.f32.mrb[0].mxu0
      %1565 = vmatprep.mubr.bf16.mxu0 0
      %1566 = vmatmul.mubr.bf16.gmra.mrb[0].mxu0 %v1226
      %v1567 = vpop.f32.mrb[0].mxu0
      %v1568 = vadd.f32 %v1479, %v1567
      %v1569 = vpop.f32.mrb[0].mxu0
      %v1570 = vpop.f32.mrb[0].mxu0
      %v1571 = vadd.f32 %v1482, %v1570
      %v1572 = vpop.f32.mrb[0].mxu0
      %1573 = vmatprep.mubr.bf16.mxu0 0
      %1574 = vmatmul.mubr.bf16.gmra.mrb[0].mxu0 %v1229
      %v1575 = vpop.f32.mrb[0].mxu0
      %v1576 = vadd.f32 %v1487, %v1575
      %v1577 = vpop.f32.mrb[0].mxu0
      %v1578 = vpop.f32.mrb[0].mxu0
      %v1579 = vadd.f32 %v1490, %v1578
      %v1580 = vpop.f32.mrb[0].mxu0
      %1581 = vmatprep.mubr.bf16.mxu0 0
      %1582 = vmatmul.mubr.bf16.gmra.mrb[0].mxu0 %v1232
      %v1583 = vpop.f32.mrb[0].mxu0
      %v1584 = vadd.f32 %v1495, %v1583
      %v1585 = vpop.f32.mrb[0].mxu0
      %v1586 = vpop.f32.mrb[0].mxu0
      %v1587 = vadd.f32 %v1498, %v1586
      %v1588 = vpop.f32.mrb[0].mxu0
      %1589 = vdwg.mxu0
      %v1590 = vmax.f32 %v1536, 0.0
      %v1591 = vmax.f32 %v1539, 0.0
      %v1592 = vmax.f32 %v1544, 0.0
      %v1593 = vmax.f32 %v1547, 0.0
      %v1594 = vmax.f32 %v1552, 0.0
      %v1595 = vmax.f32 %v1555, 0.0
      %v1596 = vmax.f32 %v1560, 0.0
      %v1597 = vmax.f32 %v1563, 0.0
      %v1598 = vmax.f32 %v1568, 0.0
      %v1599 = vmax.f32 %v1571, 0.0
      %v1600 = vmax.f32 %v1576, 0.0
      %v1601 = vmax.f32 %v1579, 0.0
      %v1602 = vmax.f32 %v1584, 0.0
      %v1603 = vmax.f32 %v1587, 0.0
      %v1604 = vpack.c.bf16 %v1591, %v1590
      %v1605 = vpack.c.bf16 %v1593, %v1592
      %v1606 = vpack.c.bf16 %v1595, %v1594
      %v1607 = vpack.c.bf16 %v1597, %v1596
      %v1608 = vpack.c.bf16 %v1599, %v1598
      %v1609 = vpack.c.bf16 %v1601, %v1600
      %v1610 = vpack.c.bf16 %v1603, %v1602
      %v1611 = vld [vmem:[%s3] sm:$0xf]
      %v1612 = vld [vmem:[%s3 + $0x4] sm:$0xf]
      %v1613 = vld [vmem:[%s3 + $0x8] sm:$0xf]
      %v1614 = vld [vmem:[%s3 + $0xc] sm:$0xf]
      %v1615 = vld [vmem:[%s3 + $0x10] sm:$0xf]
      %v1616 = vld [vmem:[%s3 + $0x14] sm:$0xf]
      %v1617 = vld [vmem:[%s3 + $0x18] sm:$0xf]
      %v1618 = vld [vmem:[%s3 + $0x1c] sm:$0xf]
      %v1619 = vld [vmem:[%s3 + $0x20] sm:$0xf]
      %v1620 = vld [vmem:[%s3 + $0x24] sm:$0xf]
      %v1621 = vld [vmem:[%s3 + $0x28] sm:$0xf]
      %v1622 = vld [vmem:[%s3 + $0x2c] sm:$0xf]
      %v1623 = vld [vmem:[%s3 + $0x30] sm:$0xf]
      %v1624 = vld [vmem:[%s3 + $0x34] sm:$0xf]
      %v1625 = vld [vmem:[%s3 + $0x38] sm:$0xf]
      %v1626 = vld [vmem:[%s3 + $0x3c] sm:$0xf]
      %v1627 = vld [vmem:[%s4] sm:$0x1]
      %v1629 = vlaneseq
      %v1630 = vshrl.u32 %v1629, 7
      %v1631 = vsub.s32 0, %v1630
      %v1632 = vrot.slane %v1627, %v1631
      %v1650 = vunpack.c.l.b16 %v1611
      %v1651 = vunpack.c.l.b16 %v1612
      %v1652 = vunpack.c.l.b16 %v1613
      %v1653 = vunpack.c.l.b16 %v1614
      %v1654 = vunpack.c.l.b16 %v1615
      %v1655 = vunpack.c.l.b16 %v1616
      %v1656 = vunpack.c.l.b16 %v1617
      %v1657 = vunpack.c.l.b16 %v1618
      %v1658 = vunpack.c.l.b16 %v1619
      %v1659 = vunpack.c.l.b16 %v1620
      %v1660 = vunpack.c.l.b16 %v1621
      %v1661 = vunpack.c.l.b16 %v1622
      %v1662 = vunpack.c.l.b16 %v1623
      %v1663 = vunpack.c.l.b16 %v1624
      %v1664 = vunpack.c.l.b16 %v1625
      %v1665 = vunpack.c.l.b16 %v1626
      %v1666 = vpack.c.b16 %v1651, %v1650
      %v1667 = vpack.c.b16 %v1653, %v1652
      %v1668 = vpack.c.b16 %v1655, %v1654
      %v1669 = vpack.c.b16 %v1657, %v1656
      %v1670 = vpack.c.b16 %v1659, %v1658
      %v1671 = vpack.c.b16 %v1661, %v1660
      %v1672 = vpack.c.b16 %v1663, %v1662
      %v1673 = vpack.c.b16 %v1665, %v1664
      %1682 = vmatprep.subr.bf16.mxu0 0
      %1683 = vmatpush1.bf16.msra.mxu0 %v1666
      %1684 = vmatprep.subr.bf16.mxu0 0
      %1685 = vmatpush1.bf16.msra.mxu0 %v1667
      %1686 = vmatprep.subr.bf16.mxu0 0
      %1687 = vmatpush1.bf16.msra.mxu0 %v1668
      %1688 = vmatprep.subr.bf16.mxu0 0
      %1689 = vmatpush1.bf16.msra.mxu0 %v1669
      %1690 = vmatprep.subr.bf16.mxu0 0
      %1691 = vmatpush1.bf16.msra.mxu0 %v1670
      %1692 = vmatprep.subr.bf16.mxu0 0
      %1693 = vmatpush1.bf16.msra.mxu0 %v1671
      %1694 = vmatprep.subr.bf16.mxu0 0
      %1695 = vmatpush1.bf16.msra.mxu0 %v1672
      %1696 = vmatprep.subr.bf16.mxu0 0
      %1697 = vmatpush1.bf16.msra.mxu0 %v1673
      %1698 = vmatprep.subr.bf16.mxu0 0
      %1699 = vmatpush1.bf16.msra.mxu0 0
      %1700 = vmatprep.subr.bf16.mxu0 0
      %1701 = vmatpush1.bf16.msra.mxu0 0
      %1702 = vmatprep.subr.bf16.mxu0 0
      %1703 = vmatpush1.bf16.msra.mxu0 0
      %1704 = vmatprep.subr.bf16.mxu0 0
      %1705 = vmatpush1.bf16.msra.mxu0 0
      %1706 = vmatprep.subr.bf16.mxu0 0
      %1707 = vmatpush1.bf16.msra.mxu0 0
      %1708 = vmatprep.subr.bf16.mxu0 0
      %1709 = vmatpush1.bf16.msra.mxu0 0
      %1710 = vmatprep.subr.bf16.mxu0 0
      %1711 = vmatpush1.bf16.msra.mxu0 0
      %1712 = vmatprep.subr.bf16.mxu0 0
      %1713 = vmatpush1.bf16.msra.mxu0 0
      %1714 = vmatprep.mubr.bf16.mxu0 0
      %1715 = vmatmul.mubr.bf16.gmra.mrb[0].mxu0 %v1604
      %v1716 = vpop.f32.mrb[0].mxu0
      %v1717 = vadd.f32 %v1632, %v1716
      %v1718 = vpop.f32.mrb[0].mxu0
      %v1719 = vpop.f32.mrb[0].mxu0
      %v1720 = vadd.f32 %v1632, %v1719
      %v1721 = vpop.f32.mrb[0].mxu0
      %1722 = vmatprep.mubr.bf16.mxu0 0
      %1723 = vmatmul.mubr.bf16.gmra.mrb[0].mxu0 %v1605
      %v1724 = vpop.f32.mrb[0].mxu0
      %v1725 = vadd.f32 %v1632, %v1724
      %v1726 = vpop.f32.mrb[0].mxu0
      %v1727 = vpop.f32.mrb[0].mxu0
      %v1728 = vadd.f32 %v1632, %v1727
      %v1729 = vpop.f32.mrb[0].mxu0
      %1730 = vmatprep.mubr.bf16.mxu0 0
      %1731 = vmatmul.mubr.bf16.gmra.mrb[0].mxu0 %v1606
      %v1732 = vpop.f32.mrb[0].mxu0
      %v1733 = vadd.f32 %v1632, %v1732
      %v1734 = vpop.f32.mrb[0].mxu0
      %v1735 = vpop.f32.mrb[0].mxu0
      %v1736 = vadd.f32 %v1632, %v1735
      %v1737 = vpop.f32.mrb[0].mxu0
      %1738 = vmatprep.mubr.bf16.mxu0 0
      %1739 = vmatmul.mubr.bf16.gmra.mrb[0].mxu0 %v1607
      %v1740 = vpop.f32.mrb[0].mxu0
      %v1741 = vadd.f32 %v1632, %v1740
      %v1742 = vpop.f32.mrb[0].mxu0
      %v1743 = vpop.f32.mrb[0].mxu0
      %v1744 = vadd.f32 %v1632, %v1743
      %v1745 = vpop.f32.mrb[0].mxu0
      %1746 = vmatprep.mubr.bf16.mxu0 0
      %1747 = vmatmul.mubr.bf16.gmra.mrb[0].mxu0 %v1608
      %v1748 = vpop.f32.mrb[0].mxu0
      %v1749 = vadd.f32 %v1632, %v1748
      %v1750 = vpop.f32.mrb[0].mxu0
      %v1751 = vpop.f32.mrb[0].mxu0
      %v1752 = vadd.f32 %v1632, %v1751
      %v1753 = vpop.f32.mrb[0].mxu0
      %1754 = vmatprep.mubr.bf16.mxu0 0
      %1755 = vmatmul.mubr.bf16.gmra.mrb[0].mxu0 %v1609
      %v1756 = vpop.f32.mrb[0].mxu0
      %v1757 = vadd.f32 %v1632, %v1756
      %v1758 = vpop.f32.mrb[0].mxu0
      %v1759 = vpop.f32.mrb[0].mxu0
      %v1760 = vadd.f32 %v1632, %v1759
      %v1761 = vpop.f32.mrb[0].mxu0
      %1762 = vmatprep.mubr.bf16.mxu0 0
      %1763 = vmatmul.mubr.bf16.gmra.mrb[0].mxu0 %v1610
      %v1764 = vpop.f32.mrb[0].mxu0
      %v1765 = vadd.f32 %v1632, %v1764
      %v1766 = vpop.f32.mrb[0].mxu0
      %v1767 = vpop.f32.mrb[0].mxu0
      %v1768 = vadd.f32 %v1632, %v1767
      %v1769 = vpop.f32.mrb[0].mxu0
      %1770 = vdwg.mxu0
      %v1771 = vmax.f32 %v1717, 0.0
      %v1772 = vmax.f32 %v1720, 0.0
      %v1773 = vmax.f32 %v1725, 0.0
      %v1774 = vmax.f32 %v1728, 0.0
      %v1775 = vmax.f32 %v1733, 0.0
      %v1776 = vmax.f32 %v1736, 0.0
      %v1777 = vmax.f32 %v1741, 0.0
      %v1778 = vmax.f32 %v1744, 0.0
      %v1779 = vmax.f32 %v1749, 0.0
      %v1780 = vmax.f32 %v1752, 0.0
      %v1781 = vmax.f32 %v1757, 0.0
      %v1782 = vmax.f32 %v1760, 0.0
      %v1783 = vmax.f32 %v1765, 0.0
      %v1784 = vmax.f32 %v1768, 0.0
      %v1785 = vpack.c.bf16 %v1772, %v1771
      %v1786 = vpack.c.bf16 %v1774, %v1773
      %v1787 = vpack.c.bf16 %v1776, %v1775
      %v1788 = vpack.c.bf16 %v1778, %v1777
      %v1789 = vpack.c.bf16 %v1780, %v1779
      %v1790 = vpack.c.bf16 %v1782, %v1781
      %v1791 = vpack.c.bf16 %v1784, %v1783
      %v1792 = vld [vmem:[%s5] sm:$0xf]
      %v1793 = vld [vmem:[%s5 + $0x4] sm:$0xf]
      %v1794 = vld [vmem:[%s5 + $0x8] sm:$0xf]
      %v1795 = vld [vmem:[%s5 + $0xc] sm:$0xf]
      %v1796 = vld [vmem:[%s5 + $0x10] sm:$0xf]
      %v1797 = vld [vmem:[%s5 + $0x14] sm:$0xf]
      %v1798 = vld [vmem:[%s5 + $0x18] sm:$0xf]
      %v1799 = vld [vmem:[%s5 + $0x1c] sm:$0xf]
      %v1800 = vld [vmem:[%s6] sm:$0x1]
      %v1802 = vlaneseq
      %v1803 = vshrl.u32 %v1802, 7
      %v1804 = vsub.s32 0, %v1803
      %v1805 = vrot.slane %v1800, %v1804
      %v1815 = vunpack.c.l.b16 %v1792
      %v1816 = vunpack.c.l.b16 %v1793
      %v1817 = vunpack.c.l.b16 %v1794
      %v1818 = vunpack.c.l.b16 %v1795
      %v1819 = vunpack.c.l.b16 %v1796
      %v1820 = vunpack.c.l.b16 %v1797
      %v1821 = vunpack.c.l.b16 %v1798
      %v1822 = vunpack.c.l.b16 %v1799
      %v1823 = vpack.c.b16 %v1816, %v1815
      %v1824 = vpack.c.b16 %v1818, %v1817
      %v1825 = vpack.c.b16 %v1820, %v1819
      %v1826 = vpack.c.b16 %v1822, %v1821
      %vm1831 = vcmask 523264
      %v1833 = vsel %vm1831, %v1785, 0
      %v1836 = vsel %vm1831, %v1786, 0
      %v1839 = vsel %vm1831, %v1787, 0
      %v1842 = vsel %vm1831, %v1788, 0
      %v1845 = vsel %vm1831, %v1789, 0
      %v1848 = vsel %vm1831, %v1790, 0
      %v1851 = vsel %vm1831, %v1791, 0
      %1853 = vmatprep.subr.bf16.mxu0 0
      %1854 = vmatpush1.bf16.msra.mxu0 %v1823
      %1855 = vmatprep.subr.bf16.mxu0 0
      %1856 = vmatpush1.bf16.msra.mxu0 %v1824
      %1857 = vmatprep.subr.bf16.mxu0 0
      %1858 = vmatpush1.bf16.msra.mxu0 %v1825
      %1859 = vmatprep.subr.bf16.mxu0 0
      %1860 = vmatpush1.bf16.msra.mxu0 %v1826
      %1861 = vmatprep.subr.bf16.mxu0 0
      %1862 = vmatpush1.bf16.msra.mxu0 0
      %1863 = vmatprep.subr.bf16.mxu0 0
      %1864 = vmatpush1.bf16.msra.mxu0 0
      %1865 = vmatprep.subr.bf16.mxu0 0
      %1866 = vmatpush1.bf16.msra.mxu0 0
      %1867 = vmatprep.subr.bf16.mxu0 0
      %1868 = vmatpush1.bf16.msra.mxu0 0
      %1869 = vmatprep.subr.bf16.mxu0 0
      %1870 = vmatpush1.bf16.msra.mxu0 0
      %1871 = vmatprep.subr.bf16.mxu0 0
      %1872 = vmatpush1.bf16.msra.mxu0 0
      %1873 = vmatprep.subr.bf16.mxu0 0
      %1874 = vmatpush1.bf16.msra.mxu0 0
      %1875 = vmatprep.subr.bf16.mxu0 0
      %1876 = vmatpush1.bf16.msra.mxu0 0
      %1877 = vmatprep.subr.bf16.mxu0 0
      %1878 = vmatpush1.bf16.msra.mxu0 0
      %1879 = vmatprep.subr.bf16.mxu0 0
      %1880 = vmatpush1.bf16.msra.mxu0 0
      %1881 = vmatprep.subr.bf16.mxu0 0
      %1882 = vmatpush1.bf16.msra.mxu0 0
      %1883 = vmatprep.subr.bf16.mxu0 0
      %1884 = vmatpush1.bf16.msra.mxu0 0
      %1885 = vmatprep.mubr.bf16.mxu0 0
      %1886 = vmatmul.mubr.bf16.gmra.mrb[0].mxu0 %v1833
      %v1887 = vpop.f32.mrb[0].mxu0
      %v1888 = vadd.f32 %v1805, %v1887
      %v1889 = vpop.f32.mrb[0].mxu0
      %v1890 = vpop.f32.mrb[0].mxu0
      %v1891 = vadd.f32 %v1805, %v1890
      %v1892 = vpop.f32.mrb[0].mxu0
      %1893 = vmatprep.mubr.bf16.mxu0 0
      %1894 = vmatmul.mubr.bf16.gmra.mrb[0].mxu0 %v1836
      %v1895 = vpop.f32.mrb[0].mxu0
      %v1896 = vadd.f32 %v1805, %v1895
      %v1897 = vpop.f32.mrb[0].mxu0
      %v1898 = vpop.f32.mrb[0].mxu0
      %v1899 = vadd.f32 %v1805, %v1898
      %v1900 = vpop.f32.mrb[0].mxu0
      %1901 = vmatprep.mubr.bf16.mxu0 0
      %1902 = vmatmul.mubr.bf16.gmra.mrb[0].mxu0 %v1839
      %v1903 = vpop.f32.mrb[0].mxu0
      %v1904 = vadd.f32 %v1805, %v1903
      %v1905 = vpop.f32.mrb[0].mxu0
      %v1906 = vpop.f32.mrb[0].mxu0
      %v1907 = vadd.f32 %v1805, %v1906
      %v1908 = vpop.f32.mrb[0].mxu0
      %1909 = vmatprep.mubr.bf16.mxu0 0
      %1910 = vmatmul.mubr.bf16.gmra.mrb[0].mxu0 %v1842
      %v1911 = vpop.f32.mrb[0].mxu0
      %v1912 = vadd.f32 %v1805, %v1911
      %v1913 = vpop.f32.mrb[0].mxu0
      %v1914 = vpop.f32.mrb[0].mxu0
      %v1915 = vadd.f32 %v1805, %v1914
      %v1916 = vpop.f32.mrb[0].mxu0
      %1917 = vmatprep.mubr.bf16.mxu0 0
      %1918 = vmatmul.mubr.bf16.gmra.mrb[0].mxu0 %v1845
      %v1919 = vpop.f32.mrb[0].mxu0
      %v1920 = vadd.f32 %v1805, %v1919
      %v1921 = vpop.f32.mrb[0].mxu0
      %v1922 = vpop.f32.mrb[0].mxu0
      %v1923 = vadd.f32 %v1805, %v1922
      %v1924 = vpop.f32.mrb[0].mxu0
      %1925 = vmatprep.mubr.bf16.mxu0 0
      %1926 = vmatmul.mubr.bf16.gmra.mrb[0].mxu0 %v1848
      %v1927 = vpop.f32.mrb[0].mxu0
      %v1928 = vadd.f32 %v1805, %v1927
      %v1929 = vpop.f32.mrb[0].mxu0
      %v1930 = vpop.f32.mrb[0].mxu0
      %v1931 = vadd.f32 %v1805, %v1930
      %v1932 = vpop.f32.mrb[0].mxu0
      %1933 = vmatprep.mubr.bf16.mxu0 0
      %1934 = vmatmul.mubr.bf16.gmra.mrb[0].mxu0 %v1851
      %v1935 = vpop.f32.mrb[0].mxu0
      %v1936 = vadd.f32 %v1805, %v1935
      %v1937 = vpop.f32.mrb[0].mxu0
      %v1938 = vpop.f32.mrb[0].mxu0
      %v1939 = vadd.f32 %v1805, %v1938
      %v1940 = vpop.f32.mrb[0].mxu0
      %1941 = vdwg.mxu0
      %v1942 = vmax.f32 %v1888, 0.0
      %v1943 = vmax.f32 %v1891, 0.0
      %v1944 = vmax.f32 %v1896, 0.0
      %v1945 = vmax.f32 %v1899, 0.0
      %v1946 = vmax.f32 %v1904, 0.0
      %v1947 = vmax.f32 %v1907, 0.0
      %v1948 = vmax.f32 %v1912, 0.0
      %v1949 = vmax.f32 %v1915, 0.0
      %v1950 = vmax.f32 %v1920, 0.0
      %v1951 = vmax.f32 %v1923, 0.0
      %v1952 = vmax.f32 %v1928, 0.0
      %v1953 = vmax.f32 %v1931, 0.0
      %v1954 = vmax.f32 %v1936, 0.0
      %v1955 = vmax.f32 %v1939, 0.0
      %v1956 = vpack.c.bf16 %v1943, %v1942
      %v1957 = vpack.c.bf16 %v1945, %v1944
      %v1958 = vpack.c.bf16 %v1947, %v1946
      %v1959 = vpack.c.bf16 %v1949, %v1948
      %v1960 = vpack.c.bf16 %v1951, %v1950
      %v1961 = vpack.c.bf16 %v1953, %v1952
      %v1962 = vpack.c.bf16 %v1955, %v1954
      %v1963 = vld [vmem:[%s7] sm:$0xf]
      %v1964 = vld [vmem:[%s7 + $0x4] sm:$0xf]
      %v1965 = vld [vmem:[%s7 + $0x8] sm:$0xf]
      %v1966 = vld [vmem:[%s7 + $0xc] sm:$0xf]
      %v1967 = vld [vmem:[%s7 + $0x10] sm:$0x3]
      %v1968 = vld [vmem:[%s8] sm:$0x1]
      %v1970 = vlaneseq
      %v1971 = vshrl.u32 %v1970, 7
      %v1972 = vsub.s32 0, %v1971
      %v1973 = vrot.slane %v1968, %v1972
      %v1980 = vunpack.c.l.b16 %v1963
      %v1981 = vunpack.c.l.b16 %v1964
      %v1982 = vunpack.c.l.b16 %v1965
      %v1983 = vunpack.c.l.b16 %v1966
      %v1984 = vunpack.c.l.b16 %v1967
      %v1985 = vpack.c.b16 %v1981, %v1980
      %v1986 = vpack.c.b16 %v1983, %v1982
      %v1987 = vpack.c.b16 %v1984, %v1984
      %vm1990 = vcmask 293888
      %v1992 = vsel %vm1990, %v1956, 0
      %v1995 = vsel %vm1990, %v1957, 0
      %v1998 = vsel %vm1990, %v1958, 0
      %v2001 = vsel %vm1990, %v1959, 0
      %v2004 = vsel %vm1990, %v1960, 0
      %v2007 = vsel %vm1990, %v1961, 0
      %v2010 = vsel %vm1990, %v1962, 0
      %vm2012 = vcmask 1041408
      %v2014 = vsel %vm2012, %v1987, 0
      %2016 = vmatprep.subr.bf16.mxu0 0
      %2017 = vmatpush1.bf16.msra.mxu0 %v1985
      %2018 = vmatprep.subr.bf16.mxu0 0
      %2019 = vmatpush1.bf16.msra.mxu0 %v1986
      %2020 = vmatprep.subr.bf16.mxu0 0
      %2021 = vmatpush1.bf16.msra.mxu0 %v2014
      %2022 = vmatprep.subr.bf16.mxu0 0
      %2023 = vmatpush1.bf16.msra.mxu0 0
      %2024 = vmatprep.subr.bf16.mxu0 0
      %2025 = vmatpush1.bf16.msra.mxu0 0
      %2026 = vmatprep.subr.bf16.mxu0 0
      %2027 = vmatpush1.bf16.msra.mxu0 0
      %2028 = vmatprep.subr.bf16.mxu0 0
      %2029 = vmatpush1.bf16.msra.mxu0 0
      %2030 = vmatprep.subr.bf16.mxu0 0
      %2031 = vmatpush1.bf16.msra.mxu0 0
      %2032 = vmatprep.subr.bf16.mxu0 0
      %2033 = vmatpush1.bf16.msra.mxu0 0
      %2034 = vmatprep.subr.bf16.mxu0 0
      %2035 = vmatpush1.bf16.msra.mxu0 0
      %2036 = vmatprep.subr.bf16.mxu0 0
      %2037 = vmatpush1.bf16.msra.mxu0 0
      %2038 = vmatprep.subr.bf16.mxu0 0
      %2039 = vmatpush1.bf16.msra.mxu0 0
      %2040 = vmatprep.subr.bf16.mxu0 0
      %2041 = vmatpush1.bf16.msra.mxu0 0
      %2042 = vmatprep.subr.bf16.mxu0 0
      %2043 = vmatpush1.bf16.msra.mxu0 0
      %2044 = vmatprep.subr.bf16.mxu0 0
      %2045 = vmatpush1.bf16.msra.mxu0 0
      %2046 = vmatprep.subr.bf16.mxu0 0
      %2047 = vmatpush1.bf16.msra.mxu0 0
      %2048 = vmatprep.mubr.bf16.mxu0 0
      %2049 = vmatmul.mubr.bf16.gmra.mrb[0].mxu0 %v1992
      %v2050 = vpop.f32.mrb[0].mxu0
      %v2051 = vadd.f32 %v1973, %v2050
      %v2052 = vpop.f32.mrb[0].mxu0
      %v2053 = vpop.f32.mrb[0].mxu0
      %v2054 = vadd.f32 %v1973, %v2053
      %v2055 = vpop.f32.mrb[0].mxu0
      %2056 = vmatprep.mubr.bf16.mxu0 0
      %2057 = vmatmul.mubr.bf16.gmra.mrb[0].mxu0 %v1995
      %v2058 = vpop.f32.mrb[0].mxu0
      %v2059 = vadd.f32 %v1973, %v2058
      %v2060 = vpop.f32.mrb[0].mxu0
      %v2061 = vpop.f32.mrb[0].mxu0
      %v2062 = vadd.f32 %v1973, %v2061
      %v2063 = vpop.f32.mrb[0].mxu0
      %2064 = vmatprep.mubr.bf16.mxu0 0
      %2065 = vmatmul.mubr.bf16.gmra.mrb[0].mxu0 %v1998
      %v2066 = vpop.f32.mrb[0].mxu0
      %v2067 = vadd.f32 %v1973, %v2066
      %v2068 = vpop.f32.mrb[0].mxu0
      %v2069 = vpop.f32.mrb[0].mxu0
      %v2070 = vadd.f32 %v1973, %v2069
      %v2071 = vpop.f32.mrb[0].mxu0
      %2072 = vmatprep.mubr.bf16.mxu0 0
      %2073 = vmatmul.mubr.bf16.gmra.mrb[0].mxu0 %v2001
      %v2074 = vpop.f32.mrb[0].mxu0
      %v2075 = vadd.f32 %v1973, %v2074
      %v2076 = vpop.f32.mrb[0].mxu0
      %v2077 = vpop.f32.mrb[0].mxu0
      %v2078 = vadd.f32 %v1973, %v2077
      %v2079 = vpop.f32.mrb[0].mxu0
      %2080 = vmatprep.mubr.bf16.mxu0 0
      %2081 = vmatmul.mubr.bf16.gmra.mrb[0].mxu0 %v2004
      %v2082 = vpop.f32.mrb[0].mxu0
      %v2083 = vadd.f32 %v1973, %v2082
      %v2084 = vpop.f32.mrb[0].mxu0
      %v2085 = vpop.f32.mrb[0].mxu0
      %v2086 = vadd.f32 %v1973, %v2085
      %v2087 = vpop.f32.mrb[0].mxu0
      %2088 = vmatprep.mubr.bf16.mxu0 0
      %2089 = vmatmul.mubr.bf16.gmra.mrb[0].mxu0 %v2007
      %v2090 = vpop.f32.mrb[0].mxu0
      %v2091 = vadd.f32 %v1973, %v2090
      %v2092 = vpop.f32.mrb[0].mxu0
      %v2093 = vpop.f32.mrb[0].mxu0
      %v2094 = vadd.f32 %v1973, %v2093
      %v2095 = vpop.f32.mrb[0].mxu0
      %2096 = vmatprep.mubr.bf16.mxu0 0
      %2097 = vmatmul.mubr.bf16.gmra.mrb[0].mxu0 %v2010
      %v2098 = vpop.f32.mrb[0].mxu0
      %v2099 = vadd.f32 %v1973, %v2098
      %v2100 = vpop.f32.mrb[0].mxu0
      %v2101 = vpop.f32.mrb[0].mxu0
      %v2102 = vadd.f32 %v1973, %v2101
      %v2103 = vpop.f32.mrb[0].mxu0
      %2104 = vdwg.mxu0
      %v2105 = vmax.f32 %v2051, 0.0
      %v2106 = vmax.f32 %v2054, 0.0
      %v2107 = vmax.f32 %v2059, 0.0
      %v2108 = vmax.f32 %v2062, 0.0
      %v2109 = vmax.f32 %v2067, 0.0
      %v2110 = vmax.f32 %v2070, 0.0
      %v2111 = vmax.f32 %v2075, 0.0
      %v2112 = vmax.f32 %v2078, 0.0
      %v2113 = vmax.f32 %v2083, 0.0
      %v2114 = vmax.f32 %v2086, 0.0
      %v2115 = vmax.f32 %v2091, 0.0
      %v2116 = vmax.f32 %v2094, 0.0
      %v2117 = vmax.f32 %v2099, 0.0
      %v2118 = vmax.f32 %v2102, 0.0
      %v2119 = vpack.c.bf16 %v2106, %v2105
      %v2120 = vpack.c.bf16 %v2108, %v2107
      %v2121 = vpack.c.bf16 %v2110, %v2109
      %v2122 = vpack.c.bf16 %v2112, %v2111
      %v2123 = vpack.c.bf16 %v2114, %v2113
      %v2124 = vpack.c.bf16 %v2116, %v2115
      %v2125 = vpack.c.bf16 %v2118, %v2117
      %v2126 = vld [vmem:[%s9] sm:$0xf]
      %v2127 = vld [vmem:[%s9 + $0x4] sm:$0xf]
      %v2128 = vld [vmem:[%s9 + $0x8] sm:$0x1]
      %v2129 = vld [vmem:[%s10] sm:$0x1]
      %v2131 = vlaneseq
      %v2132 = vshrl.u32 %v2131, 7
      %v2133 = vsub.s32 0, %v2132
      %v2134 = vrot.slane %v2129, %v2133
      %v2139 = vunpack.c.l.b16 %v2126
      %v2140 = vunpack.c.l.b16 %v2127
      %v2141 = vunpack.c.l.b16 %v2128
      %v2142 = vpack.c.b16 %v2140, %v2139
      %v2143 = vpack.c.b16 %v2141, %v2141
      %vm2145 = vcmask 146432
      %v2147 = vsel %vm2145, %v2119, 0
      %v2150 = vsel %vm2145, %v2120, 0
      %v2153 = vsel %vm2145, %v2121, 0
      %v2156 = vsel %vm2145, %v2122, 0
      %v2159 = vsel %vm2145, %v2123, 0
      %v2162 = vsel %vm2145, %v2124, 0
      %v2165 = vsel %vm2145, %v2125, 0
      %vm2167 = vcmask 1040384
      %v2169 = vsel %vm2167, %v2143, 0
      %2171 = vmatprep.subr.bf16.mxu0 0
      %2172 = vmatpush1.bf16.msra.mxu0 %v2142
      %2173 = vmatprep.subr.bf16.mxu0 0
      %2174 = vmatpush1.bf16.msra.mxu0 %v2169
      %2175 = vmatprep.subr.bf16.mxu0 0
      %2176 = vmatpush1.bf16.msra.mxu0 0
      %2177 = vmatprep.subr.bf16.mxu0 0
      %2178 = vmatpush1.bf16.msra.mxu0 0
      %2179 = vmatprep.subr.bf16.mxu0 0
      %2180 = vmatpush1.bf16.msra.mxu0 0
      %2181 = vmatprep.subr.bf16.mxu0 0
      %2182 = vmatpush1.bf16.msra.mxu0 0
      %2183 = vmatprep.subr.bf16.mxu0 0
      %2184 = vmatpush1.bf16.msra.mxu0 0
      %2185 = vmatprep.subr.bf16.mxu0 0
      %2186 = vmatpush1.bf16.msra.mxu0 0
      %2187 = vmatprep.subr.bf16.mxu0 0
      %2188 = vmatpush1.bf16.msra.mxu0 0
      %2189 = vmatprep.subr.bf16.mxu0 0
      %2190 = vmatpush1.bf16.msra.mxu0 0
      %2191 = vmatprep.subr.bf16.mxu0 0
      %2192 = vmatpush1.bf16.msra.mxu0 0
      %2193 = vmatprep.subr.bf16.mxu0 0
      %2194 = vmatpush1.bf16.msra.mxu0 0
      %2195 = vmatprep.subr.bf16.mxu0 0
      %2196 = vmatpush1.bf16.msra.mxu0 0
      %2197 = vmatprep.subr.bf16.mxu0 0
      %2198 = vmatpush1.bf16.msra.mxu0 0
      %2199 = vmatprep.subr.bf16.mxu0 0
      %2200 = vmatpush1.bf16.msra.mxu0 0
      %2201 = vmatprep.subr.bf16.mxu0 0
      %2202 = vmatpush1.bf16.msra.mxu0 0
      %2203 = vmatprep.mubr.bf16.mxu0 0
      %2204 = vmatmul.mubr.bf16.gmra.mrb[0].mxu0 %v2147
      %v2205 = vpop.f32.mrb[0].mxu0
      %v2206 = vadd.f32 %v2134, %v2205
      %v2207 = vpop.f32.mrb[0].mxu0
      %v2208 = vpop.f32.mrb[0].mxu0
      %v2209 = vadd.f32 %v2134, %v2208
      %v2210 = vpop.f32.mrb[0].mxu0
      %2211 = vmatprep.mubr.bf16.mxu0 0
      %2212 = vmatmul.mubr.bf16.gmra.mrb[0].mxu0 %v2150
      %v2213 = vpop.f32.mrb[0].mxu0
      %v2214 = vadd.f32 %v2134, %v2213
      %v2215 = vpop.f32.mrb[0].mxu0
      %v2216 = vpop.f32.mrb[0].mxu0
      %v2217 = vadd.f32 %v2134, %v2216
      %v2218 = vpop.f32.mrb[0].mxu0
      %2219 = vmatprep.mubr.bf16.mxu0 0
      %2220 = vmatmul.mubr.bf16.gmra.mrb[0].mxu0 %v2153
      %v2221 = vpop.f32.mrb[0].mxu0
      %v2222 = vadd.f32 %v2134, %v2221
      %v2223 = vpop.f32.mrb[0].mxu0
      %v2224 = vpop.f32.mrb[0].mxu0
      %v2225 = vadd.f32 %v2134, %v2224
      %v2226 = vpop.f32.mrb[0].mxu0
      %2227 = vmatprep.mubr.bf16.mxu0 0
      %2228 = vmatmul.mubr.bf16.gmra.mrb[0].mxu0 %v2156
      %v2229 = vpop.f32.mrb[0].mxu0
      %v2230 = vadd.f32 %v2134, %v2229
      %v2231 = vpop.f32.mrb[0].mxu0
      %v2232 = vpop.f32.mrb[0].mxu0
      %v2233 = vadd.f32 %v2134, %v2232
      %v2234 = vpop.f32.mrb[0].mxu0
      %2235 = vmatprep.mubr.bf16.mxu0 0
      %2236 = vmatmul.mubr.bf16.gmra.mrb[0].mxu0 %v2159
      %v2237 = vpop.f32.mrb[0].mxu0
      %v2238 = vadd.f32 %v2134, %v2237
      %v2239 = vpop.f32.mrb[0].mxu0
      %v2240 = vpop.f32.mrb[0].mxu0
      %v2241 = vadd.f32 %v2134, %v2240
      %v2242 = vpop.f32.mrb[0].mxu0
      %2243 = vmatprep.mubr.bf16.mxu0 0
      %2244 = vmatmul.mubr.bf16.gmra.mrb[0].mxu0 %v2162
      %v2245 = vpop.f32.mrb[0].mxu0
      %v2246 = vadd.f32 %v2134, %v2245
      %v2247 = vpop.f32.mrb[0].mxu0
      %v2248 = vpop.f32.mrb[0].mxu0
      %v2249 = vadd.f32 %v2134, %v2248
      %v2250 = vpop.f32.mrb[0].mxu0
      %2251 = vmatprep.mubr.bf16.mxu0 0
      %2252 = vmatmul.mubr.bf16.gmra.mrb[0].mxu0 %v2165
      %v2253 = vpop.f32.mrb[0].mxu0
      %v2254 = vadd.f32 %v2134, %v2253
      %v2255 = vpop.f32.mrb[0].mxu0
      %v2256 = vpop.f32.mrb[0].mxu0
      %v2257 = vadd.f32 %v2134, %v2256
      %v2258 = vpop.f32.mrb[0].mxu0
      %2259 = vdwg.mxu0
      %v2260 = vpack.c.bf16 %v2209, %v2206
      %v2261 = vpack.c.bf16 %v2217, %v2214
      %v2262 = vpack.c.bf16 %v2225, %v2222
      %v2263 = vpack.c.bf16 %v2233, %v2230
      %v2264 = vpack.c.bf16 %v2241, %v2238
      %v2265 = vpack.c.bf16 %v2249, %v2246
      %v2266 = vpack.c.bf16 %v2257, %v2254
      %v2267 = vld [vmem:[%s11] sm:$0xf]
      %v2268 = vld [vmem:[%s11 + $0x4] sm:$0x1]
      %v2269 = vld [vmem:[%s12] sm:$0x1]
      %v2271 = vlaneseq
      %v2272 = vshrl.u32 %v2271, 7
      %v2273 = vsub.s32 0, %v2272
      %v2274 = vrot.slane %v2269, %v2273
      %v2278 = vunpack.c.l.b16 %v2267
      %v2279 = vunpack.c.l.b16 %v2268
      %v2280 = vpack.c.b16 %v2279, %v2278
      %vm2281 = vcmask 72704
      %v2283 = vsel %vm2281, %v2260, 0
      %v2286 = vsel %vm2281, %v2261, 0
      %v2289 = vsel %vm2281, %v2262, 0
      %v2292 = vsel %vm2281, %v2263, 0
      %v2295 = vsel %vm2281, %v2264, 0
      %v2298 = vsel %vm2281, %v2265, 0
      %v2301 = vsel %vm2281, %v2266, 0
      %vm2303 = vcmask 1043456
      %vm2304 = vcmask 1044480
      %v2305 = vsel %vm2303, 4294967295, 65535
      %v2306 = vsel %vm2304, %v2305, 0
      %v2308 = vand.u32 %v2280, %v2306
      %2310 = vmatprep.subr.bf16.mxu0 0
      %2311 = vmatpush1.bf16.msra.mxu0 %v2308
      %2312 = vmatprep.subr.bf16.mxu0 0
      %2313 = vmatpush1.bf16.msra.mxu0 0
      %2314 = vmatprep.subr.bf16.mxu0 0
      %2315 = vmatpush1.bf16.msra.mxu0 0
      %2316 = vmatprep.subr.bf16.mxu0 0
      %2317 = vmatpush1.bf16.msra.mxu0 0
      %2318 = vmatprep.subr.bf16.mxu0 0
      %2319 = vmatpush1.bf16.msra.mxu0 0
      %2320 = vmatprep.subr.bf16.mxu0 0
      %2321 = vmatpush1.bf16.msra.mxu0 0
      %2322 = vmatprep.subr.bf16.mxu0 0
      %2323 = vmatpush1.bf16.msra.mxu0 0
      %2324 = vmatprep.subr.bf16.mxu0 0
      %2325 = vmatpush1.bf16.msra.mxu0 0
      %2326 = vmatprep.subr.bf16.mxu0 0
      %2327 = vmatpush1.bf16.msra.mxu0 0
      %2328 = vmatprep.subr.bf16.mxu0 0
      %2329 = vmatpush1.bf16.msra.mxu0 0
      %2330 = vmatprep.subr.bf16.mxu0 0
      %2331 = vmatpush1.bf16.msra.mxu0 0
      %2332 = vmatprep.subr.bf16.mxu0 0
      %2333 = vmatpush1.bf16.msra.mxu0 0
      %2334 = vmatprep.subr.bf16.mxu0 0
      %2335 = vmatpush1.bf16.msra.mxu0 0
      %2336 = vmatprep.subr.bf16.mxu0 0
      %2337 = vmatpush1.bf16.msra.mxu0 0
      %2338 = vmatprep.subr.bf16.mxu0 0
      %2339 = vmatpush1.bf16.msra.mxu0 0
      %2340 = vmatprep.subr.bf16.mxu0 0
      %2341 = vmatpush1.bf16.msra.mxu0 0
      %2342 = vmatprep.mubr.bf16.mxu0 0
      %2343 = vmatmul.mubr.bf16.gmra.mrb[0].mxu0 %v2283
      %v2344 = vpop.f32.mrb[0].mxu0
      %v2345 = vadd.f32 %v2274, %v2344
      %v2346 = vpop.f32.mrb[0].mxu0
      %v2347 = vpop.f32.mrb[0].mxu0
      %v2348 = vadd.f32 %v2274, %v2347
      %v2349 = vpop.f32.mrb[0].mxu0
      %2350 = vmatprep.mubr.bf16.mxu0 0
      %2351 = vmatmul.mubr.bf16.gmra.mrb[0].mxu0 %v2286
      %v2352 = vpop.f32.mrb[0].mxu0
      %v2353 = vadd.f32 %v2274, %v2352
      %v2354 = vpop.f32.mrb[0].mxu0
      %v2355 = vpop.f32.mrb[0].mxu0
      %v2356 = vadd.f32 %v2274, %v2355
      %v2357 = vpop.f32.mrb[0].mxu0
      %2358 = vmatprep.mubr.bf16.mxu0 0
      %2359 = vmatmul.mubr.bf16.gmra.mrb[0].mxu0 %v2289
      %v2360 = vpop.f32.mrb[0].mxu0
      %v2361 = vadd.f32 %v2274, %v2360
      %v2362 = vpop.f32.mrb[0].mxu0
      %v2363 = vpop.f32.mrb[0].mxu0
      %v2364 = vadd.f32 %v2274, %v2363
      %v2365 = vpop.f32.mrb[0].mxu0
      %2366 = vmatprep.mubr.bf16.mxu0 0
      %2367 = vmatmul.mubr.bf16.gmra.mrb[0].mxu0 %v2292
      %v2368 = vpop.f32.mrb[0].mxu0
      %v2369 = vadd.f32 %v2274, %v2368
      %v2370 = vpop.f32.mrb[0].mxu0
      %v2371 = vpop.f32.mrb[0].mxu0
      %v2372 = vadd.f32 %v2274, %v2371
      %v2373 = vpop.f32.mrb[0].mxu0
      %2374 = vmatprep.mubr.bf16.mxu0 0
      %2375 = vmatmul.mubr.bf16.gmra.mrb[0].mxu0 %v2295
      %v2376 = vpop.f32.mrb[0].mxu0
      %v2377 = vadd.f32 %v2274, %v2376
      %v2378 = vpop.f32.mrb[0].mxu0
      %v2379 = vpop.f32.mrb[0].mxu0
      %v2380 = vadd.f32 %v2274, %v2379
      %v2381 = vpop.f32.mrb[0].mxu0
      %2382 = vmatprep.mubr.bf16.mxu0 0
      %2383 = vmatmul.mubr.bf16.gmra.mrb[0].mxu0 %v2298
      %v2384 = vpop.f32.mrb[0].mxu0
      %v2385 = vadd.f32 %v2274, %v2384
      %v2386 = vpop.f32.mrb[0].mxu0
      %v2387 = vpop.f32.mrb[0].mxu0
      %v2388 = vadd.f32 %v2274, %v2387
      %v2389 = vpop.f32.mrb[0].mxu0
      %2390 = vmatprep.mubr.bf16.mxu0 0
      %2391 = vmatmul.mubr.bf16.gmra.mrb[0].mxu0 %v2301
      %v2392 = vpop.f32.mrb[0].mxu0
      %v2393 = vadd.f32 %v2274, %v2392
      %v2394 = vpop.f32.mrb[0].mxu0
      %v2395 = vpop.f32.mrb[0].mxu0
      %v2396 = vadd.f32 %v2274, %v2395
      %v2397 = vpop.f32.mrb[0].mxu0
      %2398 = vdwg.mxu0
      %v2399 = vmax.f32 %v2345, 0.0
      %v2400 = vmax.f32 %v2348, 0.0
      %v2401 = vmax.f32 %v2353, 0.0
      %v2402 = vmax.f32 %v2356, 0.0
      %v2403 = vmax.f32 %v2361, 0.0
      %v2404 = vmax.f32 %v2364, 0.0
      %v2405 = vmax.f32 %v2369, 0.0
      %v2406 = vmax.f32 %v2372, 0.0
      %v2407 = vmax.f32 %v2377, 0.0
      %v2408 = vmax.f32 %v2380, 0.0
      %v2409 = vmax.f32 %v2385, 0.0
      %v2410 = vmax.f32 %v2388, 0.0
      %v2411 = vmax.f32 %v2393, 0.0
      %v2412 = vmax.f32 %v2396, 0.0
      %v2413 = vpack.c.bf16 %v2400, %v2399
      %v2414 = vpack.c.bf16 %v2402, %v2401
      %v2415 = vpack.c.bf16 %v2404, %v2403
      %v2416 = vpack.c.bf16 %v2406, %v2405
      %v2417 = vpack.c.bf16 %v2408, %v2407
      %v2418 = vpack.c.bf16 %v2410, %v2409
      %v2419 = vpack.c.bf16 %v2412, %v2411
      %v2420 = vld [vmem:[%s13] sm:$0xf]
      %v2421 = vld [vmem:[%s13 + $0x4] sm:$0xf]
      %v2422 = vld [vmem:[%s13 + $0x8] sm:$0x1]
      %v2423 = vld [vmem:[%s14] sm:$0x1]
      %v2425 = vlaneseq
      %v2426 = vshrl.u32 %v2425, 7
      %v2427 = vsub.s32 0, %v2426
      %v2428 = vrot.slane %v2423, %v2427
      %v2433 = vunpack.c.l.b16 %v2420
      %v2434 = vunpack.c.l.b16 %v2421
      %v2435 = vunpack.c.l.b16 %v2422
      %v2436 = vpack.c.b16 %v2434, %v2433
      %v2437 = vpack.c.b16 %v2435, %v2435
      %v2440 = vsel %vm2145, %v2413, 0
      %v2443 = vsel %vm2145, %v2414, 0
      %v2446 = vsel %vm2145, %v2415, 0
      %v2449 = vsel %vm2145, %v2416, 0
      %v2452 = vsel %vm2145, %v2417, 0
      %v2455 = vsel %vm2145, %v2418, 0
      %v2458 = vsel %vm2145, %v2419, 0
      %v2461 = vsel %vm2167, %v2437, 0
      %2463 = vmatprep.subr.bf16.mxu0 0
      %2464 = vmatpush1.bf16.msra.mxu0 %v2436
      %2465 = vmatprep.subr.bf16.mxu0 0
      %2466 = vmatpush1.bf16.msra.mxu0 %v2461
      %2467 = vmatprep.subr.bf16.mxu0 0
      %2468 = vmatpush1.bf16.msra.mxu0 0
      %2469 = vmatprep.subr.bf16.mxu0 0
      %2470 = vmatpush1.bf16.msra.mxu0 0
      %2471 = vmatprep.subr.bf16.mxu0 0
      %2472 = vmatpush1.bf16.msra.mxu0 0
      %2473 = vmatprep.subr.bf16.mxu0 0
      %2474 = vmatpush1.bf16.msra.mxu0 0
      %2475 = vmatprep.subr.bf16.mxu0 0
      %2476 = vmatpush1.bf16.msra.mxu0 0
      %2477 = vmatprep.subr.bf16.mxu0 0
      %2478 = vmatpush1.bf16.msra.mxu0 0
      %2479 = vmatprep.subr.bf16.mxu0 0
      %2480 = vmatpush1.bf16.msra.mxu0 0
      %2481 = vmatprep.subr.bf16.mxu0 0
      %2482 = vmatpush1.bf16.msra.mxu0 0
      %2483 = vmatprep.subr.bf16.mxu0 0
      %2484 = vmatpush1.bf16.msra.mxu0 0
      %2485 = vmatprep.subr.bf16.mxu0 0
      %2486 = vmatpush1.bf16.msra.mxu0 0
      %2487 = vmatprep.subr.bf16.mxu0 0
      %2488 = vmatpush1.bf16.msra.mxu0 0
      %2489 = vmatprep.subr.bf16.mxu0 0
      %2490 = vmatpush1.bf16.msra.mxu0 0
      %2491 = vmatprep.subr.bf16.mxu0 0
      %2492 = vmatpush1.bf16.msra.mxu0 0
      %2493 = vmatprep.subr.bf16.mxu0 0
      %2494 = vmatpush1.bf16.msra.mxu0 0
      %2495 = vmatprep.mubr.bf16.mxu0 0
      %2496 = vmatmul.mubr.bf16.gmra.mrb[0].mxu0 %v2440
      %v2497 = vpop.f32.mrb[0].mxu0
      %v2498 = vadd.f32 %v2428, %v2497
      %v2499 = vpop.f32.mrb[0].mxu0
      %v2500 = vpop.f32.mrb[0].mxu0
      %v2501 = vadd.f32 %v2428, %v2500
      %v2502 = vpop.f32.mrb[0].mxu0
      %2503 = vmatprep.mubr.bf16.mxu0 0
      %2504 = vmatmul.mubr.bf16.gmra.mrb[0].mxu0 %v2443
      %v2505 = vpop.f32.mrb[0].mxu0
      %v2506 = vadd.f32 %v2428, %v2505
      %v2507 = vpop.f32.mrb[0].mxu0
      %v2508 = vpop.f32.mrb[0].mxu0
      %v2509 = vadd.f32 %v2428, %v2508
      %v2510 = vpop.f32.mrb[0].mxu0
      %2511 = vmatprep.mubr.bf16.mxu0 0
      %2512 = vmatmul.mubr.bf16.gmra.mrb[0].mxu0 %v2446
      %v2513 = vpop.f32.mrb[0].mxu0
      %v2514 = vadd.f32 %v2428, %v2513
      %v2515 = vpop.f32.mrb[0].mxu0
      %v2516 = vpop.f32.mrb[0].mxu0
      %v2517 = vadd.f32 %v2428, %v2516
      %v2518 = vpop.f32.mrb[0].mxu0
      %2519 = vmatprep.mubr.bf16.mxu0 0
      %2520 = vmatmul.mubr.bf16.gmra.mrb[0].mxu0 %v2449
      %v2521 = vpop.f32.mrb[0].mxu0
      %v2522 = vadd.f32 %v2428, %v2521
      %v2523 = vpop.f32.mrb[0].mxu0
      %v2524 = vpop.f32.mrb[0].mxu0
      %v2525 = vadd.f32 %v2428, %v2524
      %v2526 = vpop.f32.mrb[0].mxu0
      %2527 = vmatprep.mubr.bf16.mxu0 0
      %2528 = vmatmul.mubr.bf16.gmra.mrb[0].mxu0 %v2452
      %v2529 = vpop.f32.mrb[0].mxu0
      %v2530 = vadd.f32 %v2428, %v2529
      %v2531 = vpop.f32.mrb[0].mxu0
      %v2532 = vpop.f32.mrb[0].mxu0
      %v2533 = vadd.f32 %v2428, %v2532
      %v2534 = vpop.f32.mrb[0].mxu0
      %2535 = vmatprep.mubr.bf16.mxu0 0
      %2536 = vmatmul.mubr.bf16.gmra.mrb[0].mxu0 %v2455
      %v2537 = vpop.f32.mrb[0].mxu0
      %v2538 = vadd.f32 %v2428, %v2537
      %v2539 = vpop.f32.mrb[0].mxu0
      %v2540 = vpop.f32.mrb[0].mxu0
      %v2541 = vadd.f32 %v2428, %v2540
      %v2542 = vpop.f32.mrb[0].mxu0
      %2543 = vmatprep.mubr.bf16.mxu0 0
      %2544 = vmatmul.mubr.bf16.gmra.mrb[0].mxu0 %v2458
      %v2545 = vpop.f32.mrb[0].mxu0
      %v2546 = vadd.f32 %v2428, %v2545
      %v2547 = vpop.f32.mrb[0].mxu0
      %v2548 = vpop.f32.mrb[0].mxu0
      %v2549 = vadd.f32 %v2428, %v2548
      %v2550 = vpop.f32.mrb[0].mxu0
      %2551 = vdwg.mxu0
      %v2552 = vmax.f32 %v2498, 0.0
      %v2553 = vmax.f32 %v2501, 0.0
      %v2554 = vmax.f32 %v2506, 0.0
      %v2555 = vmax.f32 %v2509, 0.0
      %v2556 = vmax.f32 %v2514, 0.0
      %v2557 = vmax.f32 %v2517, 0.0
      %v2558 = vmax.f32 %v2522, 0.0
      %v2559 = vmax.f32 %v2525, 0.0
      %v2560 = vmax.f32 %v2530, 0.0
      %v2561 = vmax.f32 %v2533, 0.0
      %v2562 = vmax.f32 %v2538, 0.0
      %v2563 = vmax.f32 %v2541, 0.0
      %v2564 = vmax.f32 %v2546, 0.0
      %v2565 = vmax.f32 %v2549, 0.0
      %v2566 = vpack.c.bf16 %v2553, %v2552
      %v2567 = vpack.c.bf16 %v2555, %v2554
      %v2568 = vpack.c.bf16 %v2557, %v2556
      %v2569 = vpack.c.bf16 %v2559, %v2558
      %v2570 = vpack.c.bf16 %v2561, %v2560
      %v2571 = vpack.c.bf16 %v2563, %v2562
      %v2572 = vpack.c.bf16 %v2565, %v2564
      %v2573 = vld [vmem:[%s15] sm:$0xf]
      %v2574 = vld [vmem:[%s15 + $0x4] sm:$0xf]
      %v2575 = vld [vmem:[%s15 + $0x8] sm:$0xf]
      %v2576 = vld [vmem:[%s15 + $0xc] sm:$0xf]
      %v2577 = vld [vmem:[%s15 + $0x10] sm:$0x3]
      %v2578 = vld [vmem:[%s16] sm:$0x1]
      %v2580 = vlaneseq
      %v2581 = vshrl.u32 %v2580, 7
      %v2582 = vsub.s32 0, %v2581
      %v2583 = vrot.slane %v2578, %v2582
      %v2590 = vunpack.c.l.b16 %v2573
      %v2591 = vunpack.c.l.b16 %v2574
      %v2592 = vunpack.c.l.b16 %v2575
      %v2593 = vunpack.c.l.b16 %v2576
      %v2594 = vunpack.c.l.b16 %v2577
      %v2595 = vpack.c.b16 %v2591, %v2590
      %v2596 = vpack.c.b16 %v2593, %v2592
      %v2597 = vpack.c.b16 %v2594, %v2594
      %v2601 = vsel %vm1990, %v2566, 0
      %v2604 = vsel %vm1990, %v2567, 0
      %v2607 = vsel %vm1990, %v2568, 0
      %v2610 = vsel %vm1990, %v2569, 0
      %v2613 = vsel %vm1990, %v2570, 0
      %v2616 = vsel %vm1990, %v2571, 0
      %v2619 = vsel %vm1990, %v2572, 0
      %v2622 = vsel %vm2012, %v2597, 0
      %2624 = vmatprep.subr.bf16.mxu0 0
      %2625 = vmatpush1.bf16.msra.mxu0 %v2595
      %2626 = vmatprep.subr.bf16.mxu0 0
      %2627 = vmatpush1.bf16.msra.mxu0 %v2596
      %2628 = vmatprep.subr.bf16.mxu0 0
      %2629 = vmatpush1.bf16.msra.mxu0 %v2622
      %2630 = vmatprep.subr.bf16.mxu0 0
      %2631 = vmatpush1.bf16.msra.mxu0 0
      %2632 = vmatprep.subr.bf16.mxu0 0
      %2633 = vmatpush1.bf16.msra.mxu0 0
      %2634 = vmatprep.subr.bf16.mxu0 0
      %2635 = vmatpush1.bf16.msra.mxu0 0
      %2636 = vmatprep.subr.bf16.mxu0 0
      %2637 = vmatpush1.bf16.msra.mxu0 0
      %2638 = vmatprep.subr.bf16.mxu0 0
      %2639 = vmatpush1.bf16.msra.mxu0 0
      %2640 = vmatprep.subr.bf16.mxu0 0
      %2641 = vmatpush1.bf16.msra.mxu0 0
      %2642 = vmatprep.subr.bf16.mxu0 0
      %2643 = vmatpush1.bf16.msra.mxu0 0
      %2644 = vmatprep.subr.bf16.mxu0 0
      %2645 = vmatpush1.bf16.msra.mxu0 0
      %2646 = vmatprep.subr.bf16.mxu0 0
      %2647 = vmatpush1.bf16.msra.mxu0 0
      %2648 = vmatprep.subr.bf16.mxu0 0
      %2649 = vmatpush1.bf16.msra.mxu0 0
      %2650 = vmatprep.subr.bf16.mxu0 0
      %2651 = vmatpush1.bf16.msra.mxu0 0
      %2652 = vmatprep.subr.bf16.mxu0 0
      %2653 = vmatpush1.bf16.msra.mxu0 0
      %2654 = vmatprep.subr.bf16.mxu0 0
      %2655 = vmatpush1.bf16.msra.mxu0 0
      %2656 = vmatprep.mubr.bf16.mxu0 0
      %2657 = vmatmul.mubr.bf16.gmra.mrb[0].mxu0 %v2601
      %v2658 = vpop.f32.mrb[0].mxu0
      %v2659 = vadd.f32 %v2583, %v2658
      %v2660 = vpop.f32.mrb[0].mxu0
      %v2661 = vpop.f32.mrb[0].mxu0
      %v2662 = vadd.f32 %v2583, %v2661
      %v2663 = vpop.f32.mrb[0].mxu0
      %2664 = vmatprep.mubr.bf16.mxu0 0
      %2665 = vmatmul.mubr.bf16.gmra.mrb[0].mxu0 %v2604
      %v2666 = vpop.f32.mrb[0].mxu0
      %v2667 = vadd.f32 %v2583, %v2666
      %v2668 = vpop.f32.mrb[0].mxu0
      %v2669 = vpop.f32.mrb[0].mxu0
      %v2670 = vadd.f32 %v2583, %v2669
      %v2671 = vpop.f32.mrb[0].mxu0
      %2672 = vmatprep.mubr.bf16.mxu0 0
      %2673 = vmatmul.mubr.bf16.gmra.mrb[0].mxu0 %v2607
      %v2674 = vpop.f32.mrb[0].mxu0
      %v2675 = vadd.f32 %v2583, %v2674
      %v2676 = vpop.f32.mrb[0].mxu0
      %v2677 = vpop.f32.mrb[0].mxu0
      %v2678 = vadd.f32 %v2583, %v2677
      %v2679 = vpop.f32.mrb[0].mxu0
      %2680 = vmatprep.mubr.bf16.mxu0 0
      %2681 = vmatmul.mubr.bf16.gmra.mrb[0].mxu0 %v2610
      %v2682 = vpop.f32.mrb[0].mxu0
      %v2683 = vadd.f32 %v2583, %v2682
      %v2684 = vpop.f32.mrb[0].mxu0
      %v2685 = vpop.f32.mrb[0].mxu0
      %v2686 = vadd.f32 %v2583, %v2685
      %v2687 = vpop.f32.mrb[0].mxu0
      %2688 = vmatprep.mubr.bf16.mxu0 0
      %2689 = vmatmul.mubr.bf16.gmra.mrb[0].mxu0 %v2613
      %v2690 = vpop.f32.mrb[0].mxu0
      %v2691 = vadd.f32 %v2583, %v2690
      %v2692 = vpop.f32.mrb[0].mxu0
      %v2693 = vpop.f32.mrb[0].mxu0
      %v2694 = vadd.f32 %v2583, %v2693
      %v2695 = vpop.f32.mrb[0].mxu0
      %2696 = vmatprep.mubr.bf16.mxu0 0
      %2697 = vmatmul.mubr.bf16.gmra.mrb[0].mxu0 %v2616
      %v2698 = vpop.f32.mrb[0].mxu0
      %v2699 = vadd.f32 %v2583, %v2698
      %v2700 = vpop.f32.mrb[0].mxu0
      %v2701 = vpop.f32.mrb[0].mxu0
      %v2702 = vadd.f32 %v2583, %v2701
      %v2703 = vpop.f32.mrb[0].mxu0
      %2704 = vmatprep.mubr.bf16.mxu0 0
      %2705 = vmatmul.mubr.bf16.gmra.mrb[0].mxu0 %v2619
      %v2706 = vpop.f32.mrb[0].mxu0
      %v2707 = vadd.f32 %v2583, %v2706
      %v2708 = vpop.f32.mrb[0].mxu0
      %v2709 = vpop.f32.mrb[0].mxu0
      %v2710 = vadd.f32 %v2583, %v2709
      %v2711 = vpop.f32.mrb[0].mxu0
      %2712 = vdwg.mxu0
      %v2713 = vmax.f32 %v2659, 0.0
      %v2714 = vmax.f32 %v2662, 0.0
      %v2715 = vmax.f32 %v2667, 0.0
      %v2716 = vmax.f32 %v2670, 0.0
      %v2717 = vmax.f32 %v2675, 0.0
      %v2718 = vmax.f32 %v2678, 0.0
      %v2719 = vmax.f32 %v2683, 0.0
      %v2720 = vmax.f32 %v2686, 0.0
      %v2721 = vmax.f32 %v2691, 0.0
      %v2722 = vmax.f32 %v2694, 0.0
      %v2723 = vmax.f32 %v2699, 0.0
      %v2724 = vmax.f32 %v2702, 0.0
      %v2725 = vmax.f32 %v2707, 0.0
      %v2726 = vmax.f32 %v2710, 0.0
      %v2727 = vpack.c.bf16 %v2714, %v2713
      %v2728 = vpack.c.bf16 %v2716, %v2715
      %v2729 = vpack.c.bf16 %v2718, %v2717
      %v2730 = vpack.c.bf16 %v2720, %v2719
      %v2731 = vpack.c.bf16 %v2722, %v2721
      %v2732 = vpack.c.bf16 %v2724, %v2723
      %v2733 = vpack.c.bf16 %v2726, %v2725
      %v2734 = vld [vmem:[%s17] sm:$0xf]
      %v2735 = vld [vmem:[%s17 + $0x4] sm:$0xf]
      %v2736 = vld [vmem:[%s17 + $0x8] sm:$0xf]
      %v2737 = vld [vmem:[%s17 + $0xc] sm:$0xf]
      %v2738 = vld [vmem:[%s17 + $0x10] sm:$0xf]
      %v2739 = vld [vmem:[%s17 + $0x14] sm:$0xf]
      %v2740 = vld [vmem:[%s17 + $0x18] sm:$0xf]
      %v2741 = vld [vmem:[%s17 + $0x1c] sm:$0xf]
      %v2742 = vld [vmem:[%s18] sm:$0x1]
      %v2744 = vlaneseq
      %v2745 = vshrl.u32 %v2744, 7
      %v2746 = vsub.s32 0, %v2745
      %v2747 = vrot.slane %v2742, %v2746
      %v2757 = vunpack.c.l.b16 %v2734
      %v2758 = vunpack.c.l.b16 %v2735
      %v2759 = vunpack.c.l.b16 %v2736
      %v2760 = vunpack.c.l.b16 %v2737
      %v2761 = vunpack.c.l.b16 %v2738
      %v2762 = vunpack.c.l.b16 %v2739
      %v2763 = vunpack.c.l.b16 %v2740
      %v2764 = vunpack.c.l.b16 %v2741
      %v2765 = vpack.c.b16 %v2758, %v2757
      %v2766 = vpack.c.b16 %v2760, %v2759
      %v2767 = vpack.c.b16 %v2762, %v2761
      %v2768 = vpack.c.b16 %v2764, %v2763
      %v2774 = vsel %vm1831, %v2727, 0
      %v2777 = vsel %vm1831, %v2728, 0
      %v2780 = vsel %vm1831, %v2729, 0
      %v2783 = vsel %vm1831, %v2730, 0
      %v2786 = vsel %vm1831, %v2731, 0
      %v2789 = vsel %vm1831, %v2732, 0
      %v2792 = vsel %vm1831, %v2733, 0
      %2794 = vmatprep.subr.bf16.mxu0 0
      %2795 = vmatpush1.bf16.msra.mxu0 %v2765
      %2796 = vmatprep.subr.bf16.mxu0 0
      %2797 = vmatpush1.bf16.msra.mxu0 %v2766
      %2798 = vmatprep.subr.bf16.mxu0 0
      %2799 = vmatpush1.bf16.msra.mxu0 %v2767
      %2800 = vmatprep.subr.bf16.mxu0 0
      %2801 = vmatpush1.bf16.msra.mxu0 %v2768
      %2802 = vmatprep.subr.bf16.mxu0 0
      %2803 = vmatpush1.bf16.msra.mxu0 0
      %2804 = vmatprep.subr.bf16.mxu0 0
      %2805 = vmatpush1.bf16.msra.mxu0 0
      %2806 = vmatprep.subr.bf16.mxu0 0
      %2807 = vmatpush1.bf16.msra.mxu0 0
      %2808 = vmatprep.subr.bf16.mxu0 0
      %2809 = vmatpush1.bf16.msra.mxu0 0
      %2810 = vmatprep.subr.bf16.mxu0 0
      %2811 = vmatpush1.bf16.msra.mxu0 0
      %2812 = vmatprep.subr.bf16.mxu0 0
      %2813 = vmatpush1.bf16.msra.mxu0 0
      %2814 = vmatprep.subr.bf16.mxu0 0
      %2815 = vmatpush1.bf16.msra.mxu0 0
      %2816 = vmatprep.subr.bf16.mxu0 0
      %2817 = vmatpush1.bf16.msra.mxu0 0
      %2818 = vmatprep.subr.bf16.mxu0 0
      %2819 = vmatpush1.bf16.msra.mxu0 0
      %2820 = vmatprep.subr.bf16.mxu0 0
      %2821 = vmatpush1.bf16.msra.mxu0 0
      %2822 = vmatprep.subr.bf16.mxu0 0
      %2823 = vmatpush1.bf16.msra.mxu0 0
      %2824 = vmatprep.subr.bf16.mxu0 0
      %2825 = vmatpush1.bf16.msra.mxu0 0
      %2826 = vmatprep.mubr.bf16.mxu0 0
      %2827 = vmatmul.mubr.bf16.gmra.mrb[0].mxu0 %v2774
      %v2828 = vpop.f32.mrb[0].mxu0
      %v2829 = vadd.f32 %v2747, %v2828
      %v2830 = vpop.f32.mrb[0].mxu0
      %v2831 = vpop.f32.mrb[0].mxu0
      %v2832 = vadd.f32 %v2747, %v2831
      %v2833 = vpop.f32.mrb[0].mxu0
      %2834 = vmatprep.mubr.bf16.mxu0 0
      %2835 = vmatmul.mubr.bf16.gmra.mrb[0].mxu0 %v2777
      %v2836 = vpop.f32.mrb[0].mxu0
      %v2837 = vadd.f32 %v2747, %v2836
      %v2838 = vpop.f32.mrb[0].mxu0
      %v2839 = vpop.f32.mrb[0].mxu0
      %v2840 = vadd.f32 %v2747, %v2839
      %v2841 = vpop.f32.mrb[0].mxu0
      %2842 = vmatprep.mubr.bf16.mxu0 0
      %2843 = vmatmul.mubr.bf16.gmra.mrb[0].mxu0 %v2780
      %v2844 = vpop.f32.mrb[0].mxu0
      %v2845 = vadd.f32 %v2747, %v2844
      %v2846 = vpop.f32.mrb[0].mxu0
      %v2847 = vpop.f32.mrb[0].mxu0
      %v2848 = vadd.f32 %v2747, %v2847
      %v2849 = vpop.f32.mrb[0].mxu0
      %2850 = vmatprep.mubr.bf16.mxu0 0
      %2851 = vmatmul.mubr.bf16.gmra.mrb[0].mxu0 %v2783
      %v2852 = vpop.f32.mrb[0].mxu0
      %v2853 = vadd.f32 %v2747, %v2852
      %v2854 = vpop.f32.mrb[0].mxu0
      %v2855 = vpop.f32.mrb[0].mxu0
      %v2856 = vadd.f32 %v2747, %v2855
      %v2857 = vpop.f32.mrb[0].mxu0
      %2858 = vmatprep.mubr.bf16.mxu0 0
      %2859 = vmatmul.mubr.bf16.gmra.mrb[0].mxu0 %v2786
      %v2860 = vpop.f32.mrb[0].mxu0
      %v2861 = vadd.f32 %v2747, %v2860
      %v2862 = vpop.f32.mrb[0].mxu0
      %v2863 = vpop.f32.mrb[0].mxu0
      %v2864 = vadd.f32 %v2747, %v2863
      %v2865 = vpop.f32.mrb[0].mxu0
      %2866 = vmatprep.mubr.bf16.mxu0 0
      %2867 = vmatmul.mubr.bf16.gmra.mrb[0].mxu0 %v2789
      %v2868 = vpop.f32.mrb[0].mxu0
      %v2869 = vadd.f32 %v2747, %v2868
      %v2870 = vpop.f32.mrb[0].mxu0
      %v2871 = vpop.f32.mrb[0].mxu0
      %v2872 = vadd.f32 %v2747, %v2871
      %v2873 = vpop.f32.mrb[0].mxu0
      %2874 = vmatprep.mubr.bf16.mxu0 0
      %2875 = vmatmul.mubr.bf16.gmra.mrb[0].mxu0 %v2792
      %v2876 = vpop.f32.mrb[0].mxu0
      %v2877 = vadd.f32 %v2747, %v2876
      %v2878 = vpop.f32.mrb[0].mxu0
      %v2879 = vpop.f32.mrb[0].mxu0
      %v2880 = vadd.f32 %v2747, %v2879
      %v2881 = vpop.f32.mrb[0].mxu0
      %2882 = vdwg.mxu0
      %v2883 = vmax.f32 %v2829, 0.0
      %v2884 = vmax.f32 %v2832, 0.0
      %v2885 = vmax.f32 %v2837, 0.0
      %v2886 = vmax.f32 %v2840, 0.0
      %v2887 = vmax.f32 %v2845, 0.0
      %v2888 = vmax.f32 %v2848, 0.0
      %v2889 = vmax.f32 %v2853, 0.0
      %v2890 = vmax.f32 %v2856, 0.0
      %v2891 = vmax.f32 %v2861, 0.0
      %v2892 = vmax.f32 %v2864, 0.0
      %v2893 = vmax.f32 %v2869, 0.0
      %v2894 = vmax.f32 %v2872, 0.0
      %v2895 = vmax.f32 %v2877, 0.0
      %v2896 = vmax.f32 %v2880, 0.0
      %v2897 = vpack.c.bf16 %v2884, %v2883
      %v2898 = vpack.c.bf16 %v2886, %v2885
      %v2899 = vpack.c.bf16 %v2888, %v2887
      %v2900 = vpack.c.bf16 %v2890, %v2889
      %v2901 = vpack.c.bf16 %v2892, %v2891
      %v2902 = vpack.c.bf16 %v2894, %v2893
      %v2903 = vpack.c.bf16 %v2896, %v2895
      %v2904 = vld [vmem:[%s19] sm:$0xff]
      %v2905 = vld [vmem:[%s19 + $0x8] sm:$0xff]
      %v2906 = vld [vmem:[%s19 + $0x10] sm:$0xff]
      %v2907 = vld [vmem:[%s19 + $0x18] sm:$0xf]
      %v2908 = vld [vmem:[%s19 + $0x1c] sm:$0xff]
      %v2909 = vld [vmem:[%s19 + $0x24] sm:$0xff]
      %v2910 = vld [vmem:[%s19 + $0x2c] sm:$0xff]
      %v2911 = vld [vmem:[%s19 + $0x34] sm:$0xf]
      %v2912 = vld [vmem:[%s19 + $0x38] sm:$0xff]
      %v2913 = vld [vmem:[%s19 + $0x40] sm:$0xff]
      %v2914 = vld [vmem:[%s19 + $0x48] sm:$0xff]
      %v2915 = vld [vmem:[%s19 + $0x50] sm:$0xf]
      %v2916 = vld [vmem:[%s19 + $0x54] sm:$0xff]
      %v2917 = vld [vmem:[%s19 + $0x5c] sm:$0xff]
      %v2918 = vld [vmem:[%s19 + $0x64] sm:$0xff]
      %v2919 = vld [vmem:[%s19 + $0x6c] sm:$0xf]
      %v2920 = vld [vmem:[%s19 + $0x70] sm:$0xff]
      %v2921 = vld [vmem:[%s19 + $0x78] sm:$0xff]
      %v2922 = vld [vmem:[%s19 + $0x80] sm:$0xff]
      %v2923 = vld [vmem:[%s19 + $0x88] sm:$0xf]
      %v2924 = vld [vmem:[%s19 + $0x8c] sm:$0xff]
      %v2925 = vld [vmem:[%s19 + $0x94] sm:$0xff]
      %v2926 = vld [vmem:[%s19 + $0x9c] sm:$0xff]
      %v2927 = vld [vmem:[%s19 + $0xa4] sm:$0xf]
      %v2928 = vld [vmem:[%s19 + $0xa8] sm:$0xff]
      %v2929 = vld [vmem:[%s19 + $0xb0] sm:$0xff]
      %v2930 = vld [vmem:[%s19 + $0xb8] sm:$0xff]
      %v2931 = vld [vmem:[%s19 + $0xc0] sm:$0xf]
      %v2932 = vld [vmem:[%s19 + $0xc4] sm:$0xff]
      %v2933 = vld [vmem:[%s19 + $0xcc] sm:$0xff]
      %v2934 = vld [vmem:[%s19 + $0xd4] sm:$0xff]
      %v2935 = vld [vmem:[%s19 + $0xdc] sm:$0xf]
      %v2936 = vld [vmem:[%s19 + $0xe0] sm:$0xff]
      %v2937 = vld [vmem:[%s19 + $0xe8] sm:$0xff]
      %v2938 = vld [vmem:[%s19 + $0xf0] sm:$0xff]
      %v2939 = vld [vmem:[%s19 + $0xf8] sm:$0xf]
      %v2940 = vld [vmem:[%s19 + $0xfc] sm:$0xff]
      %v2941 = vld [vmem:[%s19 + $0x104] sm:$0xff]
      %v2942 = vld [vmem:[%s19 + $0x10c] sm:$0xff]
      %v2943 = vld [vmem:[%s19 + $0x114] sm:$0xf]
      %v2944 = vld [vmem:[%s19 + $0x118] sm:$0xff]
      %v2945 = vld [vmem:[%s19 + $0x120] sm:$0xff]
      %v2946 = vld [vmem:[%s19 + $0x128] sm:$0xff]
      %v2947 = vld [vmem:[%s19 + $0x130] sm:$0xf]
      %v2948 = vld [vmem:[%s19 + $0x134] sm:$0xff]
      %v2949 = vld [vmem:[%s19 + $0x13c] sm:$0xff]
      %v2950 = vld [vmem:[%s19 + $0x144] sm:$0xff]
      %v2951 = vld [vmem:[%s19 + $0x14c] sm:$0xf]
      %v2952 = vld [vmem:[%s19 + $0x150] sm:$0xff]
      %v2953 = vld [vmem:[%s19 + $0x158] sm:$0xff]
      %v2954 = vld [vmem:[%s19 + $0x160] sm:$0xff]
      %v2955 = vld [vmem:[%s19 + $0x168] sm:$0xf]
      %v2956 = vld [vmem:[%s19 + $0x16c] sm:$0xff]
      %v2957 = vld [vmem:[%s19 + $0x174] sm:$0xff]
      %v2958 = vld [vmem:[%s19 + $0x17c] sm:$0xff]
      %v2959 = vld [vmem:[%s19 + $0x184] sm:$0xf]
      %v2960 = vld [vmem:[%s19 + $0x188] sm:$0xff]
      %v2961 = vld [vmem:[%s19 + $0x190] sm:$0xff]
      %v2962 = vld [vmem:[%s19 + $0x198] sm:$0xff]
      %v2963 = vld [vmem:[%s19 + $0x1a0] sm:$0xf]
      %v2964 = vld [vmem:[%s19 + $0x1a4] sm:$0xff]
      %v2965 = vld [vmem:[%s19 + $0x1ac] sm:$0xff]
      %v2966 = vld [vmem:[%s19 + $0x1b4] sm:$0xff]
      %v2967 = vld [vmem:[%s19 + $0x1bc] sm:$0xf]
      %v2968 = vld [vmem:[%s20] sm:$0x7f]
      %v2970 = vlaneseq
      %v2971 = vshrl.u32 %v2970, 7
      %v2972 = vsub.s32 0, %v2971
      %v2973 = vrot.slane %v2968, %v2972
      %v2974 = vlaneseq
      %v2975 = vshrl.u32 %v2974, 7
      %v2976 = vsub.s32 1, %v2975
      %v2977 = vrot.slane %v2968, %v2976
      %v2978 = vlaneseq
      %v2979 = vshrl.u32 %v2978, 7
      %v2980 = vsub.s32 2, %v2979
      %v2981 = vrot.slane %v2968, %v2980
      %v2982 = vlaneseq
      %v2983 = vshrl.u32 %v2982, 7
      %v2984 = vsub.s32 3, %v2983
      %v2985 = vrot.slane %v2968, %v2984
      %v2986 = vlaneseq
      %v2987 = vshrl.u32 %v2986, 7
      %v2988 = vsub.s32 4, %v2987
      %v2989 = vrot.slane %v2968, %v2988
      %v2990 = vlaneseq
      %v2991 = vshrl.u32 %v2990, 7
      %v2992 = vsub.s32 5, %v2991
      %v2993 = vrot.slane %v2968, %v2992
      %v2994 = vlaneseq
      %v2995 = vshrl.u32 %v2994, 7
      %v2996 = vsub.s32 6, %v2995
      %v2997 = vrot.slane %v2968, %v2996
      %v3069 = vunpack.c.l.b16 %v2904
      %v3070 = vunpack.c.h.b16 %v2904
      %v3071 = vunpack.c.l.b16 %v2905
      %v3072 = vunpack.c.h.b16 %v2905
      %v3073 = vunpack.c.l.b16 %v2906
      %v3074 = vunpack.c.h.b16 %v2906
      %v3075 = vunpack.c.l.b16 %v2907
      %v3076 = vunpack.c.l.b16 %v2908
      %v3077 = vunpack.c.h.b16 %v2908
      %v3078 = vunpack.c.l.b16 %v2909
      %v3079 = vunpack.c.h.b16 %v2909
      %v3080 = vunpack.c.l.b16 %v2910
      %v3081 = vunpack.c.h.b16 %v2910
      %v3082 = vunpack.c.l.b16 %v2911
      %v3083 = vunpack.c.l.b16 %v2912
      %v3084 = vunpack.c.h.b16 %v2912
      %v3085 = vunpack.c.l.b16 %v2913
      %v3086 = vunpack.c.h.b16 %v2913
      %v3087 = vunpack.c.l.b16 %v2914
      %v3088 = vunpack.c.h.b16 %v2914
      %v3089 = vunpack.c.l.b16 %v2915
      %v3090 = vunpack.c.l.b16 %v2916
      %v3091 = vunpack.c.h.b16 %v2916
      %v3092 = vunpack.c.l.b16 %v2917
      %v3093 = vunpack.c.h.b16 %v2917
      %v3094 = vunpack.c.l.b16 %v2918
      %v3095 = vunpack.c.h.b16 %v2918
      %v3096 = vunpack.c.l.b16 %v2919
      %v3097 = vunpack.c.l.b16 %v2920
      %v3098 = vunpack.c.h.b16 %v2920
      %v3099 = vunpack.c.l.b16 %v2921
      %v3100 = vunpack.c.h.b16 %v2921
      %v3101 = vunpack.c.l.b16 %v2922
      %v3102 = vunpack.c.h.b16 %v2922
      %v3103 = vunpack.c.l.b16 %v2923
      %v3104 = vunpack.c.l.b16 %v2924
      %v3105 = vunpack.c.h.b16 %v2924
      %v3106 = vunpack.c.l.b16 %v2925
      %v3107 = vunpack.c.h.b16 %v2925
      %v3108 = vunpack.c.l.b16 %v2926
      %v3109 = vunpack.c.h.b16 %v2926
      %v3110 = vunpack.c.l.b16 %v2927
      %v3111 = vunpack.c.l.b16 %v2928
      %v3112 = vunpack.c.h.b16 %v2928
      %v3113 = vunpack.c.l.b16 %v2929
      %v3114 = vunpack.c.h.b16 %v2929
      %v3115 = vunpack.c.l.b16 %v2930
      %v3116 = vunpack.c.h.b16 %v2930
      %v3117 = vunpack.c.l.b16 %v2931
      %v3118 = vunpack.c.l.b16 %v2932
      %v3119 = vunpack.c.h.b16 %v2932
      %v3120 = vunpack.c.l.b16 %v2933
      %v3121 = vunpack.c.h.b16 %v2933
      %v3122 = vunpack.c.l.b16 %v2934
      %v3123 = vunpack.c.h.b16 %v2934
      %v3124 = vunpack.c.l.b16 %v2935
      %v3125 = vunpack.c.l.b16 %v2936
      %v3126 = vunpack.c.h.b16 %v2936
      %v3127 = vunpack.c.l.b16 %v2937
      %v3128 = vunpack.c.h.b16 %v2937
      %v3129 = vunpack.c.l.b16 %v2938
      %v3130 = vunpack.c.h.b16 %v2938
      %v3131 = vunpack.c.l.b16 %v2939
      %v3132 = vunpack.c.l.b16 %v2940
      %v3133 = vunpack.c.h.b16 %v2940
      %v3134 = vunpack.c.l.b16 %v2941
      %v3135 = vunpack.c.h.b16 %v2941
      %v3136 = vunpack.c.l.b16 %v2942
      %v3137 = vunpack.c.h.b16 %v2942
      %v3138 = vunpack.c.l.b16 %v2943
      %v3139 = vunpack.c.l.b16 %v2944
      %v3140 = vunpack.c.h.b16 %v2944
      %v3141 = vunpack.c.l.b16 %v2945
      %v3142 = vunpack.c.h.b16 %v2945
      %v3143 = vunpack.c.l.b16 %v2946
      %v3144 = vunpack.c.h.b16 %v2946
      %v3145 = vunpack.c.l.b16 %v2947
      %v3146 = vunpack.c.l.b16 %v2948
      %v3147 = vunpack.c.h.b16 %v2948
      %v3148 = vunpack.c.l.b16 %v2949
      %v3149 = vunpack.c.h.b16 %v2949
      %v3150 = vunpack.c.l.b16 %v2950
      %v3151 = vunpack.c.h.b16 %v2950
      %v3152 = vunpack.c.l.b16 %v2951
      %v3153 = vunpack.c.l.b16 %v2952
      %v3154 = vunpack.c.h.b16 %v2952
      %v3155 = vunpack.c.l.b16 %v2953
      %v3156 = vunpack.c.h.b16 %v2953
      %v3157 = vunpack.c.l.b16 %v2954
      %v3158 = vunpack.c.h.b16 %v2954
      %v3159 = vunpack.c.l.b16 %v2955
      %v3160 = vunpack.c.l.b16 %v2956
      %v3161 = vunpack.c.h.b16 %v2956
      %v3162 = vunpack.c.l.b16 %v2957
      %v3163 = vunpack.c.h.b16 %v2957
      %v3164 = vunpack.c.l.b16 %v2958
      %v3165 = vunpack.c.h.b16 %v2958
      %v3166 = vunpack.c.l.b16 %v2959
      %v3167 = vunpack.c.l.b16 %v2960
      %v3168 = vunpack.c.h.b16 %v2960
      %v3169 = vunpack.c.l.b16 %v2961
      %v3170 = vunpack.c.h.b16 %v2961
      %v3171 = vunpack.c.l.b16 %v2962
      %v3172 = vunpack.c.h.b16 %v2962
      %v3173 = vunpack.c.l.b16 %v2963
      %v3174 = vunpack.c.l.b16 %v2964
      %v3175 = vunpack.c.h.b16 %v2964
      %v3176 = vunpack.c.l.b16 %v2965
      %v3177 = vunpack.c.h.b16 %v2965
      %v3178 = vunpack.c.l.b16 %v2966
      %v3179 = vunpack.c.h.b16 %v2966
      %v3180 = vunpack.c.l.b16 %v2967
      %v3181 = vpack.c.b16 %v3076, %v3069
      %v3182 = vpack.c.b16 %v3077, %v3070
      %v3183 = vpack.c.b16 %v3078, %v3071
      %v3184 = vpack.c.b16 %v3079, %v3072
      %v3185 = vpack.c.b16 %v3080, %v3073
      %v3186 = vpack.c.b16 %v3081, %v3074
      %v3187 = vpack.c.b16 %v3082, %v3075
      %v3188 = vpack.c.b16 %v3090, %v3083
      %v3189 = vpack.c.b16 %v3091, %v3084
      %v3190 = vpack.c.b16 %v3092, %v3085
      %v3191 = vpack.c.b16 %v3093, %v3086
      %v3192 = vpack.c.b16 %v3094, %v3087
      %v3193 = vpack.c.b16 %v3095, %v3088
      %v3194 = vpack.c.b16 %v3096, %v3089
      %v3195 = vpack.c.b16 %v3104, %v3097
      %v3196 = vpack.c.b16 %v3105, %v3098
      %v3197 = vpack.c.b16 %v3106, %v3099
      %v3198 = vpack.c.b16 %v3107, %v3100
      %v3199 = vpack.c.b16 %v3108, %v3101
      %v3200 = vpack.c.b16 %v3109, %v3102
      %v3201 = vpack.c.b16 %v3110, %v3103
      %v3202 = vpack.c.b16 %v3118, %v3111
      %v3203 = vpack.c.b16 %v3119, %v3112
      %v3204 = vpack.c.b16 %v3120, %v3113
      %v3205 = vpack.c.b16 %v3121, %v3114
      %v3206 = vpack.c.b16 %v3122, %v3115
      %v3207 = vpack.c.b16 %v3123, %v3116
      %v3208 = vpack.c.b16 %v3124, %v3117
      %v3209 = vpack.c.b16 %v3132, %v3125
      %v3210 = vpack.c.b16 %v3133, %v3126
      %v3211 = vpack.c.b16 %v3134, %v3127
      %v3212 = vpack.c.b16 %v3135, %v3128
      %v3213 = vpack.c.b16 %v3136, %v3129
      %v3214 = vpack.c.b16 %v3137, %v3130
      %v3215 = vpack.c.b16 %v3138, %v3131
      %v3216 = vpack.c.b16 %v3146, %v3139
      %v3217 = vpack.c.b16 %v3147, %v3140
      %v3218 = vpack.c.b16 %v3148, %v3141
      %v3219 = vpack.c.b16 %v3149, %v3142
      %v3220 = vpack.c.b16 %v3150, %v3143
      %v3221 = vpack.c.b16 %v3151, %v3144
      %v3222 = vpack.c.b16 %v3152, %v3145
      %v3223 = vpack.c.b16 %v3160, %v3153
      %v3224 = vpack.c.b16 %v3161, %v3154
      %v3225 = vpack.c.b16 %v3162, %v3155
      %v3226 = vpack.c.b16 %v3163, %v3156
      %v3227 = vpack.c.b16 %v3164, %v3157
      %v3228 = vpack.c.b16 %v3165, %v3158
      %v3229 = vpack.c.b16 %v3166, %v3159
      %v3230 = vpack.c.b16 %v3174, %v3167
      %v3231 = vpack.c.b16 %v3175, %v3168
      %v3232 = vpack.c.b16 %v3176, %v3169
      %v3233 = vpack.c.b16 %v3177, %v3170
      %v3234 = vpack.c.b16 %v3178, %v3171
      %v3235 = vpack.c.b16 %v3179, %v3172
      %v3236 = vpack.c.b16 %v3180, %v3173
      %3293 = vmatprep.subr.bf16.mxu0 %v3182
      %3294 = vmatpush1.bf16.msra.mxu0 %v3181
      %3295 = vmatprep.subr.bf16.mxu0 %v3189
      %3296 = vmatpush1.bf16.msra.mxu0 %v3188
      %3297 = vmatprep.subr.bf16.mxu0 %v3196
      %3298 = vmatpush1.bf16.msra.mxu0 %v3195
      %3299 = vmatprep.subr.bf16.mxu0 %v3203
      %3300 = vmatpush1.bf16.msra.mxu0 %v3202
      %3301 = vmatprep.subr.bf16.mxu0 %v3210
      %3302 = vmatpush1.bf16.msra.mxu0 %v3209
      %3303 = vmatprep.subr.bf16.mxu0 %v3217
      %3304 = vmatpush1.bf16.msra.mxu0 %v3216
      %3305 = vmatprep.subr.bf16.mxu0 %v3224
      %3306 = vmatpush1.bf16.msra.mxu0 %v3223
      %3307 = vmatprep.subr.bf16.mxu0 %v3231
      %3308 = vmatpush1.bf16.msra.mxu0 %v3230
      %3309 = vmatprep.subr.bf16.mxu0 0
      %3310 = vmatpush1.bf16.msra.mxu0 0
      %3311 = vmatprep.subr.bf16.mxu0 0
      %3312 = vmatpush1.bf16.msra.mxu0 0
      %3313 = vmatprep.subr.bf16.mxu0 0
      %3314 = vmatpush1.bf16.msra.mxu0 0
      %3315 = vmatprep.subr.bf16.mxu0 0
      %3316 = vmatpush1.bf16.msra.mxu0 0
      %3317 = vmatprep.subr.bf16.mxu0 0
      %3318 = vmatpush1.bf16.msra.mxu0 0
      %3319 = vmatprep.subr.bf16.mxu0 0
      %3320 = vmatpush1.bf16.msra.mxu0 0
      %3321 = vmatprep.subr.bf16.mxu0 0
      %3322 = vmatpush1.bf16.msra.mxu0 0
      %3323 = vmatprep.subr.bf16.mxu0 0
      %3324 = vmatpush1.bf16.msra.mxu0 0
      %3325 = vmatprep.mubr.bf16.mxu0 0
      %3326 = vmatmul.mubr.bf16.gmra.mrb[0].mxu0 %v2897
      %v3327 = vpop.f32.mrb[0].mxu0
      %v3328 = vadd.f32 %v2973, %v3327
      %v3329 = vpop.f32.mrb[0].mxu0
      %v3330 = vadd.f32 %v2977, %v3329
      %v3331 = vpop.f32.mrb[0].mxu0
      %v3332 = vadd.f32 %v2973, %v3331
      %v3333 = vpop.f32.mrb[0].mxu0
      %v3334 = vadd.f32 %v2977, %v3333
      %3335 = vmatprep.mubr.bf16.mxu0 0
      %3336 = vmatmul.mubr.bf16.gmra.mrb[0].mxu0 %v2898
      %v3337 = vpop.f32.mrb[0].mxu0
      %v3338 = vadd.f32 %v2973, %v3337
      %v3339 = vpop.f32.mrb[0].mxu0
      %v3340 = vadd.f32 %v2977, %v3339
      %v3341 = vpop.f32.mrb[0].mxu0
      %v3342 = vadd.f32 %v2973, %v3341
      %v3343 = vpop.f32.mrb[0].mxu0
      %v3344 = vadd.f32 %v2977, %v3343
      %3345 = vmatprep.mubr.bf16.mxu0 0
      %3346 = vmatmul.mubr.bf16.gmra.mrb[0].mxu0 %v2899
      %v3347 = vpop.f32.mrb[0].mxu0
      %v3348 = vadd.f32 %v2973, %v3347
      %v3349 = vpop.f32.mrb[0].mxu0
      %v3350 = vadd.f32 %v2977, %v3349
      %v3351 = vpop.f32.mrb[0].mxu0
      %v3352 = vadd.f32 %v2973, %v3351
      %v3353 = vpop.f32.mrb[0].mxu0
      %v3354 = vadd.f32 %v2977, %v3353
      %3355 = vmatprep.mubr.bf16.mxu0 0
      %3356 = vmatmul.mubr.bf16.gmra.mrb[0].mxu0 %v2900
      %v3357 = vpop.f32.mrb[0].mxu0
      %v3358 = vadd.f32 %v2973, %v3357
      %v3359 = vpop.f32.mrb[0].mxu0
      %v3360 = vadd.f32 %v2977, %v3359
      %v3361 = vpop.f32.mrb[0].mxu0
      %v3362 = vadd.f32 %v2973, %v3361
      %v3363 = vpop.f32.mrb[0].mxu0
      %v3364 = vadd.f32 %v2977, %v3363
      %3365 = vmatprep.mubr.bf16.mxu0 0
      %3366 = vmatmul.mubr.bf16.gmra.mrb[0].mxu0 %v2901
      %v3367 = vpop.f32.mrb[0].mxu0
      %v3368 = vadd.f32 %v2973, %v3367
      %v3369 = vpop.f32.mrb[0].mxu0
      %v3370 = vadd.f32 %v2977, %v3369
      %v3371 = vpop.f32.mrb[0].mxu0
      %v3372 = vadd.f32 %v2973, %v3371
      %v3373 = vpop.f32.mrb[0].mxu0
      %v3374 = vadd.f32 %v2977, %v3373
      %3375 = vmatprep.mubr.bf16.mxu0 0
      %3376 = vmatmul.mubr.bf16.gmra.mrb[0].mxu0 %v2902
      %v3377 = vpop.f32.mrb[0].mxu0
      %v3378 = vadd.f32 %v2973, %v3377
      %v3379 = vpop.f32.mrb[0].mxu0
      %v3380 = vadd.f32 %v2977, %v3379
      %v3381 = vpop.f32.mrb[0].mxu0
      %v3382 = vadd.f32 %v2973, %v3381
      %v3383 = vpop.f32.mrb[0].mxu0
      %v3384 = vadd.f32 %v2977, %v3383
      %3385 = vmatprep.mubr.bf16.mxu0 0
      %3386 = vmatmul.mubr.bf16.gmra.mrb[0].mxu0 %v2903
      %v3387 = vpop.f32.mrb[0].mxu0
      %v3388 = vadd.f32 %v2973, %v3387
      %v3389 = vpop.f32.mrb[0].mxu0
      %v3390 = vadd.f32 %v2977, %v3389
      %v3391 = vpop.f32.mrb[0].mxu0
      %v3392 = vadd.f32 %v2973, %v3391
      %v3393 = vpop.f32.mrb[0].mxu0
      %v3394 = vadd.f32 %v2977, %v3393
      %3395 = vdwg.mxu0
      %3396 = vmatprep.subr.bf16.mxu0 %v3184
      %3397 = vmatpush1.bf16.msra.mxu0 %v3183
      %3398 = vmatprep.subr.bf16.mxu0 %v3191
      %3399 = vmatpush1.bf16.msra.mxu0 %v3190
      %3400 = vmatprep.subr.bf16.mxu0 %v3198
      %3401 = vmatpush1.bf16.msra.mxu0 %v3197
      %3402 = vmatprep.subr.bf16.mxu0 %v3205
      %3403 = vmatpush1.bf16.msra.mxu0 %v3204
      %3404 = vmatprep.subr.bf16.mxu0 %v3212
      %3405 = vmatpush1.bf16.msra.mxu0 %v3211
      %3406 = vmatprep.subr.bf16.mxu0 %v3219
      %3407 = vmatpush1.bf16.msra.mxu0 %v3218
      %3408 = vmatprep.subr.bf16.mxu0 %v3226
      %3409 = vmatpush1.bf16.msra.mxu0 %v3225
      %3410 = vmatprep.subr.bf16.mxu0 %v3233
      %3411 = vmatpush1.bf16.msra.mxu0 %v3232
      %3412 = vmatprep.subr.bf16.mxu0 0
      %3413 = vmatpush1.bf16.msra.mxu0 0
      %3414 = vmatprep.subr.bf16.mxu0 0
      %3415 = vmatpush1.bf16.msra.mxu0 0
      %3416 = vmatprep.subr.bf16.mxu0 0
      %3417 = vmatpush1.bf16.msra.mxu0 0
      %3418 = vmatprep.subr.bf16.mxu0 0
      %3419 = vmatpush1.bf16.msra.mxu0 0
      %3420 = vmatprep.subr.bf16.mxu0 0
      %3421 = vmatpush1.bf16.msra.mxu0 0
      %3422 = vmatprep.subr.bf16.mxu0 0
      %3423 = vmatpush1.bf16.msra.mxu0 0
      %3424 = vmatprep.subr.bf16.mxu0 0
      %3425 = vmatpush1.bf16.msra.mxu0 0
      %3426 = vmatprep.subr.bf16.mxu0 0
      %3427 = vmatpush1.bf16.msra.mxu0 0
      %3428 = vmatprep.mubr.bf16.mxu0 0
      %3429 = vmatmul.mubr.bf16.gmra.mrb[0].mxu0 %v2897
      %v3430 = vpop.f32.mrb[0].mxu0
      %v3431 = vadd.f32 %v2981, %v3430
      %v3432 = vpop.f32.mrb[0].mxu0
      %v3433 = vadd.f32 %v2985, %v3432
      %v3434 = vpop.f32.mrb[0].mxu0
      %v3435 = vadd.f32 %v2981, %v3434
      %v3436 = vpop.f32.mrb[0].mxu0
      %v3437 = vadd.f32 %v2985, %v3436
      %3438 = vmatprep.mubr.bf16.mxu0 0
      %3439 = vmatmul.mubr.bf16.gmra.mrb[0].mxu0 %v2898
      %v3440 = vpop.f32.mrb[0].mxu0
      %v3441 = vadd.f32 %v2981, %v3440
      %v3442 = vpop.f32.mrb[0].mxu0
      %v3443 = vadd.f32 %v2985, %v3442
      %v3444 = vpop.f32.mrb[0].mxu0
      %v3445 = vadd.f32 %v2981, %v3444
      %v3446 = vpop.f32.mrb[0].mxu0
      %v3447 = vadd.f32 %v2985, %v3446
      %3448 = vmatprep.mubr.bf16.mxu0 0
      %3449 = vmatmul.mubr.bf16.gmra.mrb[0].mxu0 %v2899
      %v3450 = vpop.f32.mrb[0].mxu0
      %v3451 = vadd.f32 %v2981, %v3450
      %v3452 = vpop.f32.mrb[0].mxu0
      %v3453 = vadd.f32 %v2985, %v3452
      %v3454 = vpop.f32.mrb[0].mxu0
      %v3455 = vadd.f32 %v2981, %v3454
      %v3456 = vpop.f32.mrb[0].mxu0
      %v3457 = vadd.f32 %v2985, %v3456
      %3458 = vmatprep.mubr.bf16.mxu0 0
      %3459 = vmatmul.mubr.bf16.gmra.mrb[0].mxu0 %v2900
      %v3460 = vpop.f32.mrb[0].mxu0
      %v3461 = vadd.f32 %v2981, %v3460
      %v3462 = vpop.f32.mrb[0].mxu0
      %v3463 = vadd.f32 %v2985, %v3462
      %v3464 = vpop.f32.mrb[0].mxu0
      %v3465 = vadd.f32 %v2981, %v3464
      %v3466 = vpop.f32.mrb[0].mxu0
      %v3467 = vadd.f32 %v2985, %v3466
      %3468 = vmatprep.mubr.bf16.mxu0 0
      %3469 = vmatmul.mubr.bf16.gmra.mrb[0].mxu0 %v2901
      %v3470 = vpop.f32.mrb[0].mxu0
      %v3471 = vadd.f32 %v2981, %v3470
      %v3472 = vpop.f32.mrb[0].mxu0
      %v3473 = vadd.f32 %v2985, %v3472
      %v3474 = vpop.f32.mrb[0].mxu0
      %v3475 = vadd.f32 %v2981, %v3474
      %v3476 = vpop.f32.mrb[0].mxu0
      %v3477 = vadd.f32 %v2985, %v3476
      %3478 = vmatprep.mubr.bf16.mxu0 0
      %3479 = vmatmul.mubr.bf16.gmra.mrb[0].mxu0 %v2902
      %v3480 = vpop.f32.mrb[0].mxu0
      %v3481 = vadd.f32 %v2981, %v3480
      %v3482 = vpop.f32.mrb[0].mxu0
      %v3483 = vadd.f32 %v2985, %v3482
      %v3484 = vpop.f32.mrb[0].mxu0
      %v3485 = vadd.f32 %v2981, %v3484
      %v3486 = vpop.f32.mrb[0].mxu0
      %v3487 = vadd.f32 %v2985, %v3486
      %3488 = vmatprep.mubr.bf16.mxu0 0
      %3489 = vmatmul.mubr.bf16.gmra.mrb[0].mxu0 %v2903
      %v3490 = vpop.f32.mrb[0].mxu0
      %v3491 = vadd.f32 %v2981, %v3490
      %v3492 = vpop.f32.mrb[0].mxu0
      %v3493 = vadd.f32 %v2985, %v3492
      %v3494 = vpop.f32.mrb[0].mxu0
      %v3495 = vadd.f32 %v2981, %v3494
      %v3496 = vpop.f32.mrb[0].mxu0
      %v3497 = vadd.f32 %v2985, %v3496
      %3498 = vdwg.mxu0
      %3499 = vmatprep.subr.bf16.mxu0 %v3186
      %3500 = vmatpush1.bf16.msra.mxu0 %v3185
      %3501 = vmatprep.subr.bf16.mxu0 %v3193
      %3502 = vmatpush1.bf16.msra.mxu0 %v3192
      %3503 = vmatprep.subr.bf16.mxu0 %v3200
      %3504 = vmatpush1.bf16.msra.mxu0 %v3199
      %3505 = vmatprep.subr.bf16.mxu0 %v3207
      %3506 = vmatpush1.bf16.msra.mxu0 %v3206
      %3507 = vmatprep.subr.bf16.mxu0 %v3214
      %3508 = vmatpush1.bf16.msra.mxu0 %v3213
      %3509 = vmatprep.subr.bf16.mxu0 %v3221
      %3510 = vmatpush1.bf16.msra.mxu0 %v3220
      %3511 = vmatprep.subr.bf16.mxu0 %v3228
      %3512 = vmatpush1.bf16.msra.mxu0 %v3227
      %3513 = vmatprep.subr.bf16.mxu0 %v3235
      %3514 = vmatpush1.bf16.msra.mxu0 %v3234
      %3515 = vmatprep.subr.bf16.mxu0 0
      %3516 = vmatpush1.bf16.msra.mxu0 0
      %3517 = vmatprep.subr.bf16.mxu0 0
      %3518 = vmatpush1.bf16.msra.mxu0 0
      %3519 = vmatprep.subr.bf16.mxu0 0
      %3520 = vmatpush1.bf16.msra.mxu0 0
      %3521 = vmatprep.subr.bf16.mxu0 0
      %3522 = vmatpush1.bf16.msra.mxu0 0
      %3523 = vmatprep.subr.bf16.mxu0 0
      %3524 = vmatpush1.bf16.msra.mxu0 0
      %3525 = vmatprep.subr.bf16.mxu0 0
      %3526 = vmatpush1.bf16.msra.mxu0 0
      %3527 = vmatprep.subr.bf16.mxu0 0
      %3528 = vmatpush1.bf16.msra.mxu0 0
      %3529 = vmatprep.subr.bf16.mxu0 0
      %3530 = vmatpush1.bf16.msra.mxu0 0
      %3531 = vmatprep.mubr.bf16.mxu0 0
      %3532 = vmatmul.mubr.bf16.gmra.mrb[0].mxu0 %v2897
      %v3533 = vpop.f32.mrb[0].mxu0
      %v3534 = vadd.f32 %v2989, %v3533
      %v3535 = vpop.f32.mrb[0].mxu0
      %v3536 = vadd.f32 %v2993, %v3535
      %v3537 = vpop.f32.mrb[0].mxu0
      %v3538 = vadd.f32 %v2989, %v3537
      %v3539 = vpop.f32.mrb[0].mxu0
      %v3540 = vadd.f32 %v2993, %v3539
      %3541 = vmatprep.mubr.bf16.mxu0 0
      %3542 = vmatmul.mubr.bf16.gmra.mrb[0].mxu0 %v2898
      %v3543 = vpop.f32.mrb[0].mxu0
      %v3544 = vadd.f32 %v2989, %v3543
      %v3545 = vpop.f32.mrb[0].mxu0
      %v3546 = vadd.f32 %v2993, %v3545
      %v3547 = vpop.f32.mrb[0].mxu0
      %v3548 = vadd.f32 %v2989, %v3547
      %v3549 = vpop.f32.mrb[0].mxu0
      %v3550 = vadd.f32 %v2993, %v3549
      %3551 = vmatprep.mubr.bf16.mxu0 0
      %3552 = vmatmul.mubr.bf16.gmra.mrb[0].mxu0 %v2899
      %v3553 = vpop.f32.mrb[0].mxu0
      %v3554 = vadd.f32 %v2989, %v3553
      %v3555 = vpop.f32.mrb[0].mxu0
      %v3556 = vadd.f32 %v2993, %v3555
      %v3557 = vpop.f32.mrb[0].mxu0
      %v3558 = vadd.f32 %v2989, %v3557
      %v3559 = vpop.f32.mrb[0].mxu0
      %v3560 = vadd.f32 %v2993, %v3559
      %3561 = vmatprep.mubr.bf16.mxu0 0
      %3562 = vmatmul.mubr.bf16.gmra.mrb[0].mxu0 %v2900
      %v3563 = vpop.f32.mrb[0].mxu0
      %v3564 = vadd.f32 %v2989, %v3563
      %v3565 = vpop.f32.mrb[0].mxu0
      %v3566 = vadd.f32 %v2993, %v3565
      %v3567 = vpop.f32.mrb[0].mxu0
      %v3568 = vadd.f32 %v2989, %v3567
      %v3569 = vpop.f32.mrb[0].mxu0
      %v3570 = vadd.f32 %v2993, %v3569
      %3571 = vmatprep.mubr.bf16.mxu0 0
      %3572 = vmatmul.mubr.bf16.gmra.mrb[0].mxu0 %v2901
      %v3573 = vpop.f32.mrb[0].mxu0
      %v3574 = vadd.f32 %v2989, %v3573
      %v3575 = vpop.f32.mrb[0].mxu0
      %v3576 = vadd.f32 %v2993, %v3575
      %v3577 = vpop.f32.mrb[0].mxu0
      %v3578 = vadd.f32 %v2989, %v3577
      %v3579 = vpop.f32.mrb[0].mxu0
      %v3580 = vadd.f32 %v2993, %v3579
      %3581 = vmatprep.mubr.bf16.mxu0 0
      %3582 = vmatmul.mubr.bf16.gmra.mrb[0].mxu0 %v2902
      %v3583 = vpop.f32.mrb[0].mxu0
      %v3584 = vadd.f32 %v2989, %v3583
      %v3585 = vpop.f32.mrb[0].mxu0
      %v3586 = vadd.f32 %v2993, %v3585
      %v3587 = vpop.f32.mrb[0].mxu0
      %v3588 = vadd.f32 %v2989, %v3587
      %v3589 = vpop.f32.mrb[0].mxu0
      %v3590 = vadd.f32 %v2993, %v3589
      %3591 = vmatprep.mubr.bf16.mxu0 0
      %3592 = vmatmul.mubr.bf16.gmra.mrb[0].mxu0 %v2903
      %v3593 = vpop.f32.mrb[0].mxu0
      %v3594 = vadd.f32 %v2989, %v3593
      %v3595 = vpop.f32.mrb[0].mxu0
      %v3596 = vadd.f32 %v2993, %v3595
      %v3597 = vpop.f32.mrb[0].mxu0
      %v3598 = vadd.f32 %v2989, %v3597
      %v3599 = vpop.f32.mrb[0].mxu0
      %v3600 = vadd.f32 %v2993, %v3599
      %3601 = vdwg.mxu0
      %3602 = vmatprep.subr.bf16.mxu0 0
      %3603 = vmatpush1.bf16.msra.mxu0 %v3187
      %3604 = vmatprep.subr.bf16.mxu0 0
      %3605 = vmatpush1.bf16.msra.mxu0 %v3194
      %3606 = vmatprep.subr.bf16.mxu0 0
      %3607 = vmatpush1.bf16.msra.mxu0 %v3201
      %3608 = vmatprep.subr.bf16.mxu0 0
      %3609 = vmatpush1.bf16.msra.mxu0 %v3208
      %3610 = vmatprep.subr.bf16.mxu0 0
      %3611 = vmatpush1.bf16.msra.mxu0 %v3215
      %3612 = vmatprep.subr.bf16.mxu0 0
      %3613 = vmatpush1.bf16.msra.mxu0 %v3222
      %3614 = vmatprep.subr.bf16.mxu0 0
      %3615 = vmatpush1.bf16.msra.mxu0 %v3229
      %3616 = vmatprep.subr.bf16.mxu0 0
      %3617 = vmatpush1.bf16.msra.mxu0 %v3236
      %3618 = vmatprep.subr.bf16.mxu0 0
      %3619 = vmatpush1.bf16.msra.mxu0 0
      %3620 = vmatprep.subr.bf16.mxu0 0
      %3621 = vmatpush1.bf16.msra.mxu0 0
      %3622 = vmatprep.subr.bf16.mxu0 0
      %3623 = vmatpush1.bf16.msra.mxu0 0
      %3624 = vmatprep.subr.bf16.mxu0 0
      %3625 = vmatpush1.bf16.msra.mxu0 0
      %3626 = vmatprep.subr.bf16.mxu0 0
      %3627 = vmatpush1.bf16.msra.mxu0 0
      %3628 = vmatprep.subr.bf16.mxu0 0
      %3629 = vmatpush1.bf16.msra.mxu0 0
      %3630 = vmatprep.subr.bf16.mxu0 0
      %3631 = vmatpush1.bf16.msra.mxu0 0
      %3632 = vmatprep.subr.bf16.mxu0 0
      %3633 = vmatpush1.bf16.msra.mxu0 0
      %3634 = vmatprep.mubr.bf16.mxu0 0
      %3635 = vmatmul.mubr.bf16.gmra.mrb[0].mxu0 %v2897
      %v3636 = vpop.f32.mrb[0].mxu0
      %v3637 = vadd.f32 %v2997, %v3636
      %v3638 = vpop.f32.mrb[0].mxu0
      %v3639 = vpop.f32.mrb[0].mxu0
      %v3640 = vadd.f32 %v2997, %v3639
      %v3641 = vpop.f32.mrb[0].mxu0
      %3642 = vmatprep.mubr.bf16.mxu0 0
      %3643 = vmatmul.mubr.bf16.gmra.mrb[0].mxu0 %v2898
      %v3644 = vpop.f32.mrb[0].mxu0
      %v3645 = vadd.f32 %v2997, %v3644
      %v3646 = vpop.f32.mrb[0].mxu0
      %v3647 = vpop.f32.mrb[0].mxu0
      %v3648 = vadd.f32 %v2997, %v3647
      %v3649 = vpop.f32.mrb[0].mxu0
      %3650 = vmatprep.mubr.bf16.mxu0 0
      %3651 = vmatmul.mubr.bf16.gmra.mrb[0].mxu0 %v2899
      %v3652 = vpop.f32.mrb[0].mxu0
      %v3653 = vadd.f32 %v2997, %v3652
      %v3654 = vpop.f32.mrb[0].mxu0
      %v3655 = vpop.f32.mrb[0].mxu0
      %v3656 = vadd.f32 %v2997, %v3655
      %v3657 = vpop.f32.mrb[0].mxu0
      %3658 = vmatprep.mubr.bf16.mxu0 0
      %3659 = vmatmul.mubr.bf16.gmra.mrb[0].mxu0 %v2900
      %v3660 = vpop.f32.mrb[0].mxu0
      %v3661 = vadd.f32 %v2997, %v3660
      %v3662 = vpop.f32.mrb[0].mxu0
      %v3663 = vpop.f32.mrb[0].mxu0
      %v3664 = vadd.f32 %v2997, %v3663
      %v3665 = vpop.f32.mrb[0].mxu0
      %3666 = vmatprep.mubr.bf16.mxu0 0
      %3667 = vmatmul.mubr.bf16.gmra.mrb[0].mxu0 %v2901
      %v3668 = vpop.f32.mrb[0].mxu0
      %v3669 = vadd.f32 %v2997, %v3668
      %v3670 = vpop.f32.mrb[0].mxu0
      %v3671 = vpop.f32.mrb[0].mxu0
      %v3672 = vadd.f32 %v2997, %v3671
      %v3673 = vpop.f32.mrb[0].mxu0
      %3674 = vmatprep.mubr.bf16.mxu0 0
      %3675 = vmatmul.mubr.bf16.gmra.mrb[0].mxu0 %v2902
      %v3676 = vpop.f32.mrb[0].mxu0
      %v3677 = vadd.f32 %v2997, %v3676
      %v3678 = vpop.f32.mrb[0].mxu0
      %v3679 = vpop.f32.mrb[0].mxu0
      %v3680 = vadd.f32 %v2997, %v3679
      %v3681 = vpop.f32.mrb[0].mxu0
      %3682 = vmatprep.mubr.bf16.mxu0 0
      %3683 = vmatmul.mubr.bf16.gmra.mrb[0].mxu0 %v2903
      %v3684 = vpop.f32.mrb[0].mxu0
      %v3685 = vadd.f32 %v2997, %v3684
      %v3686 = vpop.f32.mrb[0].mxu0
      %v3687 = vpop.f32.mrb[0].mxu0
      %v3688 = vadd.f32 %v2997, %v3687
      %v3689 = vpop.f32.mrb[0].mxu0
      %3690 = vdwg.mxu0
      %v3691 = vmul.f32 %v3328, 0.5
      %v3692 = vmul.f32 %v3330, 0.5
      %v3693 = vmul.f32 %v3431, 0.5
      %v3694 = vmul.f32 %v3433, 0.5
      %v3695 = vmul.f32 %v3534, 0.5
      %v3696 = vmul.f32 %v3536, 0.5
      %v3697 = vmul.f32 %v3637, 0.5
      %v3698 = vmul.f32 %v3332, 0.5
      %v3699 = vmul.f32 %v3334, 0.5
      %v3700 = vmul.f32 %v3435, 0.5
      %v3701 = vmul.f32 %v3437, 0.5
      %v3702 = vmul.f32 %v3538, 0.5
      %v3703 = vmul.f32 %v3540, 0.5
      %v3704 = vmul.f32 %v3640, 0.5
      %v3705 = vmul.f32 %v3338, 0.5
      %v3706 = vmul.f32 %v3340, 0.5
      %v3707 = vmul.f32 %v3441, 0.5
      %v3708 = vmul.f32 %v3443, 0.5
      %v3709 = vmul.f32 %v3544, 0.5
      %v3710 = vmul.f32 %v3546, 0.5
      %v3711 = vmul.f32 %v3645, 0.5
      %v3712 = vmul.f32 %v3342, 0.5
      %v3713 = vmul.f32 %v3344, 0.5
      %v3714 = vmul.f32 %v3445, 0.5
      %v3715 = vmul.f32 %v3447, 0.5
      %v3716 = vmul.f32 %v3548, 0.5
      %v3717 = vmul.f32 %v3550, 0.5
      %v3718 = vmul.f32 %v3648, 0.5
      %v3719 = vmul.f32 %v3348, 0.5
      %v3720 = vmul.f32 %v3350, 0.5
      %v3721 = vmul.f32 %v3451, 0.5
      %v3722 = vmul.f32 %v3453, 0.5
      %v3723 = vmul.f32 %v3554, 0.5
      %v3724 = vmul.f32 %v3556, 0.5
      %v3725 = vmul.f32 %v3653, 0.5
      %v3726 = vmul.f32 %v3352, 0.5
      %v3727 = vmul.f32 %v3354, 0.5
      %v3728 = vmul.f32 %v3455, 0.5
      %v3729 = vmul.f32 %v3457, 0.5
      %v3730 = vmul.f32 %v3558, 0.5
      %v3731 = vmul.f32 %v3560, 0.5
      %v3732 = vmul.f32 %v3656, 0.5
      %v3733 = vmul.f32 %v3358, 0.5
      %v3734 = vmul.f32 %v3360, 0.5
      %v3735 = vmul.f32 %v3461, 0.5
      %v3736 = vmul.f32 %v3463, 0.5
      %v3737 = vmul.f32 %v3564, 0.5
      %v3738 = vmul.f32 %v3566, 0.5
      %v3739 = vmul.f32 %v3661, 0.5
      %v3740 = vmul.f32 %v3362, 0.5
      %v3741 = vmul.f32 %v3364, 0.5
      %v3742 = vmul.f32 %v3465, 0.5
      %v3743 = vmul.f32 %v3467, 0.5
      %v3744 = vmul.f32 %v3568, 0.5
      %v3745 = vmul.f32 %v3570, 0.5
      %v3746 = vmul.f32 %v3664, 0.5
      %v3747 = vmul.f32 %v3368, 0.5
      %v3748 = vmul.f32 %v3370, 0.5
      %v3749 = vmul.f32 %v3471, 0.5
      %v3750 = vmul.f32 %v3473, 0.5
      %v3751 = vmul.f32 %v3574, 0.5
      %v3752 = vmul.f32 %v3576, 0.5
      %v3753 = vmul.f32 %v3669, 0.5
      %v3754 = vmul.f32 %v3372, 0.5
      %v3755 = vmul.f32 %v3374, 0.5
      %v3756 = vmul.f32 %v3475, 0.5
      %v3757 = vmul.f32 %v3477, 0.5
      %v3758 = vmul.f32 %v3578, 0.5
      %v3759 = vmul.f32 %v3580, 0.5
      %v3760 = vmul.f32 %v3672, 0.5
      %v3761 = vmul.f32 %v3378, 0.5
      %v3762 = vmul.f32 %v3380, 0.5
      %v3763 = vmul.f32 %v3481, 0.5
      %v3764 = vmul.f32 %v3483, 0.5
      %v3765 = vmul.f32 %v3584, 0.5
      %v3766 = vmul.f32 %v3586, 0.5
      %v3767 = vmul.f32 %v3677, 0.5
      %v3768 = vmul.f32 %v3382, 0.5
      %v3769 = vmul.f32 %v3384, 0.5
      %v3770 = vmul.f32 %v3485, 0.5
      %v3771 = vmul.f32 %v3487, 0.5
      %v3772 = vmul.f32 %v3588, 0.5
      %v3773 = vmul.f32 %v3590, 0.5
      %v3774 = vmul.f32 %v3680, 0.5
      %v3775 = vmul.f32 %v3388, 0.5
      %v3776 = vmul.f32 %v3390, 0.5
      %v3777 = vmul.f32 %v3491, 0.5
      %v3778 = vmul.f32 %v3493, 0.5
      %v3779 = vmul.f32 %v3594, 0.5
      %v3780 = vmul.f32 %v3596, 0.5
      %v3781 = vmul.f32 %v3685, 0.5
      %v3782 = vmul.f32 %v3392, 0.5
      %v3783 = vmul.f32 %v3394, 0.5
      %v3784 = vmul.f32 %v3495, 0.5
      %v3785 = vmul.f32 %v3497, 0.5
      %v3786 = vmul.f32 %v3598, 0.5
      %v3787 = vmul.f32 %v3600, 0.5
      %v3788 = vmul.f32 %v3688, 0.5
      %v3789 = vtanh.pop %v3691
      %v3790 = vtanh.pop %v3692
      %v3791 = vtanh.pop %v3693
      %v3792 = vtanh.pop %v3694
      %v3793 = vtanh.pop %v3695
      %v3794 = vtanh.pop %v3696
      %v3795 = vtanh.pop %v3697
      %v3796 = vtanh.pop %v3698
      %v3797 = vtanh.pop %v3699
      %v3798 = vtanh.pop %v3700
      %v3799 = vtanh.pop %v3701
      %v3800 = vtanh.pop %v3702
      %v3801 = vtanh.pop %v3703
      %v3802 = vtanh.pop %v3704
      %v3803 = vtanh.pop %v3705
      %v3804 = vtanh.pop %v3706
      %v3805 = vtanh.pop %v3707
      %v3806 = vtanh.pop %v3708
      %v3807 = vtanh.pop %v3709
      %v3808 = vtanh.pop %v3710
      %v3809 = vtanh.pop %v3711
      %v3810 = vtanh.pop %v3712
      %v3811 = vtanh.pop %v3713
      %v3812 = vtanh.pop %v3714
      %v3813 = vtanh.pop %v3715
      %v3814 = vtanh.pop %v3716
      %v3815 = vtanh.pop %v3717
      %v3816 = vtanh.pop %v3718
      %v3817 = vtanh.pop %v3719
      %v3818 = vtanh.pop %v3720
      %v3819 = vtanh.pop %v3721
      %v3820 = vtanh.pop %v3722
      %v3821 = vtanh.pop %v3723
      %v3822 = vtanh.pop %v3724
      %v3823 = vtanh.pop %v3725
      %v3824 = vtanh.pop %v3726
      %v3825 = vtanh.pop %v3727
      %v3826 = vtanh.pop %v3728
      %v3827 = vtanh.pop %v3729
      %v3828 = vtanh.pop %v3730
      %v3829 = vtanh.pop %v3731
      %v3830 = vtanh.pop %v3732
      %v3831 = vtanh.pop %v3733
      %v3832 = vtanh.pop %v3734
      %v3833 = vtanh.pop %v3735
      %v3834 = vtanh.pop %v3736
      %v3835 = vtanh.pop %v3737
      %v3836 = vtanh.pop %v3738
      %v3837 = vtanh.pop %v3739
      %v3838 = vtanh.pop %v3740
      %v3839 = vtanh.pop %v3741
      %v3840 = vtanh.pop %v3742
      %v3841 = vtanh.pop %v3743
      %v3842 = vtanh.pop %v3744
      %v3843 = vtanh.pop %v3745
      %v3844 = vtanh.pop %v3746
      %v3845 = vtanh.pop %v3747
      %v3846 = vtanh.pop %v3748
      %v3847 = vtanh.pop %v3749
      %v3848 = vtanh.pop %v3750
      %v3849 = vtanh.pop %v3751
      %v3850 = vtanh.pop %v3752
      %v3851 = vtanh.pop %v3753
      %v3852 = vtanh.pop %v3754
      %v3853 = vtanh.pop %v3755
      %v3854 = vtanh.pop %v3756
      %v3855 = vtanh.pop %v3757
      %v3856 = vtanh.pop %v3758
      %v3857 = vtanh.pop %v3759
      %v3858 = vtanh.pop %v3760
      %v3859 = vtanh.pop %v3761
      %v3860 = vtanh.pop %v3762
      %v3861 = vtanh.pop %v3763
      %v3862 = vtanh.pop %v3764
      %v3863 = vtanh.pop %v3765
      %v3864 = vtanh.pop %v3766
      %v3865 = vtanh.pop %v3767
      %v3866 = vtanh.pop %v3768
      %v3867 = vtanh.pop %v3769
      %v3868 = vtanh.pop %v3770
      %v3869 = vtanh.pop %v3771
      %v3870 = vtanh.pop %v3772
      %v3871 = vtanh.pop %v3773
      %v3872 = vtanh.pop %v3774
      %v3873 = vtanh.pop %v3775
      %v3874 = vtanh.pop %v3776
      %v3875 = vtanh.pop %v3777
      %v3876 = vtanh.pop %v3778
      %v3877 = vtanh.pop %v3779
      %v3878 = vtanh.pop %v3780
      %v3879 = vtanh.pop %v3781
      %v3880 = vtanh.pop %v3782
      %v3881 = vtanh.pop %v3783
      %v3882 = vtanh.pop %v3784
      %v3883 = vtanh.pop %v3785
      %v3884 = vtanh.pop %v3786
      %v3885 = vtanh.pop %v3787
      %v3886 = vtanh.pop %v3788
      %v3887 = vmul.f32 %v3789, 0.5
      %v3888 = vmul.f32 %v3790, 0.5
      %v3889 = vmul.f32 %v3791, 0.5
      %v3890 = vmul.f32 %v3792, 0.5
      %v3891 = vmul.f32 %v3793, 0.5
      %v3892 = vmul.f32 %v3794, 0.5
      %v3893 = vmul.f32 %v3795, 0.5
      %v3894 = vmul.f32 %v3796, 0.5
      %v3895 = vmul.f32 %v3797, 0.5
      %v3896 = vmul.f32 %v3798, 0.5
      %v3897 = vmul.f32 %v3799, 0.5
      %v3898 = vmul.f32 %v3800, 0.5
      %v3899 = vmul.f32 %v3801, 0.5
      %v3900 = vmul.f32 %v3802, 0.5
      %v3901 = vmul.f32 %v3803, 0.5
      %v3902 = vmul.f32 %v3804, 0.5
      %v3903 = vmul.f32 %v3805, 0.5
      %v3904 = vmul.f32 %v3806, 0.5
      %v3905 = vmul.f32 %v3807, 0.5
      %v3906 = vmul.f32 %v3808, 0.5
      %v3907 = vmul.f32 %v3809, 0.5
      %v3908 = vmul.f32 %v3810, 0.5
      %v3909 = vmul.f32 %v3811, 0.5
      %v3910 = vmul.f32 %v3812, 0.5
      %v3911 = vmul.f32 %v3813, 0.5
      %v3912 = vmul.f32 %v3814, 0.5
      %v3913 = vmul.f32 %v3815, 0.5
      %v3914 = vmul.f32 %v3816, 0.5
      %v3915 = vmul.f32 %v3817, 0.5
      %v3916 = vmul.f32 %v3818, 0.5
      %v3917 = vmul.f32 %v3819, 0.5
      %v3918 = vmul.f32 %v3820, 0.5
      %v3919 = vmul.f32 %v3821, 0.5
      %v3920 = vmul.f32 %v3822, 0.5
      %v3921 = vmul.f32 %v3823, 0.5
      %v3922 = vmul.f32 %v3824, 0.5
      %v3923 = vmul.f32 %v3825, 0.5
      %v3924 = vmul.f32 %v3826, 0.5
      %v3925 = vmul.f32 %v3827, 0.5
      %v3926 = vmul.f32 %v3828, 0.5
      %v3927 = vmul.f32 %v3829, 0.5
      %v3928 = vmul.f32 %v3830, 0.5
      %v3929 = vmul.f32 %v3831, 0.5
      %v3930 = vmul.f32 %v3832, 0.5
      %v3931 = vmul.f32 %v3833, 0.5
      %v3932 = vmul.f32 %v3834, 0.5
      %v3933 = vmul.f32 %v3835, 0.5
      %v3934 = vmul.f32 %v3836, 0.5
      %v3935 = vmul.f32 %v3837, 0.5
      %v3936 = vmul.f32 %v3838, 0.5
      %v3937 = vmul.f32 %v3839, 0.5
      %v3938 = vmul.f32 %v3840, 0.5
      %v3939 = vmul.f32 %v3841, 0.5
      %v3940 = vmul.f32 %v3842, 0.5
      %v3941 = vmul.f32 %v3843, 0.5
      %v3942 = vmul.f32 %v3844, 0.5
      %v3943 = vmul.f32 %v3845, 0.5
      %v3944 = vmul.f32 %v3846, 0.5
      %v3945 = vmul.f32 %v3847, 0.5
      %v3946 = vmul.f32 %v3848, 0.5
      %v3947 = vmul.f32 %v3849, 0.5
      %v3948 = vmul.f32 %v3850, 0.5
      %v3949 = vmul.f32 %v3851, 0.5
      %v3950 = vmul.f32 %v3852, 0.5
      %v3951 = vmul.f32 %v3853, 0.5
      %v3952 = vmul.f32 %v3854, 0.5
      %v3953 = vmul.f32 %v3855, 0.5
      %v3954 = vmul.f32 %v3856, 0.5
      %v3955 = vmul.f32 %v3857, 0.5
      %v3956 = vmul.f32 %v3858, 0.5
      %v3957 = vmul.f32 %v3859, 0.5
      %v3958 = vmul.f32 %v3860, 0.5
      %v3959 = vmul.f32 %v3861, 0.5
      %v3960 = vmul.f32 %v3862, 0.5
      %v3961 = vmul.f32 %v3863, 0.5
      %v3962 = vmul.f32 %v3864, 0.5
      %v3963 = vmul.f32 %v3865, 0.5
      %v3964 = vmul.f32 %v3866, 0.5
      %v3965 = vmul.f32 %v3867, 0.5
      %v3966 = vmul.f32 %v3868, 0.5
      %v3967 = vmul.f32 %v3869, 0.5
      %v3968 = vmul.f32 %v3870, 0.5
      %v3969 = vmul.f32 %v3871, 0.5
      %v3970 = vmul.f32 %v3872, 0.5
      %v3971 = vmul.f32 %v3873, 0.5
      %v3972 = vmul.f32 %v3874, 0.5
      %v3973 = vmul.f32 %v3875, 0.5
      %v3974 = vmul.f32 %v3876, 0.5
      %v3975 = vmul.f32 %v3877, 0.5
      %v3976 = vmul.f32 %v3878, 0.5
      %v3977 = vmul.f32 %v3879, 0.5
      %v3978 = vmul.f32 %v3880, 0.5
      %v3979 = vmul.f32 %v3881, 0.5
      %v3980 = vmul.f32 %v3882, 0.5
      %v3981 = vmul.f32 %v3883, 0.5
      %v3982 = vmul.f32 %v3884, 0.5
      %v3983 = vmul.f32 %v3885, 0.5
      %v3984 = vmul.f32 %v3886, 0.5
      %v3985 = vadd.f32 %v3887, 0.5
      %v3986 = vadd.f32 %v3888, 0.5
      %v3987 = vadd.f32 %v3889, 0.5
      %v3988 = vadd.f32 %v3890, 0.5
      %v3989 = vadd.f32 %v3891, 0.5
      %v3990 = vadd.f32 %v3892, 0.5
      %v3991 = vadd.f32 %v3893, 0.5
      %v3992 = vadd.f32 %v3894, 0.5
      %v3993 = vadd.f32 %v3895, 0.5
      %v3994 = vadd.f32 %v3896, 0.5
      %v3995 = vadd.f32 %v3897, 0.5
      %v3996 = vadd.f32 %v3898, 0.5
      %v3997 = vadd.f32 %v3899, 0.5
      %v3998 = vadd.f32 %v3900, 0.5
      %v3999 = vadd.f32 %v3901, 0.5
      %v4000 = vadd.f32 %v3902, 0.5
      %v4001 = vadd.f32 %v3903, 0.5
      %v4002 = vadd.f32 %v3904, 0.5
      %v4003 = vadd.f32 %v3905, 0.5
      %v4004 = vadd.f32 %v3906, 0.5
      %v4005 = vadd.f32 %v3907, 0.5
      %v4006 = vadd.f32 %v3908, 0.5
      %v4007 = vadd.f32 %v3909, 0.5
      %v4008 = vadd.f32 %v3910, 0.5
      %v4009 = vadd.f32 %v3911, 0.5
      %v4010 = vadd.f32 %v3912, 0.5
      %v4011 = vadd.f32 %v3913, 0.5
      %v4012 = vadd.f32 %v3914, 0.5
      %v4013 = vadd.f32 %v3915, 0.5
      %v4014 = vadd.f32 %v3916, 0.5
      %v4015 = vadd.f32 %v3917, 0.5
      %v4016 = vadd.f32 %v3918, 0.5
      %v4017 = vadd.f32 %v3919, 0.5
      %v4018 = vadd.f32 %v3920, 0.5
      %v4019 = vadd.f32 %v3921, 0.5
      %v4020 = vadd.f32 %v3922, 0.5
      %v4021 = vadd.f32 %v3923, 0.5
      %v4022 = vadd.f32 %v3924, 0.5
      %v4023 = vadd.f32 %v3925, 0.5
      %v4024 = vadd.f32 %v3926, 0.5
      %v4025 = vadd.f32 %v3927, 0.5
      %v4026 = vadd.f32 %v3928, 0.5
      %v4027 = vadd.f32 %v3929, 0.5
      %v4028 = vadd.f32 %v3930, 0.5
      %v4029 = vadd.f32 %v3931, 0.5
      %v4030 = vadd.f32 %v3932, 0.5
      %v4031 = vadd.f32 %v3933, 0.5
      %v4032 = vadd.f32 %v3934, 0.5
      %v4033 = vadd.f32 %v3935, 0.5
      %v4034 = vadd.f32 %v3936, 0.5
      %v4035 = vadd.f32 %v3937, 0.5
      %v4036 = vadd.f32 %v3938, 0.5
      %v4037 = vadd.f32 %v3939, 0.5
      %v4038 = vadd.f32 %v3940, 0.5
      %v4039 = vadd.f32 %v3941, 0.5
      %v4040 = vadd.f32 %v3942, 0.5
      %v4041 = vadd.f32 %v3943, 0.5
      %v4042 = vadd.f32 %v3944, 0.5
      %v4043 = vadd.f32 %v3945, 0.5
      %v4044 = vadd.f32 %v3946, 0.5
      %v4045 = vadd.f32 %v3947, 0.5
      %v4046 = vadd.f32 %v3948, 0.5
      %v4047 = vadd.f32 %v3949, 0.5
      %v4048 = vadd.f32 %v3950, 0.5
      %v4049 = vadd.f32 %v3951, 0.5
      %v4050 = vadd.f32 %v3952, 0.5
      %v4051 = vadd.f32 %v3953, 0.5
      %v4052 = vadd.f32 %v3954, 0.5
      %v4053 = vadd.f32 %v3955, 0.5
      %v4054 = vadd.f32 %v3956, 0.5
      %v4055 = vadd.f32 %v3957, 0.5
      %v4056 = vadd.f32 %v3958, 0.5
      %v4057 = vadd.f32 %v3959, 0.5
      %v4058 = vadd.f32 %v3960, 0.5
      %v4059 = vadd.f32 %v3961, 0.5
      %v4060 = vadd.f32 %v3962, 0.5
      %v4061 = vadd.f32 %v3963, 0.5
      %v4062 = vadd.f32 %v3964, 0.5
      %v4063 = vadd.f32 %v3965, 0.5
      %v4064 = vadd.f32 %v3966, 0.5
      %v4065 = vadd.f32 %v3967, 0.5
      %v4066 = vadd.f32 %v3968, 0.5
      %v4067 = vadd.f32 %v3969, 0.5
      %v4068 = vadd.f32 %v3970, 0.5
      %v4069 = vadd.f32 %v3971, 0.5
      %v4070 = vadd.f32 %v3972, 0.5
      %v4071 = vadd.f32 %v3973, 0.5
      %v4072 = vadd.f32 %v3974, 0.5
      %v4073 = vadd.f32 %v3975, 0.5
      %v4074 = vadd.f32 %v3976, 0.5
      %v4075 = vadd.f32 %v3977, 0.5
      %v4076 = vadd.f32 %v3978, 0.5
      %v4077 = vadd.f32 %v3979, 0.5
      %v4078 = vadd.f32 %v3980, 0.5
      %v4079 = vadd.f32 %v3981, 0.5
      %v4080 = vadd.f32 %v3982, 0.5
      %v4081 = vadd.f32 %v3983, 0.5
      %v4082 = vadd.f32 %v3984, 0.5
      %v4083 = vpack.c.bf16 %v3992, %v3985
      %v4084 = vpack.c.bf16 %v3993, %v3986
      %v4085 = vpack.c.bf16 %v3994, %v3987
      %v4086 = vpack.c.bf16 %v3995, %v3988
      %v4087 = vpack.c.bf16 %v3996, %v3989
      %v4088 = vpack.c.bf16 %v3997, %v3990
      %v4089 = vpack.c.bf16 %v3998, %v3991
      %v4090 = vpack.c.bf16 %v4006, %v3999
      %v4091 = vpack.c.bf16 %v4007, %v4000
      %v4092 = vpack.c.bf16 %v4008, %v4001
      %v4093 = vpack.c.bf16 %v4009, %v4002
      %v4094 = vpack.c.bf16 %v4010, %v4003
      %v4095 = vpack.c.bf16 %v4011, %v4004
      %v4096 = vpack.c.bf16 %v4012, %v4005
      %v4097 = vpack.c.bf16 %v4020, %v4013
      %v4098 = vpack.c.bf16 %v4021, %v4014
      %v4099 = vpack.c.bf16 %v4022, %v4015
      %v4100 = vpack.c.bf16 %v4023, %v4016
      %v4101 = vpack.c.bf16 %v4024, %v4017
      %v4102 = vpack.c.bf16 %v4025, %v4018
      %v4103 = vpack.c.bf16 %v4026, %v4019
      %v4104 = vpack.c.bf16 %v4034, %v4027
      %v4105 = vpack.c.bf16 %v4035, %v4028
      %v4106 = vpack.c.bf16 %v4036, %v4029
      %v4107 = vpack.c.bf16 %v4037, %v4030
      %v4108 = vpack.c.bf16 %v4038, %v4031
      %v4109 = vpack.c.bf16 %v4039, %v4032
      %v4110 = vpack.c.bf16 %v4040, %v4033
      %v4111 = vpack.c.bf16 %v4048, %v4041
      %v4112 = vpack.c.bf16 %v4049, %v4042
      %v4113 = vpack.c.bf16 %v4050, %v4043
      %v4114 = vpack.c.bf16 %v4051, %v4044
      %v4115 = vpack.c.bf16 %v4052, %v4045
      %v4116 = vpack.c.bf16 %v4053, %v4046
      %v4117 = vpack.c.bf16 %v4054, %v4047
      %v4118 = vpack.c.bf16 %v4062, %v4055
      %v4119 = vpack.c.bf16 %v4063, %v4056
      %v4120 = vpack.c.bf16 %v4064, %v4057
      %v4121 = vpack.c.bf16 %v4065, %v4058
      %v4122 = vpack.c.bf16 %v4066, %v4059
      %v4123 = vpack.c.bf16 %v4067, %v4060
      %v4124 = vpack.c.bf16 %v4068, %v4061
      %v4125 = vpack.c.bf16 %v4076, %v4069
      %v4126 = vpack.c.bf16 %v4077, %v4070
      %v4127 = vpack.c.bf16 %v4078, %v4071
      %v4128 = vpack.c.bf16 %v4079, %v4072
      %v4129 = vpack.c.bf16 %v4080, %v4073
      %v4130 = vpack.c.bf16 %v4081, %v4074
      %v4131 = vpack.c.bf16 %v4082, %v4075
      %v4181 = vunpack.c.l.b16 %v4083
      %v4182 = vunpack.c.l.b16 %v4084
      %v4183 = vunpack.c.l.b16 %v4085
      %v4184 = vunpack.c.l.b16 %v4086
      %v4185 = vunpack.c.l.b16 %v4087
      %v4186 = vunpack.c.l.b16 %v4088
      %v4187 = vunpack.c.l.b16 %v4089
      %v4188 = vunpack.c.h.b16 %v4083
      %v4189 = vunpack.c.h.b16 %v4084
      %v4190 = vunpack.c.h.b16 %v4085
      %v4191 = vunpack.c.h.b16 %v4086
      %v4192 = vunpack.c.h.b16 %v4087
      %v4193 = vunpack.c.h.b16 %v4088
      %v4194 = vunpack.c.h.b16 %v4089
      %v4195 = vunpack.c.l.b16 %v4090
      %v4196 = vunpack.c.l.b16 %v4091
      %v4197 = vunpack.c.l.b16 %v4092
      %v4198 = vunpack.c.l.b16 %v4093
      %v4199 = vunpack.c.l.b16 %v4094
      %v4200 = vunpack.c.l.b16 %v4095
      %v4201 = vunpack.c.l.b16 %v4096
      %v4202 = vunpack.c.h.b16 %v4090
      %v4203 = vunpack.c.h.b16 %v4091
      %v4204 = vunpack.c.h.b16 %v4092
      %v4205 = vunpack.c.h.b16 %v4093
      %v4206 = vunpack.c.h.b16 %v4094
      %v4207 = vunpack.c.h.b16 %v4095
      %v4208 = vunpack.c.h.b16 %v4096
      %v4209 = vunpack.c.l.b16 %v4097
      %v4210 = vunpack.c.l.b16 %v4098
      %v4211 = vunpack.c.l.b16 %v4099
      %v4212 = vunpack.c.l.b16 %v4100
      %v4213 = vunpack.c.l.b16 %v4101
      %v4214 = vunpack.c.l.b16 %v4102
      %v4215 = vunpack.c.l.b16 %v4103
      %v4216 = vunpack.c.h.b16 %v4097
      %v4217 = vunpack.c.h.b16 %v4098
      %v4218 = vunpack.c.h.b16 %v4099
      %v4219 = vunpack.c.h.b16 %v4100
      %v4220 = vunpack.c.h.b16 %v4101
      %v4221 = vunpack.c.h.b16 %v4102
      %v4222 = vunpack.c.h.b16 %v4103
      %v4223 = vunpack.c.l.b16 %v4104
      %v4224 = vunpack.c.l.b16 %v4105
      %v4225 = vunpack.c.l.b16 %v4106
      %v4226 = vunpack.c.l.b16 %v4107
      %v4227 = vunpack.c.l.b16 %v4108
      %v4228 = vunpack.c.l.b16 %v4109
      %v4229 = vunpack.c.l.b16 %v4110
      %v4230 = vunpack.c.h.b16 %v4104
      %v4231 = vunpack.c.h.b16 %v4105
      %v4232 = vunpack.c.h.b16 %v4106
      %v4233 = vunpack.c.h.b16 %v4107
      %v4234 = vunpack.c.h.b16 %v4108
      %v4235 = vunpack.c.h.b16 %v4109
      %v4236 = vunpack.c.h.b16 %v4110
      %v4237 = vunpack.c.l.b16 %v4111
      %v4238 = vunpack.c.l.b16 %v4112
      %v4239 = vunpack.c.l.b16 %v4113
      %v4240 = vunpack.c.l.b16 %v4114
      %v4241 = vunpack.c.l.b16 %v4115
      %v4242 = vunpack.c.l.b16 %v4116
      %v4243 = vunpack.c.l.b16 %v4117
      %v4244 = vunpack.c.h.b16 %v4111
      %v4245 = vunpack.c.h.b16 %v4112
      %v4246 = vunpack.c.h.b16 %v4113
      %v4247 = vunpack.c.h.b16 %v4114
      %v4248 = vunpack.c.h.b16 %v4115
      %v4249 = vunpack.c.h.b16 %v4116
      %v4250 = vunpack.c.h.b16 %v4117
      %v4251 = vunpack.c.l.b16 %v4118
      %v4252 = vunpack.c.l.b16 %v4119
      %v4253 = vunpack.c.l.b16 %v4120
      %v4254 = vunpack.c.l.b16 %v4121
      %v4255 = vunpack.c.l.b16 %v4122
      %v4256 = vunpack.c.l.b16 %v4123
      %v4257 = vunpack.c.l.b16 %v4124
      %v4258 = vunpack.c.h.b16 %v4118
      %v4259 = vunpack.c.h.b16 %v4119
      %v4260 = vunpack.c.h.b16 %v4120
      %v4261 = vunpack.c.h.b16 %v4121
      %v4262 = vunpack.c.h.b16 %v4122
      %v4263 = vunpack.c.h.b16 %v4123
      %v4264 = vunpack.c.h.b16 %v4124
      %v4265 = vunpack.c.l.b16 %v4125
      %v4266 = vunpack.c.l.b16 %v4126
      %v4267 = vunpack.c.l.b16 %v4127
      %v4268 = vunpack.c.l.b16 %v4128
      %v4269 = vunpack.c.l.b16 %v4129
      %v4270 = vunpack.c.l.b16 %v4130
      %v4271 = vunpack.c.l.b16 %v4131
      %v4272 = vunpack.c.h.b16 %v4125
      %v4273 = vunpack.c.h.b16 %v4126
      %v4274 = vunpack.c.h.b16 %v4127
      %v4275 = vunpack.c.h.b16 %v4128
      %v4276 = vunpack.c.h.b16 %v4129
      %v4277 = vunpack.c.h.b16 %v4130
      %v4278 = vunpack.c.h.b16 %v4131
      %v4279 = vpack.c.b16 %v4182, %v4181
      %v4280 = vpack.c.b16 %v4184, %v4183
      %v4281 = vpack.c.b16 %v4186, %v4185
      %v4282 = vpack.c.b16 %v4187, %v4187
      %v4283 = vpack.c.b16 %v4189, %v4188
      %v4284 = vpack.c.b16 %v4191, %v4190
      %v4285 = vpack.c.b16 %v4193, %v4192
      %v4286 = vpack.c.b16 %v4194, %v4194
      %v4287 = vpack.c.b16 %v4196, %v4195
      %v4288 = vpack.c.b16 %v4198, %v4197
      %v4289 = vpack.c.b16 %v4200, %v4199
      %v4290 = vpack.c.b16 %v4201, %v4201
      %v4291 = vpack.c.b16 %v4203, %v4202
      %v4292 = vpack.c.b16 %v4205, %v4204
      %v4293 = vpack.c.b16 %v4207, %v4206
      %v4294 = vpack.c.b16 %v4208, %v4208
      %v4295 = vpack.c.b16 %v4210, %v4209
      %v4296 = vpack.c.b16 %v4212, %v4211
      %v4297 = vpack.c.b16 %v4214, %v4213
      %v4298 = vpack.c.b16 %v4215, %v4215
      %v4299 = vpack.c.b16 %v4217, %v4216
      %v4300 = vpack.c.b16 %v4219, %v4218
      %v4301 = vpack.c.b16 %v4221, %v4220
      %v4302 = vpack.c.b16 %v4222, %v4222
      %v4303 = vpack.c.b16 %v4224, %v4223
      %v4304 = vpack.c.b16 %v4226, %v4225
      %v4305 = vpack.c.b16 %v4228, %v4227
      %v4306 = vpack.c.b16 %v4229, %v4229
      %v4307 = vpack.c.b16 %v4231, %v4230
      %v4308 = vpack.c.b16 %v4233, %v4232
      %v4309 = vpack.c.b16 %v4235, %v4234
      %v4310 = vpack.c.b16 %v4236, %v4236
      %v4311 = vpack.c.b16 %v4238, %v4237
      %v4312 = vpack.c.b16 %v4240, %v4239
      %v4313 = vpack.c.b16 %v4242, %v4241
      %v4314 = vpack.c.b16 %v4243, %v4243
      %v4315 = vpack.c.b16 %v4245, %v4244
      %v4316 = vpack.c.b16 %v4247, %v4246
      %v4317 = vpack.c.b16 %v4249, %v4248
      %v4318 = vpack.c.b16 %v4250, %v4250
      %v4319 = vpack.c.b16 %v4252, %v4251
      %v4320 = vpack.c.b16 %v4254, %v4253
      %v4321 = vpack.c.b16 %v4256, %v4255
      %v4322 = vpack.c.b16 %v4257, %v4257
      %v4323 = vpack.c.b16 %v4259, %v4258
      %v4324 = vpack.c.b16 %v4261, %v4260
      %v4325 = vpack.c.b16 %v4263, %v4262
      %v4326 = vpack.c.b16 %v4264, %v4264
      %v4327 = vpack.c.b16 %v4266, %v4265
      %v4328 = vpack.c.b16 %v4268, %v4267
      %v4329 = vpack.c.b16 %v4270, %v4269
      %v4330 = vpack.c.b16 %v4271, %v4271
      %v4331 = vpack.c.b16 %v4273, %v4272
      %v4332 = vpack.c.b16 %v4275, %v4274
      %v4333 = vpack.c.b16 %v4277, %v4276
      %v4334 = vpack.c.b16 %v4278, %v4278
      %4391 = vst [vmem:[%s663] sm:$0xff] %v4279
      %4392 = vst [vmem:[%s663 + $0x8] sm:$0xff] %v4280
      %4393 = vst [vmem:[%s663 + $0x10] sm:$0xff] %v4281
      %vm4394 = vcmask 125952
      %4395 = vst.msk [vmem:[%s663 + $0x18] sm:$0xf] %vm4394, %v4282
      %4396 = vst [vmem:[%s663 + $0x1c] sm:$0xff] %v4283
      %4397 = vst [vmem:[%s663 + $0x24] sm:$0xff] %v4284
      %4398 = vst [vmem:[%s663 + $0x2c] sm:$0xff] %v4285
      %4399 = vst.msk [vmem:[%s663 + $0x34] sm:$0xf] %vm4394, %v4286
      %4400 = vst [vmem:[%s663 + $0x38] sm:$0xff] %v4287
      %4401 = vst [vmem:[%s663 + $0x40] sm:$0xff] %v4288
      %4402 = vst [vmem:[%s663 + $0x48] sm:$0xff] %v4289
      %4403 = vst.msk [vmem:[%s663 + $0x50] sm:$0xf] %vm4394, %v4290
      %4404 = vst [vmem:[%s663 + $0x54] sm:$0xff] %v4291
      %4405 = vst [vmem:[%s663 + $0x5c] sm:$0xff] %v4292
      %4406 = vst [vmem:[%s663 + $0x64] sm:$0xff] %v4293
      %4407 = vst.msk [vmem:[%s663 + $0x6c] sm:$0xf] %vm4394, %v4294
      %4408 = vst [vmem:[%s663 + $0x70] sm:$0xff] %v4295
      %4409 = vst [vmem:[%s663 + $0x78] sm:$0xff] %v4296
      %4410 = vst [vmem:[%s663 + $0x80] sm:$0xff] %v4297
      %4411 = vst.msk [vmem:[%s663 + $0x88] sm:$0xf] %vm4394, %v4298
      %4412 = vst [vmem:[%s663 + $0x8c] sm:$0xff] %v4299
      %4413 = vst [vmem:[%s663 + $0x94] sm:$0xff] %v4300
      %4414 = vst [vmem:[%s663 + $0x9c] sm:$0xff] %v4301
      %4415 = vst.msk [vmem:[%s663 + $0xa4] sm:$0xf] %vm4394, %v4302
      %4416 = vst [vmem:[%s663 + $0xa8] sm:$0xff] %v4303
      %4417 = vst [vmem:[%s663 + $0xb0] sm:$0xff] %v4304
      %4418 = vst [vmem:[%s663 + $0xb8] sm:$0xff] %v4305
      %4419 = vst.msk [vmem:[%s663 + $0xc0] sm:$0xf] %vm4394, %v4306
      %4420 = vst [vmem:[%s663 + $0xc4] sm:$0xff] %v4307
      %4421 = vst [vmem:[%s663 + $0xcc] sm:$0xff] %v4308
      %4422 = vst [vmem:[%s663 + $0xd4] sm:$0xff] %v4309
      %4423 = vst.msk [vmem:[%s663 + $0xdc] sm:$0xf] %vm4394, %v4310
      %4424 = vst [vmem:[%s663 + $0xe0] sm:$0xff] %v4311
      %4425 = vst [vmem:[%s663 + $0xe8] sm:$0xff] %v4312
      %4426 = vst [vmem:[%s663 + $0xf0] sm:$0xff] %v4313
      %4427 = vst.msk [vmem:[%s663 + $0xf8] sm:$0xf] %vm4394, %v4314
      %4428 = vst [vmem:[%s663 + $0xfc] sm:$0xff] %v4315
      %4429 = vst [vmem:[%s663 + $0x104] sm:$0xff] %v4316
      %4430 = vst [vmem:[%s663 + $0x10c] sm:$0xff] %v4317
      %4431 = vst.msk [vmem:[%s663 + $0x114] sm:$0xf] %vm4394, %v4318
      %4432 = vst [vmem:[%s663 + $0x118] sm:$0xff] %v4319
      %4433 = vst [vmem:[%s663 + $0x120] sm:$0xff] %v4320
      %4434 = vst [vmem:[%s663 + $0x128] sm:$0xff] %v4321
      %4435 = vst.msk [vmem:[%s663 + $0x130] sm:$0xf] %vm4394, %v4322
      %4436 = vst [vmem:[%s663 + $0x134] sm:$0xff] %v4323
      %4437 = vst [vmem:[%s663 + $0x13c] sm:$0xff] %v4324
      %4438 = vst [vmem:[%s663 + $0x144] sm:$0xff] %v4325
      %4439 = vst.msk [vmem:[%s663 + $0x14c] sm:$0xf] %vm4394, %v4326
      %4440 = vst [vmem:[%s663 + $0x150] sm:$0xff] %v4327
      %4441 = vst [vmem:[%s663 + $0x158] sm:$0xff] %v4328
      %4442 = vst [vmem:[%s663 + $0x160] sm:$0xff] %v4329
      %4443 = vst.msk [vmem:[%s663 + $0x168] sm:$0xf] %vm4394, %v4330
      %4444 = vst [vmem:[%s663 + $0x16c] sm:$0xff] %v4331
      %4445 = vst [vmem:[%s663 + $0x174] sm:$0xff] %v4332
      %4446 = vst [vmem:[%s663 + $0x17c] sm:$0xff] %v4333
      %4447 = vst.msk [vmem:[%s663 + $0x184] sm:$0xf] %vm4394, %v4334
      %s4448 = smul.u32 14, %s32
      %p4449 = scmp.lt.s32.totalorder %s4448, 41
      %s4450 = scalar_select %p4449, %s4448, 41
      %s4451 = smul.addr %s4450, 7
      %s4452 = smul.addr %s4451, 4
      %s4453 = scalar_lea.vmem %s21, %s4452
      // Predicated region
      $region105: #{ae_forward.1} parent=103 // pred_check
        %p4454 = pneg %p496
      $region106: #{ae_forward.1} parent=103 // pred_check_branch
        %4456 = sbr.rel (%p4454) target = $region108
      $region107: #{ae_forward.1} parent=103 // pred_region
        %s4457 = smul.u32 14, %s32
      $region108: #{ae_forward.1} parent=103 // pred_fallthru
        _
    $region104: #{ae_forward.1} parent=5 // pred_fallthru
      _
    %p4458 = scmp.le.s32.totalorder 2, %s27
    // Predicated region
    $region109: #{ae_forward.1} parent=5 // pred_check
      %p4459 = pneg %p4458
    $region110: #{ae_forward.1} parent=5 // pred_check_branch
      %4461 = sbr.rel (%p4459) target = $region112
    $region111: #{ae_forward.1} parent=5 // pred_region
      %s4462 = ssub.s32 %s27, 2
      // Predicated region
      $region113: #{ae_forward.1} parent=111 // pred_check
        %p4463 = pneg %p502
      $region114: #{ae_forward.1} parent=111 // pred_check_branch
        %4465 = sbr.rel (%p4463) target = $region116
      $region115: #{ae_forward.1} parent=111 // pred_region
        %s4466 = smul.u32 14, %s33
        %p4467 = scmp.lt.s32.totalorder %s4466, 41
        %s4468 = scalar_select %p4467, %s4466, 41
        %s4469 = smul.addr %s4468, 7
        %s4470 = smul.addr %s4469, 4
        %s4471 = scalar_lea.vmem %s21, %s4470
      $region116: #{ae_forward.1} parent=111 // pred_fallthru
        _
    $region112: #{ae_forward.1} parent=5 // pred_fallthru
      _
  $region6: #{ae_forward.1} parent=0 // loop_footer
    %s31 = sadd.s32 1, %s27
  $region7: #{ae_forward.1} parent=0 // loop_footer_branch
    %26 = sbr.rel target = $region3
  $region8: #{ae_forward.1} parent=0 // loop_exit
    _

</llo_original>
